<compile_context>
chip_gen: v7x
topology: tpu7x:2x2x1
jax: 0.10.0
libtpu: 0.0.40
codegen_flags: <defaults>
</compile_context>

<pallas_src>
import jax
import jax.numpy as jnp
import numpy as np
from jax.experimental import pallas as pl
from jax.experimental.pallas import tpu as pltpu

KS = 5       # kernel size of the learned upsample
STRIDE = 2   # upsampling factor


def _transposed_upsample_kernel(x_ref, w_ref, b_ref, o_ref):
    """One batch element.

    x_ref : (1, H*W, Cin)          dense input, spatially flattened (no dilation)
    w_ref : (Cin, KS*KS*Cout)      all 25 taps folded into the matmul N dim,
                                   column = (kh*KS + kw)*Cout + oc
    b_ref : (1, 2*Cout)            bias duplicated for both W-parity phases
    o_ref : (1, H2, 2, W2, 2*Cout) phase-interleaved output:
                                   o_ref[0, a, P, b, Q*Cout+oc] == y[2a+P, 2b+Q, oc]
                                   (before the final crop to (H_out, W_out))
    """
    _, h2, _, w2, c2 = o_ref.shape
    c_out = c2 // 2
    h, w = h2 - (KS // 2), w2 - (KS // 2)

    # --- one MXU matmul for all 25 taps (bf16/f32 operands, f32 accumulation) ---
    taps = jnp.dot(x_ref[0], w_ref[...], preferred_element_type=jnp.float32)
    # (H*W, 25*Cout) -> (H, W, 25*Cout): splits only the sublane dim (W % 8 == 0),
    # lane dim untouched -> free view, not a relayout.
    taps = taps.reshape(h, w, KS * KS * c_out)

    # --- bias folded into accumulator init; the VMEM output ref IS the
    #     accumulator (no large live traced value, no separate bias pass). ---
    o_ref[...] = jnp.broadcast_to(b_ref[...].reshape(1, 1, 1, 1, c2), o_ref.shape)

    # --- polyphase scatter: tap (kh, kw) lands in parity phase (kh%2, kw%2) at
    #     static offset (kh//2, kw//2).  Since kw = 2s+Q and matmul columns are
    #     ordered [kh][kw][oc], the Q=0/Q=1 taps of a given (kh, s) are already
    #     lane-adjacent and match the output's [Q][oc] lane order, so one
    #     2*Cout-wide add covers both W parities. ---
    for kh in range(KS):
        p, t = kh % 2, kh // 2
        for s in range(KS // 2):                                  # kw = 2s, 2s+1
            c0 = (kh * KS + 2 * s) * c_out
            o_ref[0, t:t + h, p, s:s + w, :] += taps[:, :, c0:c0 + 2 * c_out]
        c0 = (kh * KS + (KS - 1)) * c_out                          # kw = 4 (Q = 0 only)
        o_ref[0, t:t + h, p, KS // 2:KS // 2 + w, 0:c_out] += taps[:, :, c0:c0 + c_out]


def transposed_upsample(x_nchw, w_pt, b, *, compute_dtype=jnp.bfloat16):
    """Equivalent of TransposedUpsample.forward (dims=2, ks=5, stride=2).

    x_nchw : (N, Cin, H, W)
    w_pt   : (Cin, Cout, KS, KS)   PyTorch ConvTranspose2d weight layout
    b      : (Cout,)
    compute_dtype : dtype of the MXU operands (accumulation is always f32)
    returns: (N, Cout, (H-1)*2+KS, (W-1)*2+KS), float32
    """
    n, c_in, h, w = x_nchw.shape
    c_out = w_pt.shape[1]
    h_out = (h - 1) * STRIDE + KS
    w_out = (w - 1) * STRIDE + KS
    pad = KS // 2
    h2, w2 = h + pad, w + pad

    # --- cheap XLA glue (fused transpose+cast): NCHW -> (N, H*W, Cin) ---
    x_flat = jnp.transpose(x_nchw, (0, 2, 3, 1)).reshape(n, h * w, c_in)
    x_flat = x_flat.astype(compute_dtype)
    # Wb[ic, (kh*KS+kw)*Cout + oc] = w_pt[ic, oc, kh, kw]
    # (direct scatter form of ConvTranspose2d -> no spatial flip needed)
    w_big = jnp.transpose(w_pt, (0, 2, 3, 1)).reshape(c_in, KS * KS * c_out)
    w_big = w_big.astype(compute_dtype)
    # bias duplicated for both W-parity phases: index Q*Cout + oc -> b[oc]
    b2 = jnp.tile(b.astype(jnp.float32), 2).reshape(1, 2 * c_out)

    out = pl.pallas_call(
        _transposed_upsample_kernel,
        out_shape=jax.ShapeDtypeStruct((n, h2, 2, w2, 2 * c_out), jnp.float32),
        grid_spec=pltpu.PrefetchScalarGridSpec(
            num_scalar_prefetch=0,
            grid=(n,),
            in_specs=[
                pl.BlockSpec((1, h * w, c_in), lambda i: (i, 0, 0)),
                pl.BlockSpec((c_in, KS * KS * c_out), lambda i: (0, 0)),
                pl.BlockSpec((1, 2 * c_out), lambda i: (0, 0)),
            ],
            out_specs=pl.BlockSpec((1, h2, 2, w2, 2 * c_out),
                                   lambda i: (i, 0, 0, 0, 0)),
        ),
        compiler_params=pltpu.CompilerParams(
            dimension_semantics=("parallel",),
            vmem_limit_bytes=32 * 1024 * 1024,
        ),
    )(x_flat, w_big, b2)

    # (N, H2, 2, W2, 2*Cout) row-major == (N, 2*H2, 2*W2, Cout) row-major, so the
    # phase interleave is a FREE reshape; then crop the padded last row/col and
    # return NCHW (XLA fuses the crop into the final transpose).
    y = out.reshape(n, 2 * h2, 2 * w2, c_out)[:, :h_out, :w_out, :]
    return jnp.transpose(y, (0, 3, 1, 2))


def _reference_conv_transpose(x_nchw, w_pt, b):
    """Independent reference via lax.conv_general_dilated (== ConvTranspose2d, s=2, p=0)."""
    rhs = jnp.transpose(w_pt[:, :, ::-1, ::-1], (1, 0, 2, 3))   # OIHW, spatially flipped
    y = jax.lax.conv_general_dilated(
        x_nchw, rhs,
        window_strides=(1, 1),
        padding=[(KS - 1, KS - 1), (KS - 1, KS - 1)],
        lhs_dilation=(STRIDE, STRIDE),
        rhs_dilation=(1, 1),
        dimension_numbers=('NCHW', 'OIHW', 'NCHW'))
    return y + b.reshape(1, -1, 1, 1)


if __name__ == "__main__":
    key = jax.random.PRNGKey(0)
    k1, k2, k3 = jax.random.split(key, 3)

    n, c_in, h, w = 2, 4, 16, 16
    c_out = 4                                   # out_channels defaults to channels

    x = jax.random.normal(k1, (n, c_in, h, w), jnp.float32)
    bound = 1.0 / np.sqrt(c_in * KS * KS)
    w_pt = jax.random.uniform(k2, (c_in, c_out, KS, KS), jnp.float32, -bound, bound)
    b = jax.random.uniform(k3, (c_out,), jnp.float32, -bound, bound)

    h_out = (h - 1) * STRIDE + KS
    w_out = (w - 1) * STRIDE + KS

    # 1) f32 operands: exact module semantics, tight tolerance.
    out_f32 = jax.block_until_ready(
        transposed_upsample(x, w_pt, b, compute_dtype=jnp.float32))
    assert out_f32.shape == (n, c_out, h_out, w_out)
    ref = _reference_conv_transpose(x, w_pt, b)
    np.testing.assert_allclose(np.asarray(out_f32), np.asarray(ref), rtol=1e-4, atol=1e-4)

    # 2) bf16 MXU operands with f32 accumulation (the fast path): compare against
    #    the same reference evaluated on identically bf16-rounded inputs, so the
    #    only difference is summation order.
    out_bf16 = jax.block_until_ready(
        transposed_upsample(x, w_pt, b, compute_dtype=jnp.bfloat16))
    x_r = x.astype(jnp.bfloat16).astype(jnp.float32)
    w_r = w_pt.astype(jnp.bfloat16).astype(jnp.float32)
    ref_bf16 = _reference_conv_transpose(x_r, w_r, b)
    np.testing.assert_allclose(np.asarray(out_bf16), np.asarray(ref_bf16), rtol=2e-3, atol=2e-3)

    print("KERNEL_OK")
</pallas_src>

<mosaic_0001>
module attributes {stable_mosaic.version = 11 : i64} {
  func.func @_transposed_upsample_kernel(%arg0: i32, %arg1: memref<1x256x4xf32, #tpu.memory_space<vmem>>, %arg2: memref<4x100xf32, #tpu.memory_space<vmem>>, %arg3: memref<1x8xf32, #tpu.memory_space<vmem>>, %arg4: memref<1x18x2x18x8xf32, #tpu.memory_space<vmem>>) attributes {dimension_semantics = [#tpu.dimension_semantics<parallel>], iteration_bounds = array<i64: 2>, scalar_prefetch = 0 : i64, scratch_operands = 0 : i64, tpu.core_type = #tpu.core_type<tc>, window_params = [{transform_indices = @transform_0, window_bounds = array<i64: 1, 256, 4>}, {pipeline_mode = #tpu.pipeline_mode<synchronous>, transform_indices = @transform_1, window_bounds = array<i64: 4, 100>}, {pipeline_mode = #tpu.pipeline_mode<synchronous>, transform_indices = @transform_2, window_bounds = array<i64: 1, 8>}, {transform_indices = @transform_3, window_bounds = array<i64: 1, 18, 2, 18, 8>}]} {
    %c0 = arith.constant 0 : index
    %c0_0 = arith.constant 0 : index
    %c0_1 = arith.constant 0 : index
    %0 = vector.load %arg1[%c0, %c0_0, %c0_1] : memref<1x256x4xf32, #tpu.memory_space<vmem>>, vector<1x256x4xf32>
    %1 = vector.shape_cast %0 : vector<1x256x4xf32> to vector<256x4xf32>
    %c0_2 = arith.constant 0 : index
    %c0_3 = arith.constant 0 : index
    %2 = vector.load %arg2[%c0_2, %c0_3] : memref<4x100xf32, #tpu.memory_space<vmem>>, vector<4x100xf32>
    %cst = arith.constant dense<0.000000e+00> : vector<256x100xf32>
    %3 = tpu.matmul %1, %2, %cst {dimension_numbers = #tpu.dot_dimension_numbers<[1], [0], [0], [1], [0, 0, 1, 1], [], []>} : vector<256x4xf32>, vector<4x100xf32>, vector<256x100xf32> -> vector<256x100xf32>
    %4 = vector.shape_cast %3 : vector<256x100xf32> to vector<16x16x100xf32>
    %c0_4 = arith.constant 0 : index
    %c0_5 = arith.constant 0 : index
    %5 = vector.load %arg3[%c0_4, %c0_5] : memref<1x8xf32, #tpu.memory_space<vmem>>, vector<1x8xf32>
    %6 = vector.shape_cast %5 : vector<1x8xf32> to vector<1x1x1x1x8xf32>
    %7 = vector.shape_cast %6 : vector<1x1x1x1x8xf32> to vector<1x1x1x1x8xf32>
    %8 = vector.broadcast %7 : vector<1x1x1x1x8xf32> to vector<1x18x2x18x8xf32>
    %c0_6 = arith.constant 0 : index
    %c0_7 = arith.constant 0 : index
    %c0_8 = arith.constant 0 : index
    %c0_9 = arith.constant 0 : index
    %c0_10 = arith.constant 0 : index
    %9 = vector.load %arg4[%c0_6, %c0_7, %c0_8, %c0_9, %c0_10] : memref<1x18x2x18x8xf32, #tpu.memory_space<vmem>>, vector<1x18x2x18x8xf32>
    tpu.vector_store %arg4[%c0_6, %c0_7, %c0_8, %c0_9, %c0_10], %8 {strides = array<i32>} : memref<1x18x2x18x8xf32, #tpu.memory_space<vmem>>, vector<1x18x2x18x8xf32>,
    %c0_11 = arith.constant 0 : index
    %c0_12 = arith.constant 0 : index
    %c0_13 = arith.constant 0 : index
    %c0_14 = arith.constant 0 : index
    %c0_15 = arith.constant 0 : index
    %10 = vector.load %arg4[%c0_11, %c0_12, %c0_13, %c0_14, %c0_15] : memref<1x18x2x18x8xf32, #tpu.memory_space<vmem>>, vector<1x16x1x16x8xf32>
    %11 = vector.shape_cast %10 : vector<1x16x1x16x8xf32> to vector<16x16x8xf32>
    %12 = vector.extract_strided_slice %4 {offsets = [0, 0, 0], sizes = [16, 16, 8], strides = [1, 1, 1]} : vector<16x16x100xf32> to vector<16x16x8xf32>
    %13 = arith.addf %11, %12 : vector<16x16x8xf32>
    %c0_16 = arith.constant 0 : index
    %c0_17 = arith.constant 0 : index
    %c0_18 = arith.constant 0 : index
    %c0_19 = arith.constant 0 : index
    %c0_20 = arith.constant 0 : index
    %14 = vector.load %arg4[%c0_16, %c0_17, %c0_18, %c0_19, %c0_20] : memref<1x18x2x18x8xf32, #tpu.memory_space<vmem>>, vector<1x16x1x16x8xf32>
    %15 = vector.shape_cast %14 : vector<1x16x1x16x8xf32> to vector<16x16x8xf32>
    %16 = vector.shape_cast %13 : vector<16x16x8xf32> to vector<1x16x1x16x8xf32>
    tpu.vector_store %arg4[%c0_16, %c0_17, %c0_18, %c0_19, %c0_20], %16 {strides = array<i32>} : memref<1x18x2x18x8xf32, #tpu.memory_space<vmem>>, vector<1x16x1x16x8xf32>,
    %c0_21 = arith.constant 0 : index
    %c0_22 = arith.constant 0 : index
    %c0_23 = arith.constant 0 : index
    %c1 = arith.constant 1 : index
    %c0_24 = arith.constant 0 : index
    %17 = vector.load %arg4[%c0_21, %c0_22, %c0_23, %c1, %c0_24] : memref<1x18x2x18x8xf32, #tpu.memory_space<vmem>>, vector<1x16x1x16x8xf32>
    %18 = vector.shape_cast %17 : vector<1x16x1x16x8xf32> to vector<16x16x8xf32>
    %19 = vector.extract_strided_slice %4 {offsets = [0, 0, 8], sizes = [16, 16, 8], strides = [1, 1, 1]} : vector<16x16x100xf32> to vector<16x16x8xf32>
    %20 = arith.addf %18, %19 : vector<16x16x8xf32>
    %c0_25 = arith.constant 0 : index
    %c0_26 = arith.constant 0 : index
    %c0_27 = arith.constant 0 : index
    %c1_28 = arith.constant 1 : index
    %c0_29 = arith.constant 0 : index
    %21 = vector.load %arg4[%c0_25, %c0_26, %c0_27, %c1_28, %c0_29] : memref<1x18x2x18x8xf32, #tpu.memory_space<vmem>>, vector<1x16x1x16x8xf32>
    %22 = vector.shape_cast %21 : vector<1x16x1x16x8xf32> to vector<16x16x8xf32>
    %23 = vector.shape_cast %20 : vector<16x16x8xf32> to vector<1x16x1x16x8xf32>
    tpu.vector_store %arg4[%c0_25, %c0_26, %c0_27, %c1_28, %c0_29], %23 {strides = array<i32>} : memref<1x18x2x18x8xf32, #tpu.memory_space<vmem>>, vector<1x16x1x16x8xf32>,
    %c0_30 = arith.constant 0 : index
    %c0_31 = arith.constant 0 : index
    %c0_32 = arith.constant 0 : index
    %c2 = arith.constant 2 : index
    %c0_33 = arith.constant 0 : index
    %24 = vector.load %arg4[%c0_30, %c0_31, %c0_32, %c2, %c0_33] : memref<1x18x2x18x8xf32, #tpu.memory_space<vmem>>, vector<1x16x1x16x4xf32>
    %25 = vector.shape_cast %24 : vector<1x16x1x16x4xf32> to vector<16x16x4xf32>
    %26 = vector.extract_strided_slice %4 {offsets = [0, 0, 16], sizes = [16, 16, 4], strides = [1, 1, 1]} : vector<16x16x100xf32> to vector<16x16x4xf32>
    %27 = arith.addf %25, %26 : vector<16x16x4xf32>
    %c0_34 = arith.constant 0 : index
    %c0_35 = arith.constant 0 : index
    %c0_36 = arith.constant 0 : index
    %c2_37 = arith.constant 2 : index
    %c0_38 = arith.constant 0 : index
    %28 = vector.load %arg4[%c0_34, %c0_35, %c0_36, %c2_37, %c0_38] : memref<1x18x2x18x8xf32, #tpu.memory_space<vmem>>, vector<1x16x1x16x4xf32>
    %29 = vector.shape_cast %28 : vector<1x16x1x16x4xf32> to vector<16x16x4xf32>
    %30 = vector.shape_cast %27 : vector<16x16x4xf32> to vector<1x16x1x16x4xf32>
    tpu.vector_store %arg4[%c0_34, %c0_35, %c0_36, %c2_37, %c0_38], %30 {strides = array<i32>} : memref<1x18x2x18x8xf32, #tpu.memory_space<vmem>>, vector<1x16x1x16x4xf32>,
    %c0_39 = arith.constant 0 : index
    %c0_40 = arith.constant 0 : index
    %c1_41 = arith.constant 1 : index
    %c0_42 = arith.constant 0 : index
    %c0_43 = arith.constant 0 : index
    %31 = vector.load %arg4[%c0_39, %c0_40, %c1_41, %c0_42, %c0_43] : memref<1x18x2x18x8xf32, #tpu.memory_space<vmem>>, vector<1x16x1x16x8xf32>
    %32 = vector.shape_cast %31 : vector<1x16x1x16x8xf32> to vector<16x16x8xf32>
    %33 = vector.extract_strided_slice %4 {offsets = [0, 0, 20], sizes = [16, 16, 8], strides = [1, 1, 1]} : vector<16x16x100xf32> to vector<16x16x8xf32>
    %34 = arith.addf %32, %33 : vector<16x16x8xf32>
    %c0_44 = arith.constant 0 : index
    %c0_45 = arith.constant 0 : index
    %c1_46 = arith.constant 1 : index
    %c0_47 = arith.constant 0 : index
    %c0_48 = arith.constant 0 : index
    %35 = vector.load %arg4[%c0_44, %c0_45, %c1_46, %c0_47, %c0_48] : memref<1x18x2x18x8xf32, #tpu.memory_space<vmem>>, vector<1x16x1x16x8xf32>
    %36 = vector.shape_cast %35 : vector<1x16x1x16x8xf32> to vector<16x16x8xf32>
    %37 = vector.shape_cast %34 : vector<16x16x8xf32> to vector<1x16x1x16x8xf32>
    tpu.vector_store %arg4[%c0_44, %c0_45, %c1_46, %c0_47, %c0_48], %37 {strides = array<i32>} : memref<1x18x2x18x8xf32, #tpu.memory_space<vmem>>, vector<1x16x1x16x8xf32>,
    %c0_49 = arith.constant 0 : index
    %c0_50 = arith.constant 0 : index
    %c1_51 = arith.constant 1 : index
    %c1_52 = arith.constant 1 : index
    %c0_53 = arith.constant 0 : index
    %38 = vector.load %arg4[%c0_49, %c0_50, %c1_51, %c1_52, %c0_53] : memref<1x18x2x18x8xf32, #tpu.memory_space<vmem>>, vector<1x16x1x16x8xf32>
    %39 = vector.shape_cast %38 : vector<1x16x1x16x8xf32> to vector<16x16x8xf32>
    %40 = vector.extract_strided_slice %4 {offsets = [0, 0, 28], sizes = [16, 16, 8], strides = [1, 1, 1]} : vector<16x16x100xf32> to vector<16x16x8xf32>
    %41 = arith.addf %39, %40 : vector<16x16x8xf32>
    %c0_54 = arith.constant 0 : index
    %c0_55 = arith.constant 0 : index
    %c1_56 = arith.constant 1 : index
    %c1_57 = arith.constant 1 : index
    %c0_58 = arith.constant 0 : index
    %42 = vector.load %arg4[%c0_54, %c0_55, %c1_56, %c1_57, %c0_58] : memref<1x18x2x18x8xf32, #tpu.memory_space<vmem>>, vector<1x16x1x16x8xf32>
    %43 = vector.shape_cast %42 : vector<1x16x1x16x8xf32> to vector<16x16x8xf32>
    %44 = vector.shape_cast %41 : vector<16x16x8xf32> to vector<1x16x1x16x8xf32>
    tpu.vector_store %arg4[%c0_54, %c0_55, %c1_56, %c1_57, %c0_58], %44 {strides = array<i32>} : memref<1x18x2x18x8xf32, #tpu.memory_space<vmem>>, vector<1x16x1x16x8xf32>,
    %c0_59 = arith.constant 0 : index
    %c0_60 = arith.constant 0 : index
    %c1_61 = arith.constant 1 : index
    %c2_62 = arith.constant 2 : index
    %c0_63 = arith.constant 0 : index
    %45 = vector.load %arg4[%c0_59, %c0_60, %c1_61, %c2_62, %c0_63] : memref<1x18x2x18x8xf32, #tpu.memory_space<vmem>>, vector<1x16x1x16x4xf32>
    %46 = vector.shape_cast %45 : vector<1x16x1x16x4xf32> to vector<16x16x4xf32>
    %47 = vector.extract_strided_slice %4 {offsets = [0, 0, 36], sizes = [16, 16, 4], strides = [1, 1, 1]} : vector<16x16x100xf32> to vector<16x16x4xf32>
    %48 = arith.addf %46, %47 : vector<16x16x4xf32>
    %c0_64 = arith.constant 0 : index
    %c0_65 = arith.constant 0 : index
    %c1_66 = arith.constant 1 : index
    %c2_67 = arith.constant 2 : index
    %c0_68 = arith.constant 0 : index
    %49 = vector.load %arg4[%c0_64, %c0_65, %c1_66, %c2_67, %c0_68] : memref<1x18x2x18x8xf32, #tpu.memory_space<vmem>>, vector<1x16x1x16x4xf32>
    %50 = vector.shape_cast %49 : vector<1x16x1x16x4xf32> to vector<16x16x4xf32>
    %51 = vector.shape_cast %48 : vector<16x16x4xf32> to vector<1x16x1x16x4xf32>
    tpu.vector_store %arg4[%c0_64, %c0_65, %c1_66, %c2_67, %c0_68], %51 {strides = array<i32>} : memref<1x18x2x18x8xf32, #tpu.memory_space<vmem>>, vector<1x16x1x16x4xf32>,
    %c0_69 = arith.constant 0 : index
    %c1_70 = arith.constant 1 : index
    %c0_71 = arith.constant 0 : index
    %c0_72 = arith.constant 0 : index
    %c0_73 = arith.constant 0 : index
    %52 = vector.load %arg4[%c0_69, %c1_70, %c0_71, %c0_72, %c0_73] : memref<1x18x2x18x8xf32, #tpu.memory_space<vmem>>, vector<1x16x1x16x8xf32>
    %53 = vector.shape_cast %52 : vector<1x16x1x16x8xf32> to vector<16x16x8xf32>
    %54 = vector.extract_strided_slice %4 {offsets = [0, 0, 40], sizes = [16, 16, 8], strides = [1, 1, 1]} : vector<16x16x100xf32> to vector<16x16x8xf32>
    %55 = arith.addf %53, %54 : vector<16x16x8xf32>
    %c0_74 = arith.constant 0 : index
    %c1_75 = arith.constant 1 : index
    %c0_76 = arith.constant 0 : index
    %c0_77 = arith.constant 0 : index
    %c0_78 = arith.constant 0 : index
    %56 = vector.load %arg4[%c0_74, %c1_75, %c0_76, %c0_77, %c0_78] : memref<1x18x2x18x8xf32, #tpu.memory_space<vmem>>, vector<1x16x1x16x8xf32>
    %57 = vector.shape_cast %56 : vector<1x16x1x16x8xf32> to vector<16x16x8xf32>
    %58 = vector.shape_cast %55 : vector<16x16x8xf32> to vector<1x16x1x16x8xf32>
    tpu.vector_store %arg4[%c0_74, %c1_75, %c0_76, %c0_77, %c0_78], %58 {strides = array<i32>} : memref<1x18x2x18x8xf32, #tpu.memory_space<vmem>>, vector<1x16x1x16x8xf32>,
    %c0_79 = arith.constant 0 : index
    %c1_80 = arith.constant 1 : index
    %c0_81 = arith.constant 0 : index
    %c1_82 = arith.constant 1 : index
    %c0_83 = arith.constant 0 : index
    %59 = vector.load %arg4[%c0_79, %c1_80, %c0_81, %c1_82, %c0_83] : memref<1x18x2x18x8xf32, #tpu.memory_space<vmem>>, vector<1x16x1x16x8xf32>
    %60 = vector.shape_cast %59 : vector<1x16x1x16x8xf32> to vector<16x16x8xf32>
    %61 = vector.extract_strided_slice %4 {offsets = [0, 0, 48], sizes = [16, 16, 8], strides = [1, 1, 1]} : vector<16x16x100xf32> to vector<16x16x8xf32>
    %62 = arith.addf %60, %61 : vector<16x16x8xf32>
    %c0_84 = arith.constant 0 : index
    %c1_85 = arith.constant 1 : index
    %c0_86 = arith.constant 0 : index
    %c1_87 = arith.constant 1 : index
    %c0_88 = arith.constant 0 : index
    %63 = vector.load %arg4[%c0_84, %c1_85, %c0_86, %c1_87, %c0_88] : memref<1x18x2x18x8xf32, #tpu.memory_space<vmem>>, vector<1x16x1x16x8xf32>
    %64 = vector.shape_cast %63 : vector<1x16x1x16x8xf32> to vector<16x16x8xf32>
    %65 = vector.shape_cast %62 : vector<16x16x8xf32> to vector<1x16x1x16x8xf32>
    tpu.vector_store %arg4[%c0_84, %c1_85, %c0_86, %c1_87, %c0_88], %65 {strides = array<i32>} : memref<1x18x2x18x8xf32, #tpu.memory_space<vmem>>, vector<1x16x1x16x8xf32>,
    %c0_89 = arith.constant 0 : index
    %c1_90 = arith.constant 1 : index
    %c0_91 = arith.constant 0 : index
    %c2_92 = arith.constant 2 : index
    %c0_93 = arith.constant 0 : index
    %66 = vector.load %arg4[%c0_89, %c1_90, %c0_91, %c2_92, %c0_93] : memref<1x18x2x18x8xf32, #tpu.memory_space<vmem>>, vector<1x16x1x16x4xf32>
    %67 = vector.shape_cast %66 : vector<1x16x1x16x4xf32> to vector<16x16x4xf32>
    %68 = vector.extract_strided_slice %4 {offsets = [0, 0, 56], sizes = [16, 16, 4], strides = [1, 1, 1]} : vector<16x16x100xf32> to vector<16x16x4xf32>
    %69 = arith.addf %67, %68 : vector<16x16x4xf32>
    %c0_94 = arith.constant 0 : index
    %c1_95 = arith.constant 1 : index
    %c0_96 = arith.constant 0 : index
    %c2_97 = arith.constant 2 : index
    %c0_98 = arith.constant 0 : index
    %70 = vector.load %arg4[%c0_94, %c1_95, %c0_96, %c2_97, %c0_98] : memref<1x18x2x18x8xf32, #tpu.memory_space<vmem>>, vector<1x16x1x16x4xf32>
    %71 = vector.shape_cast %70 : vector<1x16x1x16x4xf32> to vector<16x16x4xf32>
    %72 = vector.shape_cast %69 : vector<16x16x4xf32> to vector<1x16x1x16x4xf32>
    tpu.vector_store %arg4[%c0_94, %c1_95, %c0_96, %c2_97, %c0_98], %72 {strides = array<i32>} : memref<1x18x2x18x8xf32, #tpu.memory_space<vmem>>, vector<1x16x1x16x4xf32>,
    %c0_99 = arith.constant 0 : index
    %c1_100 = arith.constant 1 : index
    %c1_101 = arith.constant 1 : index
    %c0_102 = arith.constant 0 : index
    %c0_103 = arith.constant 0 : index
    %73 = vector.load %arg4[%c0_99, %c1_100, %c1_101, %c0_102, %c0_103] : memref<1x18x2x18x8xf32, #tpu.memory_space<vmem>>, vector<1x16x1x16x8xf32>
    %74 = vector.shape_cast %73 : vector<1x16x1x16x8xf32> to vector<16x16x8xf32>
    %75 = vector.extract_strided_slice %4 {offsets = [0, 0, 60], sizes = [16, 16, 8], strides = [1, 1, 1]} : vector<16x16x100xf32> to vector<16x16x8xf32>
    %76 = arith.addf %74, %75 : vector<16x16x8xf32>
    %c0_104 = arith.constant 0 : index
    %c1_105 = arith.constant 1 : index
    %c1_106 = arith.constant 1 : index
    %c0_107 = arith.constant 0 : index
    %c0_108 = arith.constant 0 : index
    %77 = vector.load %arg4[%c0_104, %c1_105, %c1_106, %c0_107, %c0_108] : memref<1x18x2x18x8xf32, #tpu.memory_space<vmem>>, vector<1x16x1x16x8xf32>
    %78 = vector.shape_cast %77 : vector<1x16x1x16x8xf32> to vector<16x16x8xf32>
    %79 = vector.shape_cast %76 : vector<16x16x8xf32> to vector<1x16x1x16x8xf32>
    tpu.vector_store %arg4[%c0_104, %c1_105, %c1_106, %c0_107, %c0_108], %79 {strides = array<i32>} : memref<1x18x2x18x8xf32, #tpu.memory_space<vmem>>, vector<1x16x1x16x8xf32>,
    %c0_109 = arith.constant 0 : index
    %c1_110 = arith.constant 1 : index
    %c1_111 = arith.constant 1 : index
    %c1_112 = arith.constant 1 : index
    %c0_113 = arith.constant 0 : index
    %80 = vector.load %arg4[%c0_109, %c1_110, %c1_111, %c1_112, %c0_113] : memref<1x18x2x18x8xf32, #tpu.memory_space<vmem>>, vector<1x16x1x16x8xf32>
    %81 = vector.shape_cast %80 : vector<1x16x1x16x8xf32> to vector<16x16x8xf32>
    %82 = vector.extract_strided_slice %4 {offsets = [0, 0, 68], sizes = [16, 16, 8], strides = [1, 1, 1]} : vector<16x16x100xf32> to vector<16x16x8xf32>
    %83 = arith.addf %81, %82 : vector<16x16x8xf32>
    %c0_114 = arith.constant 0 : index
    %c1_115 = arith.constant 1 : index
    %c1_116 = arith.constant 1 : index
    %c1_117 = arith.constant 1 : index
    %c0_118 = arith.constant 0 : index
    %84 = vector.load %arg4[%c0_114, %c1_115, %c1_116, %c1_117, %c0_118] : memref<1x18x2x18x8xf32, #tpu.memory_space<vmem>>, vector<1x16x1x16x8xf32>
    %85 = vector.shape_cast %84 : vector<1x16x1x16x8xf32> to vector<16x16x8xf32>
    %86 = vector.shape_cast %83 : vector<16x16x8xf32> to vector<1x16x1x16x8xf32>
    tpu.vector_store %arg4[%c0_114, %c1_115, %c1_116, %c1_117, %c0_118], %86 {strides = array<i32>} : memref<1x18x2x18x8xf32, #tpu.memory_space<vmem>>, vector<1x16x1x16x8xf32>,
    %c0_119 = arith.constant 0 : index
    %c1_120 = arith.constant 1 : index
    %c1_121 = arith.constant 1 : index
    %c2_122 = arith.constant 2 : index
    %c0_123 = arith.constant 0 : index
    %87 = vector.load %arg4[%c0_119, %c1_120, %c1_121, %c2_122, %c0_123] : memref<1x18x2x18x8xf32, #tpu.memory_space<vmem>>, vector<1x16x1x16x4xf32>
    %88 = vector.shape_cast %87 : vector<1x16x1x16x4xf32> to vector<16x16x4xf32>
    %89 = vector.extract_strided_slice %4 {offsets = [0, 0, 76], sizes = [16, 16, 4], strides = [1, 1, 1]} : vector<16x16x100xf32> to vector<16x16x4xf32>
    %90 = arith.addf %88, %89 : vector<16x16x4xf32>
    %c0_124 = arith.constant 0 : index
    %c1_125 = arith.constant 1 : index
    %c1_126 = arith.constant 1 : index
    %c2_127 = arith.constant 2 : index
    %c0_128 = arith.constant 0 : index
    %91 = vector.load %arg4[%c0_124, %c1_125, %c1_126, %c2_127, %c0_128] : memref<1x18x2x18x8xf32, #tpu.memory_space<vmem>>, vector<1x16x1x16x4xf32>
    %92 = vector.shape_cast %91 : vector<1x16x1x16x4xf32> to vector<16x16x4xf32>
    %93 = vector.shape_cast %90 : vector<16x16x4xf32> to vector<1x16x1x16x4xf32>
    tpu.vector_store %arg4[%c0_124, %c1_125, %c1_126, %c2_127, %c0_128], %93 {strides = array<i32>} : memref<1x18x2x18x8xf32, #tpu.memory_space<vmem>>, vector<1x16x1x16x4xf32>,
    %c0_129 = arith.constant 0 : index
    %c2_130 = arith.constant 2 : index
    %c0_131 = arith.constant 0 : index
    %c0_132 = arith.constant 0 : index
    %c0_133 = arith.constant 0 : index
    %94 = vector.load %arg4[%c0_129, %c2_130, %c0_131, %c0_132, %c0_133] : memref<1x18x2x18x8xf32, #tpu.memory_space<vmem>>, vector<1x16x1x16x8xf32>
    %95 = vector.shape_cast %94 : vector<1x16x1x16x8xf32> to vector<16x16x8xf32>
    %96 = vector.extract_strided_slice %4 {offsets = [0, 0, 80], sizes = [16, 16, 8], strides = [1, 1, 1]} : vector<16x16x100xf32> to vector<16x16x8xf32>
    %97 = arith.addf %95, %96 : vector<16x16x8xf32>
    %c0_134 = arith.constant 0 : index
    %c2_135 = arith.constant 2 : index
    %c0_136 = arith.constant 0 : index
    %c0_137 = arith.constant 0 : index
    %c0_138 = arith.constant 0 : index
    %98 = vector.load %arg4[%c0_134, %c2_135, %c0_136, %c0_137, %c0_138] : memref<1x18x2x18x8xf32, #tpu.memory_space<vmem>>, vector<1x16x1x16x8xf32>
    %99 = vector.shape_cast %98 : vector<1x16x1x16x8xf32> to vector<16x16x8xf32>
    %100 = vector.shape_cast %97 : vector<16x16x8xf32> to vector<1x16x1x16x8xf32>
    tpu.vector_store %arg4[%c0_134, %c2_135, %c0_136, %c0_137, %c0_138], %100 {strides = array<i32>} : memref<1x18x2x18x8xf32, #tpu.memory_space<vmem>>, vector<1x16x1x16x8xf32>,
    %c0_139 = arith.constant 0 : index
    %c2_140 = arith.constant 2 : index
    %c0_141 = arith.constant 0 : index
    %c1_142 = arith.constant 1 : index
    %c0_143 = arith.constant 0 : index
    %101 = vector.load %arg4[%c0_139, %c2_140, %c0_141, %c1_142, %c0_143] : memref<1x18x2x18x8xf32, #tpu.memory_space<vmem>>, vector<1x16x1x16x8xf32>
    %102 = vector.shape_cast %101 : vector<1x16x1x16x8xf32> to vector<16x16x8xf32>
    %103 = vector.extract_strided_slice %4 {offsets = [0, 0, 88], sizes = [16, 16, 8], strides = [1, 1, 1]} : vector<16x16x100xf32> to vector<16x16x8xf32>
    %104 = arith.addf %102, %103 : vector<16x16x8xf32>
    %c0_144 = arith.constant 0 : index
    %c2_145 = arith.constant 2 : index
    %c0_146 = arith.constant 0 : index
    %c1_147 = arith.constant 1 : index
    %c0_148 = arith.constant 0 : index
    %105 = vector.load %arg4[%c0_144, %c2_145, %c0_146, %c1_147, %c0_148] : memref<1x18x2x18x8xf32, #tpu.memory_space<vmem>>, vector<1x16x1x16x8xf32>
    %106 = vector.shape_cast %105 : vector<1x16x1x16x8xf32> to vector<16x16x8xf32>
    %107 = vector.shape_cast %104 : vector<16x16x8xf32> to vector<1x16x1x16x8xf32>
    tpu.vector_store %arg4[%c0_144, %c2_145, %c0_146, %c1_147, %c0_148], %107 {strides = array<i32>} : memref<1x18x2x18x8xf32, #tpu.memory_space<vmem>>, vector<1x16x1x16x8xf32>,
    %c0_149 = arith.constant 0 : index
    %c2_150 = arith.constant 2 : index
    %c0_151 = arith.constant 0 : index
    %c2_152 = arith.constant 2 : index
    %c0_153 = arith.constant 0 : index
    %108 = vector.load %arg4[%c0_149, %c2_150, %c0_151, %c2_152, %c0_153] : memref<1x18x2x18x8xf32, #tpu.memory_space<vmem>>, vector<1x16x1x16x4xf32>
    %109 = vector.shape_cast %108 : vector<1x16x1x16x4xf32> to vector<16x16x4xf32>
    %110 = vector.extract_strided_slice %4 {offsets = [0, 0, 96], sizes = [16, 16, 4], strides = [1, 1, 1]} : vector<16x16x100xf32> to vector<16x16x4xf32>
    %111 = arith.addf %109, %110 : vector<16x16x4xf32>
    %c0_154 = arith.constant 0 : index
    %c2_155 = arith.constant 2 : index
    %c0_156 = arith.constant 0 : index
    %c2_157 = arith.constant 2 : index
    %c0_158 = arith.constant 0 : index
    %112 = vector.load %arg4[%c0_154, %c2_155, %c0_156, %c2_157, %c0_158] : memref<1x18x2x18x8xf32, #tpu.memory_space<vmem>>, vector<1x16x1x16x4xf32>
    %113 = vector.shape_cast %112 : vector<1x16x1x16x4xf32> to vector<16x16x4xf32>
    %114 = vector.shape_cast %111 : vector<16x16x4xf32> to vector<1x16x1x16x4xf32>
    tpu.vector_store %arg4[%c0_154, %c2_155, %c0_156, %c2_157, %c0_158], %114 {strides = array<i32>} : memref<1x18x2x18x8xf32, #tpu.memory_space<vmem>>, vector<1x16x1x16x4xf32>,
    return
  }
  func.func @transform_0(%arg0: i32) -> (i32, i32, i32) {
    %c0_i32 = arith.constant 0 : i32
    %c0_i32_0 = arith.constant 0 : i32
    %c0_i32_1 = arith.constant 0 : i32
    return %arg0, %c0_i32, %c0_i32_0 : i32, i32, i32
  }
  func.func @transform_1(%arg0: i32) -> (i32, i32) {
    %c0_i32 = arith.constant 0 : i32
    %c0_i32_0 = arith.constant 0 : i32
    %c0_i32_1 = arith.constant 0 : i32
    return %c0_i32, %c0_i32_0 : i32, i32
  }
  func.func @transform_2(%arg0: i32) -> (i32, i32) {
    %c0_i32 = arith.constant 0 : i32
    %c0_i32_0 = arith.constant 0 : i32
    %c0_i32_1 = arith.constant 0 : i32
    return %c0_i32, %c0_i32_0 : i32, i32
  }
  func.func @transform_3(%arg0: i32) -> (i32, i32, i32, i32, i32) {
    %c0_i32 = arith.constant 0 : i32
    %c0_i32_0 = arith.constant 0 : i32
    %c0_i32_1 = arith.constant 0 : i32
    %c0_i32_2 = arith.constant 0 : i32
    %c0_i32_3 = arith.constant 0 : i32
    return %arg0, %c0_i32, %c0_i32_0, %c0_i32_1, %c0_i32_2 : i32, i32, i32, i32, i32
  }
}

</mosaic_0001>

<llo_original>
// kernel: tpu_custom_call.1
$region0: #{tpu_custom_call.1}
  #allocation0 [shape = 'u32[]', space=smem, size = 0x4, offset = 0x4, fixed_abs, tag = 'smem constant byte address 0x4 - core index']
  #allocation1 [shape = 'u32[144,128]{1,0:T(1,128)}', space=vmem, size = 0x12000, scoped, tag = 'internal scratch']
  %s0 = inlined_call_operand.vmem [shape: f32[2,256,4], index: 0, kind: input, shape index: {}]
  %s1 = inlined_call_operand.vmem [shape: f32[4,100], index: 1, kind: input, shape index: {}]
  %s2 = inlined_call_operand.vmem [shape: f32[1,8], index: 2, kind: input, shape index: {}]
  %s3 = inlined_call_operand.vmem [shape: f32[2,18,2,18,8], index: 3, kind: output, shape index: {}]
  %s4 = sld [smem:[#allocation0]]
  $region45: #{tpu_custom_call.1} parent=0
    _
  %s6 = ssub.s32 1, %s4
  %s7 = scalar_select 0, %s6, %s4
  loop: start=0, step=1, limit=4
  $region2: #{tpu_custom_call.1} parent=0 // loop_pre_header
    _
  $region3: #{tpu_custom_call.1} parent=0 // loop_header
    %s9 = sphi 0, %s13
    %p10 = scmp.ge.s32.totalorder %s9, 4
    %s19 = sphi 0, %s21
    %s22 = sphi 0, %s19
    %s23 = sphi 0, %s22
    %s39 = sphi 0, %s23
    %s43 = sphi 0, %s43
    %s45 = sphi 0, %s43
    %s46 = sphi 0, %s45
    %s60 = sphi 0, %s46
    %s64 = sphi 0, %s64
    %s66 = sphi 0, %s64
    %s67 = sphi 0, %s66
    %s81 = sphi 0, %s67
    %s87 = sphi 0, %s89
    %s90 = sphi 0, %s87
    %s91 = sphi 0, %s90
    %s107 = sphi 0, %s91
  $region4: #{tpu_custom_call.1} parent=0 // loop_header_branch
    %12 = sbr.rel (%p10) target = $region8
  $region5: #{tpu_custom_call.1} parent=0 // loop_body
    %s14 = ssub.s32 %s9, 1
    %s15 = ssub.s32 %s9, 2
    %s16 = sadd.s32 %s9, 1
    %s17 = ssub.s32 %s9, %s16
    %p18 = scmp.eq.s32.totalorder %s17, 0
    %s20 = sadd.s32 %s19, 1
    %s21 = scalar_select %p18, %s19, %s20
    %p24 = pneg %p18
    %p25 = scmp.eq.s32.totalorder %s9, 1
    %p26 = por %p24, %p25
    %p27 = scmp.ne.s32.totalorder %s19, %s22
    %p28 = scmp.eq.s32.totalorder %s9, 0
    %p29 = por %p27, %p28
    %p30 = scmp.ne.s32.totalorder %s19, %s22
    %p31 = scmp.eq.s32.totalorder %s14, 1
    %p32 = por %p30, %p31
    %p33 = scmp.ne.s32.totalorder %s22, %s23
    %p34 = scmp.eq.s32.totalorder %s14, 0
    %p35 = por %p33, %p34
    %p36 = scmp.ne.s32.totalorder %s22, %s23
    %p37 = scmp.eq.s32.totalorder %s15, 1
    %p38 = por %p36, %p37
    %p40 = scmp.ne.s32.totalorder %s23, %s39
    %p41 = scmp.eq.s32.totalorder %s15, 0
    %p42 = por %p40, %p41
    %s44 = sadd.s32 %s43, 1
    %p47 = scmp.eq.s32.totalorder %s9, 1
    %p48 = scmp.ne.s32.totalorder %s43, %s45
    %p49 = scmp.eq.s32.totalorder %s9, 0
    %p50 = por %p48, %p49
    %p51 = scmp.ne.s32.totalorder %s43, %s45
    %p52 = scmp.eq.s32.totalorder %s14, 1
    %p53 = por %p51, %p52
    %p54 = scmp.ne.s32.totalorder %s45, %s46
    %p55 = scmp.eq.s32.totalorder %s14, 0
    %p56 = por %p54, %p55
    %p57 = scmp.ne.s32.totalorder %s45, %s46
    %p58 = scmp.eq.s32.totalorder %s15, 1
    %p59 = por %p57, %p58
    %p61 = scmp.ne.s32.totalorder %s46, %s60
    %p62 = scmp.eq.s32.totalorder %s15, 0
    %p63 = por %p61, %p62
    %s65 = sadd.s32 %s64, 1
    %p68 = scmp.eq.s32.totalorder %s9, 1
    %p69 = scmp.ne.s32.totalorder %s64, %s66
    %p70 = scmp.eq.s32.totalorder %s9, 0
    %p71 = por %p69, %p70
    %p72 = scmp.ne.s32.totalorder %s64, %s66
    %p73 = scmp.eq.s32.totalorder %s14, 1
    %p74 = por %p72, %p73
    %p75 = scmp.ne.s32.totalorder %s66, %s67
    %p76 = scmp.eq.s32.totalorder %s14, 0
    %p77 = por %p75, %p76
    %p78 = scmp.ne.s32.totalorder %s66, %s67
    %p79 = scmp.eq.s32.totalorder %s15, 1
    %p80 = por %p78, %p79
    %p82 = scmp.ne.s32.totalorder %s67, %s81
    %p83 = scmp.eq.s32.totalorder %s15, 0
    %p84 = por %p82, %p83
    %s85 = ssub.s32 %s9, %s16
    %p86 = scmp.eq.s32.totalorder %s85, 0
    %s88 = sadd.s32 %s87, 1
    %s89 = scalar_select %p86, %s87, %s88
    %p92 = pneg %p86
    %p93 = scmp.eq.s32.totalorder %s9, 1
    %p94 = por %p92, %p93
    %p95 = scmp.ne.s32.totalorder %s87, %s90
    %p96 = scmp.eq.s32.totalorder %s9, 0
    %p97 = por %p95, %p96
    %p98 = scmp.ne.s32.totalorder %s87, %s90
    %p99 = scmp.eq.s32.totalorder %s14, 1
    %p100 = por %p98, %p99
    %p101 = scmp.ne.s32.totalorder %s90, %s91
    %p102 = scmp.eq.s32.totalorder %s14, 0
    %p103 = por %p101, %p102
    %p104 = scmp.ne.s32.totalorder %s90, %s91
    %p105 = scmp.eq.s32.totalorder %s15, 1
    %p106 = por %p104, %p105
    %p108 = scmp.ne.s32.totalorder %s91, %s107
    %p109 = scmp.eq.s32.totalorder %s15, 0
    %p110 = por %p108, %p109
    %p111 = scmp.le.s32.totalorder 1, %s9
    %p112 = scmp.lt.s32.totalorder %s9, 3
    %p113 = pnand %p111, %p112
    %p114 = pneg %p113
    // Predicated region
    $region9: #{tpu_custom_call.1} parent=5 // pred_check
      _
    $region10: #{tpu_custom_call.1} parent=5 // pred_check_branch
      %116 = sbr.rel (%p113) target = $region12
    $region11: #{tpu_custom_call.1} parent=5 // pred_region
      %s117 = ssub.s32 %s9, 1
      // Predicated region
      $region13: #{tpu_custom_call.1} parent=11 // pred_check
        %p118 = pneg %p56
      $region14: #{tpu_custom_call.1} parent=11 // pred_check_branch
        %120 = sbr.rel (%p118) target = $region16
      $region15: #{tpu_custom_call.1} parent=11 // pred_region
        _
      $region16: #{tpu_custom_call.1} parent=11 // pred_fallthru
        _
      // Predicated region
      $region17: #{tpu_custom_call.1} parent=11 // pred_check
        %p121 = pneg %p77
      $region18: #{tpu_custom_call.1} parent=11 // pred_check_branch
        %123 = sbr.rel (%p121) target = $region20
      $region19: #{tpu_custom_call.1} parent=11 // pred_region
        _
      $region20: #{tpu_custom_call.1} parent=11 // pred_fallthru
        _
    $region12: #{tpu_custom_call.1} parent=5 // pred_fallthru
      _
    %p124 = scmp.lt.s32.totalorder %s9, 2
    // Predicated region
    $region21: #{tpu_custom_call.1} parent=5 // pred_check
      %p125 = pneg %p124
    $region22: #{tpu_custom_call.1} parent=5 // pred_check_branch
      %127 = sbr.rel (%p125) target = $region24
    $region23: #{tpu_custom_call.1} parent=5 // pred_region
      // Predicated region
      $region25: #{tpu_custom_call.1} parent=23 // pred_check
        %p128 = pneg %p29
      $region26: #{tpu_custom_call.1} parent=23 // pred_check_branch
        %130 = sbr.rel (%p128) target = $region28
      $region27: #{tpu_custom_call.1} parent=23 // pred_region
        %p131 = scmp.lt.s32.totalorder %s9, 1
        %s132 = scalar_select %p131, %s9, 1
        %s133 = smul.addr %s132, 32
        %s134 = smul.addr %s133, 8
        %s135 = scalar_lea.vmem %s0, %s134
      $region28: #{tpu_custom_call.1} parent=23 // pred_fallthru
        _
    $region24: #{tpu_custom_call.1} parent=5 // pred_fallthru
      _
    %p136 = scmp.le.s32.totalorder 1, %s9
    %p137 = scmp.lt.s32.totalorder %s9, 3
    %p138 = pnand %p136, %p137
    %p139 = pneg %p138
    // Predicated region
    $region29: #{tpu_custom_call.1} parent=5 // pred_check
      _
    $region30: #{tpu_custom_call.1} parent=5 // pred_check_branch
      %141 = sbr.rel (%p138) target = $region32
    $region31: #{tpu_custom_call.1} parent=5 // pred_region
      %s142 = ssub.s32 %s9, 1
      %p143 = scmp.lt.s32.totalorder %s14, 1
      %s144 = scalar_select %p143, %s14, 1
      %s145 = smul.addr %s144, 32
      %s146 = smul.addr %s145, 8
      %s147 = scalar_lea.vmem %s0, %s146
      %p148 = pneg %p35
      %p149 = pneg %p32
      %p150 = pneg %p56
      %p151 = pneg %p53
      %p152 = pneg %p77
      %p153 = pneg %p74
      %p154 = pneg %p103
      %p155 = pneg %p100
      %p156 = scmp.lt.s32.totalorder %s14, 1
      %s157 = scalar_select %p156, %s14, 1
      %s158 = smul.addr %s157, 108
      %s159 = smul.addr %s158, 8
      %s160 = scalar_lea.vmem %s3, %s159
      %p161 = scmp.lt.s32.totalorder %s14, 1
      %s162 = scalar_select %p161, %s14, 1
      %s163 = smul.addr %s162, 32
      %s164 = smul.addr %s163, 8
      %s165 = scalar_lea.vmem %s0, %s164
      %p166 = scmp.lt.s32.totalorder %s14, 1
      %s167 = scalar_select %p166, %s14, 1
      %s168 = smul.addr %s167, 108
      %s169 = smul.addr %s168, 8
      %s170 = scalar_lea.vmem %s3, %s169
      %v171 = vld [vmem:[%s165] sm:$0xff]
      %v172 = vld [vmem:[%s165 + $0x8] sm:$0xff]
      %v173 = vld [vmem:[%s165 + $0x10] sm:$0xff]
      %v174 = vld [vmem:[%s165 + $0x18] sm:$0xff]
      %v175 = vld [vmem:[%s165 + $0x20] sm:$0xff]
      %v176 = vld [vmem:[%s165 + $0x28] sm:$0xff]
      %v177 = vld [vmem:[%s165 + $0x30] sm:$0xff]
      %v178 = vld [vmem:[%s165 + $0x38] sm:$0xff]
      %v179 = vld [vmem:[%s165 + $0x40] sm:$0xff]
      %v180 = vld [vmem:[%s165 + $0x48] sm:$0xff]
      %v181 = vld [vmem:[%s165 + $0x50] sm:$0xff]
      %v182 = vld [vmem:[%s165 + $0x58] sm:$0xff]
      %v183 = vld [vmem:[%s165 + $0x60] sm:$0xff]
      %v184 = vld [vmem:[%s165 + $0x68] sm:$0xff]
      %v185 = vld [vmem:[%s165 + $0x70] sm:$0xff]
      %v186 = vld [vmem:[%s165 + $0x78] sm:$0xff]
      %v187 = vld [vmem:[%s165 + $0x80] sm:$0xff]
      %v188 = vld [vmem:[%s165 + $0x88] sm:$0xff]
      %v189 = vld [vmem:[%s165 + $0x90] sm:$0xff]
      %v190 = vld [vmem:[%s165 + $0x98] sm:$0xff]
      %v191 = vld [vmem:[%s165 + $0xa0] sm:$0xff]
      %v192 = vld [vmem:[%s165 + $0xa8] sm:$0xff]
      %v193 = vld [vmem:[%s165 + $0xb0] sm:$0xff]
      %v194 = vld [vmem:[%s165 + $0xb8] sm:$0xff]
      %v195 = vld [vmem:[%s165 + $0xc0] sm:$0xff]
      %v196 = vld [vmem:[%s165 + $0xc8] sm:$0xff]
      %v197 = vld [vmem:[%s165 + $0xd0] sm:$0xff]
      %v198 = vld [vmem:[%s165 + $0xd8] sm:$0xff]
      %v199 = vld [vmem:[%s165 + $0xe0] sm:$0xff]
      %v200 = vld [vmem:[%s165 + $0xe8] sm:$0xff]
      %v201 = vld [vmem:[%s165 + $0xf0] sm:$0xff]
      %v202 = vld [vmem:[%s165 + $0xf8] sm:$0xff]
      %v203 = vld [vmem:[%s1] sm:$0xf]
      %vm204 = vcmask 31744
      %v206 = vsel %vm204, %v171, 0
      %v209 = vsel %vm204, %v172, 0
      %v212 = vsel %vm204, %v173, 0
      %v215 = vsel %vm204, %v174, 0
      %v218 = vsel %vm204, %v175, 0
      %v221 = vsel %vm204, %v176, 0
      %v224 = vsel %vm204, %v177, 0
      %v227 = vsel %vm204, %v178, 0
      %v230 = vsel %vm204, %v179, 0
      %v233 = vsel %vm204, %v180, 0
      %v236 = vsel %vm204, %v181, 0
      %v239 = vsel %vm204, %v182, 0
      %v242 = vsel %vm204, %v183, 0
      %v245 = vsel %vm204, %v184, 0
      %v248 = vsel %vm204, %v185, 0
      %v251 = vsel %vm204, %v186, 0
      %v254 = vsel %vm204, %v187, 0
      %v257 = vsel %vm204, %v188, 0
      %v260 = vsel %vm204, %v189, 0
      %v263 = vsel %vm204, %v190, 0
      %v266 = vsel %vm204, %v191, 0
      %v269 = vsel %vm204, %v192, 0
      %v272 = vsel %vm204, %v193, 0
      %v275 = vsel %vm204, %v194, 0
      %v278 = vsel %vm204, %v195, 0
      %v281 = vsel %vm204, %v196, 0
      %v284 = vsel %vm204, %v197, 0
      %v287 = vsel %vm204, %v198, 0
      %v290 = vsel %vm204, %v199, 0
      %v293 = vsel %vm204, %v200, 0
      %v296 = vsel %vm204, %v201, 0
      %v299 = vsel %vm204, %v202, 0
      %vm301 = vcmask 1043456
      %v303 = vsel %vm301, %v203, 0
      %305 = vmatprep.subr.mxu0 0.0
      %306 = vmatpush1.msra.mxu0 %v303
      %307 = vmatprep.subr.mxu0 0.0
      %308 = vmatpush1.msra.mxu0 0.0
      %309 = vmatprep.subr.mxu0 0.0
      %310 = vmatpush1.msra.mxu0 0.0
      %311 = vmatprep.subr.mxu0 0.0
      %312 = vmatpush1.msra.mxu0 0.0
      %313 = vmatprep.subr.mxu0 0.0
      %314 = vmatpush1.msra.mxu0 0.0
      %315 = vmatprep.subr.mxu0 0.0
      %316 = vmatpush1.msra.mxu0 0.0
      %317 = vmatprep.subr.mxu0 0.0
      %318 = vmatpush1.msra.mxu0 0.0
      %319 = vmatprep.subr.mxu0 0.0
      %320 = vmatpush1.msra.mxu0 0.0
      %321 = vmatprep.subr.mxu0 0.0
      %322 = vmatpush1.msra.mxu0 0.0
      %323 = vmatprep.subr.mxu0 0.0
      %324 = vmatpush1.msra.mxu0 0.0
      %325 = vmatprep.subr.mxu0 0.0
      %326 = vmatpush1.msra.mxu0 0.0
      %327 = vmatprep.subr.mxu0 0.0
      %328 = vmatpush1.msra.mxu0 0.0
      %329 = vmatprep.subr.mxu0 0.0
      %330 = vmatpush1.msra.mxu0 0.0
      %331 = vmatprep.subr.mxu0 0.0
      %332 = vmatpush1.msra.mxu0 0.0
      %333 = vmatprep.subr.mxu0 0.0
      %334 = vmatpush1.msra.mxu0 0.0
      %335 = vmatprep.subr.mxu0 0.0
      %336 = vmatpush1.msra.mxu0 0.0
      %337 = vmatprep.subr.mxu0 0.0
      %338 = vmatpush1.msra.mxu0 0.0
      %339 = vmatprep.subr.mxu0 0.0
      %340 = vmatpush1.msra.mxu0 0.0
      %341 = vmatprep.subr.mxu0 0.0
      %342 = vmatpush1.msra.mxu0 0.0
      %343 = vmatprep.subr.mxu0 0.0
      %344 = vmatpush1.msra.mxu0 0.0
      %345 = vmatprep.subr.mxu0 0.0
      %346 = vmatpush1.msra.mxu0 0.0
      %347 = vmatprep.subr.mxu0 0.0
      %348 = vmatpush1.msra.mxu0 0.0
      %349 = vmatprep.subr.mxu0 0.0
      %350 = vmatpush1.msra.mxu0 0.0
      %351 = vmatprep.subr.mxu0 0.0
      %352 = vmatpush1.msra.mxu0 0.0
      %353 = vmatprep.subr.mxu0 0.0
      %354 = vmatpush1.msra.mxu0 0.0
      %355 = vmatprep.subr.mxu0 0.0
      %356 = vmatpush1.msra.mxu0 0.0
      %357 = vmatprep.subr.mxu0 0.0
      %358 = vmatpush1.msra.mxu0 0.0
      %359 = vmatprep.subr.mxu0 0.0
      %360 = vmatpush1.msra.mxu0 0.0
      %361 = vmatprep.subr.mxu0 0.0
      %362 = vmatpush1.msra.mxu0 0.0
      %363 = vmatprep.subr.mxu0 0.0
      %364 = vmatpush1.msra.mxu0 0.0
      %365 = vmatprep.subr.mxu0 0.0
      %366 = vmatpush1.msra.mxu0 0.0
      %367 = vmatprep.subr.mxu0 0.0
      %368 = vmatpush1.msra.mxu0 0.0
      %369 = vmatprep.mubr.f32.mxu0 0.0
      %370 = vmatmul.mubr.f32.gmra.mrb[0].mxu0 %v206
      %v371 = vpop.f32.mrb[0].mxu0
      %v372 = vadd.f32 0.0, %v371
      %v373 = vpop.f32.mrb[0].mxu0
      %374 = vmatprep.mubr.f32.mxu0 0.0
      %375 = vmatmul.mubr.f32.gmra.mrb[0].mxu0 %v209
      %v376 = vpop.f32.mrb[0].mxu0
      %v377 = vadd.f32 0.0, %v376
      %v378 = vpop.f32.mrb[0].mxu0
      %379 = vmatprep.mubr.f32.mxu0 0.0
      %380 = vmatmul.mubr.f32.gmra.mrb[0].mxu0 %v212
      %v381 = vpop.f32.mrb[0].mxu0
      %v382 = vadd.f32 0.0, %v381
      %v383 = vpop.f32.mrb[0].mxu0
      %384 = vmatprep.mubr.f32.mxu0 0.0
      %385 = vmatmul.mubr.f32.gmra.mrb[0].mxu0 %v215
      %v386 = vpop.f32.mrb[0].mxu0
      %v387 = vadd.f32 0.0, %v386
      %v388 = vpop.f32.mrb[0].mxu0
      %389 = vmatprep.mubr.f32.mxu0 0.0
      %390 = vmatmul.mubr.f32.gmra.mrb[0].mxu0 %v218
      %v391 = vpop.f32.mrb[0].mxu0
      %v392 = vadd.f32 0.0, %v391
      %v393 = vpop.f32.mrb[0].mxu0
      %394 = vmatprep.mubr.f32.mxu0 0.0
      %395 = vmatmul.mubr.f32.gmra.mrb[0].mxu0 %v221
      %v396 = vpop.f32.mrb[0].mxu0
      %v397 = vadd.f32 0.0, %v396
      %v398 = vpop.f32.mrb[0].mxu0
      %399 = vmatprep.mubr.f32.mxu0 0.0
      %400 = vmatmul.mubr.f32.gmra.mrb[0].mxu0 %v224
      %v401 = vpop.f32.mrb[0].mxu0
      %v402 = vadd.f32 0.0, %v401
      %v403 = vpop.f32.mrb[0].mxu0
      %404 = vmatprep.mubr.f32.mxu0 0.0
      %405 = vmatmul.mubr.f32.gmra.mrb[0].mxu0 %v227
      %v406 = vpop.f32.mrb[0].mxu0
      %v407 = vadd.f32 0.0, %v406
      %v408 = vpop.f32.mrb[0].mxu0
      %409 = vmatprep.mubr.f32.mxu0 0.0
      %410 = vmatmul.mubr.f32.gmra.mrb[0].mxu0 %v230
      %v411 = vpop.f32.mrb[0].mxu0
      %v412 = vadd.f32 0.0, %v411
      %v413 = vpop.f32.mrb[0].mxu0
      %414 = vmatprep.mubr.f32.mxu0 0.0
      %415 = vmatmul.mubr.f32.gmra.mrb[0].mxu0 %v233
      %v416 = vpop.f32.mrb[0].mxu0
      %v417 = vadd.f32 0.0, %v416
      %v418 = vpop.f32.mrb[0].mxu0
      %419 = vmatprep.mubr.f32.mxu0 0.0
      %420 = vmatmul.mubr.f32.gmra.mrb[0].mxu0 %v236
      %v421 = vpop.f32.mrb[0].mxu0
      %v422 = vadd.f32 0.0, %v421
      %v423 = vpop.f32.mrb[0].mxu0
      %424 = vmatprep.mubr.f32.mxu0 0.0
      %425 = vmatmul.mubr.f32.gmra.mrb[0].mxu0 %v239
      %v426 = vpop.f32.mrb[0].mxu0
      %v427 = vadd.f32 0.0, %v426
      %v428 = vpop.f32.mrb[0].mxu0
      %429 = vmatprep.mubr.f32.mxu0 0.0
      %430 = vmatmul.mubr.f32.gmra.mrb[0].mxu0 %v242
      %v431 = vpop.f32.mrb[0].mxu0
      %v432 = vadd.f32 0.0, %v431
      %v433 = vpop.f32.mrb[0].mxu0
      %434 = vmatprep.mubr.f32.mxu0 0.0
      %435 = vmatmul.mubr.f32.gmra.mrb[0].mxu0 %v245
      %v436 = vpop.f32.mrb[0].mxu0
      %v437 = vadd.f32 0.0, %v436
      %v438 = vpop.f32.mrb[0].mxu0
      %439 = vmatprep.mubr.f32.mxu0 0.0
      %440 = vmatmul.mubr.f32.gmra.mrb[0].mxu0 %v248
      %v441 = vpop.f32.mrb[0].mxu0
      %v442 = vadd.f32 0.0, %v441
      %v443 = vpop.f32.mrb[0].mxu0
      %444 = vmatprep.mubr.f32.mxu0 0.0
      %445 = vmatmul.mubr.f32.gmra.mrb[0].mxu0 %v251
      %v446 = vpop.f32.mrb[0].mxu0
      %v447 = vadd.f32 0.0, %v446
      %v448 = vpop.f32.mrb[0].mxu0
      %449 = vmatprep.mubr.f32.mxu0 0.0
      %450 = vmatmul.mubr.f32.gmra.mrb[0].mxu0 %v254
      %v451 = vpop.f32.mrb[0].mxu0
      %v452 = vadd.f32 0.0, %v451
      %v453 = vpop.f32.mrb[0].mxu0
      %454 = vmatprep.mubr.f32.mxu0 0.0
      %455 = vmatmul.mubr.f32.gmra.mrb[0].mxu0 %v257
      %v456 = vpop.f32.mrb[0].mxu0
      %v457 = vadd.f32 0.0, %v456
      %v458 = vpop.f32.mrb[0].mxu0
      %459 = vmatprep.mubr.f32.mxu0 0.0
      %460 = vmatmul.mubr.f32.gmra.mrb[0].mxu0 %v260
      %v461 = vpop.f32.mrb[0].mxu0
      %v462 = vadd.f32 0.0, %v461
      %v463 = vpop.f32.mrb[0].mxu0
      %464 = vmatprep.mubr.f32.mxu0 0.0
      %465 = vmatmul.mubr.f32.gmra.mrb[0].mxu0 %v263
      %v466 = vpop.f32.mrb[0].mxu0
      %v467 = vadd.f32 0.0, %v466
      %v468 = vpop.f32.mrb[0].mxu0
      %469 = vmatprep.mubr.f32.mxu0 0.0
      %470 = vmatmul.mubr.f32.gmra.mrb[0].mxu0 %v266
      %v471 = vpop.f32.mrb[0].mxu0
      %v472 = vadd.f32 0.0, %v471
      %v473 = vpop.f32.mrb[0].mxu0
      %474 = vmatprep.mubr.f32.mxu0 0.0
      %475 = vmatmul.mubr.f32.gmra.mrb[0].mxu0 %v269
      %v476 = vpop.f32.mrb[0].mxu0
      %v477 = vadd.f32 0.0, %v476
      %v478 = vpop.f32.mrb[0].mxu0
      %479 = vmatprep.mubr.f32.mxu0 0.0
      %480 = vmatmul.mubr.f32.gmra.mrb[0].mxu0 %v272
      %v481 = vpop.f32.mrb[0].mxu0
      %v482 = vadd.f32 0.0, %v481
      %v483 = vpop.f32.mrb[0].mxu0
      %484 = vmatprep.mubr.f32.mxu0 0.0
      %485 = vmatmul.mubr.f32.gmra.mrb[0].mxu0 %v275
      %v486 = vpop.f32.mrb[0].mxu0
      %v487 = vadd.f32 0.0, %v486
      %v488 = vpop.f32.mrb[0].mxu0
      %489 = vmatprep.mubr.f32.mxu0 0.0
      %490 = vmatmul.mubr.f32.gmra.mrb[0].mxu0 %v278
      %v491 = vpop.f32.mrb[0].mxu0
      %v492 = vadd.f32 0.0, %v491
      %v493 = vpop.f32.mrb[0].mxu0
      %494 = vmatprep.mubr.f32.mxu0 0.0
      %495 = vmatmul.mubr.f32.gmra.mrb[0].mxu0 %v281
      %v496 = vpop.f32.mrb[0].mxu0
      %v497 = vadd.f32 0.0, %v496
      %v498 = vpop.f32.mrb[0].mxu0
      %499 = vmatprep.mubr.f32.mxu0 0.0
      %500 = vmatmul.mubr.f32.gmra.mrb[0].mxu0 %v284
      %v501 = vpop.f32.mrb[0].mxu0
      %v502 = vadd.f32 0.0, %v501
      %v503 = vpop.f32.mrb[0].mxu0
      %504 = vmatprep.mubr.f32.mxu0 0.0
      %505 = vmatmul.mubr.f32.gmra.mrb[0].mxu0 %v287
      %v506 = vpop.f32.mrb[0].mxu0
      %v507 = vadd.f32 0.0, %v506
      %v508 = vpop.f32.mrb[0].mxu0
      %509 = vmatprep.mubr.f32.mxu0 0.0
      %510 = vmatmul.mubr.f32.gmra.mrb[0].mxu0 %v290
      %v511 = vpop.f32.mrb[0].mxu0
      %v512 = vadd.f32 0.0, %v511
      %v513 = vpop.f32.mrb[0].mxu0
      %514 = vmatprep.mubr.f32.mxu0 0.0
      %515 = vmatmul.mubr.f32.gmra.mrb[0].mxu0 %v293
      %v516 = vpop.f32.mrb[0].mxu0
      %v517 = vadd.f32 0.0, %v516
      %v518 = vpop.f32.mrb[0].mxu0
      %519 = vmatprep.mubr.f32.mxu0 0.0
      %520 = vmatmul.mubr.f32.gmra.mrb[0].mxu0 %v296
      %v521 = vpop.f32.mrb[0].mxu0
      %v522 = vadd.f32 0.0, %v521
      %v523 = vpop.f32.mrb[0].mxu0
      %524 = vmatprep.mubr.f32.mxu0 0.0
      %525 = vmatmul.mubr.f32.gmra.mrb[0].mxu0 %v299
      %v526 = vpop.f32.mrb[0].mxu0
      %v527 = vadd.f32 0.0, %v526
      %v528 = vpop.f32.mrb[0].mxu0
      %529 = vdwg.mxu0
      %v530 = vld [vmem:[%s2] sm:$0x1]
      %v532 = vlaneseq
      %v533 = vshrl.u32 %v532, 7
      %v534 = vsub.s32 0, %v533
      %v535 = vrot.slane %v530, %v534
      %vm537 = vcmask 64512
      %538 = vst.msk [vmem:[%s170] sm:$0xff] %vm537, %v535
      %539 = vst.msk [vmem:[%s170 + $0x8] sm:$0xff] %vm537, %v535
      %vm540 = vcmask 58368
      %541 = vst.msk [vmem:[%s170 + $0x10] sm:$0x3] %vm540, %v535
      %542 = vst.msk [vmem:[%s170 + $0x18] sm:$0xff] %vm537, %v535
      %543 = vst.msk [vmem:[%s170 + $0x20] sm:$0xff] %vm537, %v535
      %544 = vst.msk [vmem:[%s170 + $0x28] sm:$0x3] %vm540, %v535
      %545 = vst.msk [vmem:[%s170 + $0x30] sm:$0xff] %vm537, %v535
      %546 = vst.msk [vmem:[%s170 + $0x38] sm:$0xff] %vm537, %v535
      %547 = vst.msk [vmem:[%s170 + $0x40] sm:$0x3] %vm540, %v535
      %548 = vst.msk [vmem:[%s170 + $0x48] sm:$0xff] %vm537, %v535
      %549 = vst.msk [vmem:[%s170 + $0x50] sm:$0xff] %vm537, %v535
      %550 = vst.msk [vmem:[%s170 + $0x58] sm:$0x3] %vm540, %v535
      %551 = vst.msk [vmem:[%s170 + $0x60] sm:$0xff] %vm537, %v535
      %552 = vst.msk [vmem:[%s170 + $0x68] sm:$0xff] %vm537, %v535
      %553 = vst.msk [vmem:[%s170 + $0x70] sm:$0x3] %vm540, %v535
      %554 = vst.msk [vmem:[%s170 + $0x78] sm:$0xff] %vm537, %v535
      %555 = vst.msk [vmem:[%s170 + $0x80] sm:$0xff] %vm537, %v535
      %556 = vst.msk [vmem:[%s170 + $0x88] sm:$0x3] %vm540, %v535
      %557 = vst.msk [vmem:[%s170 + $0x90] sm:$0xff] %vm537, %v535
      %558 = vst.msk [vmem:[%s170 + $0x98] sm:$0xff] %vm537, %v535
      %559 = vst.msk [vmem:[%s170 + $0xa0] sm:$0x3] %vm540, %v535
      %560 = vst.msk [vmem:[%s170 + $0xa8] sm:$0xff] %vm537, %v535
      %561 = vst.msk [vmem:[%s170 + $0xb0] sm:$0xff] %vm537, %v535
      %562 = vst.msk [vmem:[%s170 + $0xb8] sm:$0x3] %vm540, %v535
      %563 = vst.msk [vmem:[%s170 + $0xc0] sm:$0xff] %vm537, %v535
      %564 = vst.msk [vmem:[%s170 + $0xc8] sm:$0xff] %vm537, %v535
      %565 = vst.msk [vmem:[%s170 + $0xd0] sm:$0x3] %vm540, %v535
      %566 = vst.msk [vmem:[%s170 + $0xd8] sm:$0xff] %vm537, %v535
      %567 = vst.msk [vmem:[%s170 + $0xe0] sm:$0xff] %vm537, %v535
      %568 = vst.msk [vmem:[%s170 + $0xe8] sm:$0x3] %vm540, %v535
      %569 = vst.msk [vmem:[%s170 + $0xf0] sm:$0xff] %vm537, %v535
      %570 = vst.msk [vmem:[%s170 + $0xf8] sm:$0xff] %vm537, %v535
      %571 = vst.msk [vmem:[%s170 + $0x100] sm:$0x3] %vm540, %v535
      %572 = vst.msk [vmem:[%s170 + $0x108] sm:$0xff] %vm537, %v535
      %573 = vst.msk [vmem:[%s170 + $0x110] sm:$0xff] %vm537, %v535
      %574 = vst.msk [vmem:[%s170 + $0x118] sm:$0x3] %vm540, %v535
      %575 = vst.msk [vmem:[%s170 + $0x120] sm:$0xff] %vm537, %v535
      %576 = vst.msk [vmem:[%s170 + $0x128] sm:$0xff] %vm537, %v535
      %577 = vst.msk [vmem:[%s170 + $0x130] sm:$0x3] %vm540, %v535
      %578 = vst.msk [vmem:[%s170 + $0x138] sm:$0xff] %vm537, %v535
      %579 = vst.msk [vmem:[%s170 + $0x140] sm:$0xff] %vm537, %v535
      %580 = vst.msk [vmem:[%s170 + $0x148] sm:$0x3] %vm540, %v535
      %581 = vst.msk [vmem:[%s170 + $0x150] sm:$0xff] %vm537, %v535
      %582 = vst.msk [vmem:[%s170 + $0x158] sm:$0xff] %vm537, %v535
      %583 = vst.msk [vmem:[%s170 + $0x160] sm:$0x3] %vm540, %v535
      %584 = vst.msk [vmem:[%s170 + $0x168] sm:$0xff] %vm537, %v535
      %585 = vst.msk [vmem:[%s170 + $0x170] sm:$0xff] %vm537, %v535
      %586 = vst.msk [vmem:[%s170 + $0x178] sm:$0x3] %vm540, %v535
      %587 = vst.msk [vmem:[%s170 + $0x180] sm:$0xff] %vm537, %v535
      %588 = vst.msk [vmem:[%s170 + $0x188] sm:$0xff] %vm537, %v535
      %589 = vst.msk [vmem:[%s170 + $0x190] sm:$0x3] %vm540, %v535
      %590 = vst.msk [vmem:[%s170 + $0x198] sm:$0xff] %vm537, %v535
      %591 = vst.msk [vmem:[%s170 + $0x1a0] sm:$0xff] %vm537, %v535
      %592 = vst.msk [vmem:[%s170 + $0x1a8] sm:$0x3] %vm540, %v535
      %593 = vst.msk [vmem:[%s170 + $0x1b0] sm:$0xff] %vm537, %v535
      %594 = vst.msk [vmem:[%s170 + $0x1b8] sm:$0xff] %vm537, %v535
      %595 = vst.msk [vmem:[%s170 + $0x1c0] sm:$0x3] %vm540, %v535
      %596 = vst.msk [vmem:[%s170 + $0x1c8] sm:$0xff] %vm537, %v535
      %597 = vst.msk [vmem:[%s170 + $0x1d0] sm:$0xff] %vm537, %v535
      %598 = vst.msk [vmem:[%s170 + $0x1d8] sm:$0x3] %vm540, %v535
      %599 = vst.msk [vmem:[%s170 + $0x1e0] sm:$0xff] %vm537, %v535
      %600 = vst.msk [vmem:[%s170 + $0x1e8] sm:$0xff] %vm537, %v535
      %601 = vst.msk [vmem:[%s170 + $0x1f0] sm:$0x3] %vm540, %v535
      %602 = vst.msk [vmem:[%s170 + $0x1f8] sm:$0xff] %vm537, %v535
      %603 = vst.msk [vmem:[%s170 + $0x200] sm:$0xff] %vm537, %v535
      %604 = vst.msk [vmem:[%s170 + $0x208] sm:$0x3] %vm540, %v535
      %605 = vst.msk [vmem:[%s170 + $0x210] sm:$0xff] %vm537, %v535
      %606 = vst.msk [vmem:[%s170 + $0x218] sm:$0xff] %vm537, %v535
      %607 = vst.msk [vmem:[%s170 + $0x220] sm:$0x3] %vm540, %v535
      %608 = vst.msk [vmem:[%s170 + $0x228] sm:$0xff] %vm537, %v535
      %609 = vst.msk [vmem:[%s170 + $0x230] sm:$0xff] %vm537, %v535
      %610 = vst.msk [vmem:[%s170 + $0x238] sm:$0x3] %vm540, %v535
      %611 = vst.msk [vmem:[%s170 + $0x240] sm:$0xff] %vm537, %v535
      %612 = vst.msk [vmem:[%s170 + $0x248] sm:$0xff] %vm537, %v535
      %613 = vst.msk [vmem:[%s170 + $0x250] sm:$0x3] %vm540, %v535
      %614 = vst.msk [vmem:[%s170 + $0x258] sm:$0xff] %vm537, %v535
      %615 = vst.msk [vmem:[%s170 + $0x260] sm:$0xff] %vm537, %v535
      %616 = vst.msk [vmem:[%s170 + $0x268] sm:$0x3] %vm540, %v535
      %617 = vst.msk [vmem:[%s170 + $0x270] sm:$0xff] %vm537, %v535
      %618 = vst.msk [vmem:[%s170 + $0x278] sm:$0xff] %vm537, %v535
      %619 = vst.msk [vmem:[%s170 + $0x280] sm:$0x3] %vm540, %v535
      %620 = vst.msk [vmem:[%s170 + $0x288] sm:$0xff] %vm537, %v535
      %621 = vst.msk [vmem:[%s170 + $0x290] sm:$0xff] %vm537, %v535
      %622 = vst.msk [vmem:[%s170 + $0x298] sm:$0x3] %vm540, %v535
      %623 = vst.msk [vmem:[%s170 + $0x2a0] sm:$0xff] %vm537, %v535
      %624 = vst.msk [vmem:[%s170 + $0x2a8] sm:$0xff] %vm537, %v535
      %625 = vst.msk [vmem:[%s170 + $0x2b0] sm:$0x3] %vm540, %v535
      %626 = vst.msk [vmem:[%s170 + $0x2b8] sm:$0xff] %vm537, %v535
      %627 = vst.msk [vmem:[%s170 + $0x2c0] sm:$0xff] %vm537, %v535
      %628 = vst.msk [vmem:[%s170 + $0x2c8] sm:$0x3] %vm540, %v535
      %629 = vst.msk [vmem:[%s170 + $0x2d0] sm:$0xff] %vm537, %v535
      %630 = vst.msk [vmem:[%s170 + $0x2d8] sm:$0xff] %vm537, %v535
      %631 = vst.msk [vmem:[%s170 + $0x2e0] sm:$0x3] %vm540, %v535
      %632 = vst.msk [vmem:[%s170 + $0x2e8] sm:$0xff] %vm537, %v535
      %633 = vst.msk [vmem:[%s170 + $0x2f0] sm:$0xff] %vm537, %v535
      %634 = vst.msk [vmem:[%s170 + $0x2f8] sm:$0x3] %vm540, %v535
      %635 = vst.msk [vmem:[%s170 + $0x300] sm:$0xff] %vm537, %v535
      %636 = vst.msk [vmem:[%s170 + $0x308] sm:$0xff] %vm537, %v535
      %637 = vst.msk [vmem:[%s170 + $0x310] sm:$0x3] %vm540, %v535
      %638 = vst.msk [vmem:[%s170 + $0x318] sm:$0xff] %vm537, %v535
      %639 = vst.msk [vmem:[%s170 + $0x320] sm:$0xff] %vm537, %v535
      %640 = vst.msk [vmem:[%s170 + $0x328] sm:$0x3] %vm540, %v535
      %641 = vst.msk [vmem:[%s170 + $0x330] sm:$0xff] %vm537, %v535
      %642 = vst.msk [vmem:[%s170 + $0x338] sm:$0xff] %vm537, %v535
      %643 = vst.msk [vmem:[%s170 + $0x340] sm:$0x3] %vm540, %v535
      %644 = vst.msk [vmem:[%s170 + $0x348] sm:$0xff] %vm537, %v535
      %645 = vst.msk [vmem:[%s170 + $0x350] sm:$0xff] %vm537, %v535
      %646 = vst.msk [vmem:[%s170 + $0x358] sm:$0x3] %vm540, %v535
      %v647 = vld [vmem:[%s170] sm:$0xff]
      %v648 = vld [vmem:[%s170 + $0x8] sm:$0xff]
      %v649 = vld [vmem:[%s170 + $0x30] sm:$0xff]
      %v650 = vld [vmem:[%s170 + $0x38] sm:$0xff]
      %v651 = vld [vmem:[%s170 + $0x60] sm:$0xff]
      %v652 = vld [vmem:[%s170 + $0x68] sm:$0xff]
      %v653 = vld [vmem:[%s170 + $0x90] sm:$0xff]
      %v654 = vld [vmem:[%s170 + $0x98] sm:$0xff]
      %v655 = vld [vmem:[%s170 + $0xc0] sm:$0xff]
      %v656 = vld [vmem:[%s170 + $0xc8] sm:$0xff]
      %v657 = vld [vmem:[%s170 + $0xf0] sm:$0xff]
      %v658 = vld [vmem:[%s170 + $0xf8] sm:$0xff]
      %v659 = vld [vmem:[%s170 + $0x120] sm:$0xff]
      %v660 = vld [vmem:[%s170 + $0x128] sm:$0xff]
      %v661 = vld [vmem:[%s170 + $0x150] sm:$0xff]
      %v662 = vld [vmem:[%s170 + $0x158] sm:$0xff]
      %v663 = vld [vmem:[%s170 + $0x180] sm:$0xff]
      %v664 = vld [vmem:[%s170 + $0x188] sm:$0xff]
      %v665 = vld [vmem:[%s170 + $0x1b0] sm:$0xff]
      %v666 = vld [vmem:[%s170 + $0x1b8] sm:$0xff]
      %v667 = vld [vmem:[%s170 + $0x1e0] sm:$0xff]
      %v668 = vld [vmem:[%s170 + $0x1e8] sm:$0xff]
      %v669 = vld [vmem:[%s170 + $0x210] sm:$0xff]
      %v670 = vld [vmem:[%s170 + $0x218] sm:$0xff]
      %v671 = vld [vmem:[%s170 + $0x240] sm:$0xff]
      %v672 = vld [vmem:[%s170 + $0x248] sm:$0xff]
      %v673 = vld [vmem:[%s170 + $0x270] sm:$0xff]
      %v674 = vld [vmem:[%s170 + $0x278] sm:$0xff]
      %v675 = vld [vmem:[%s170 + $0x2a0] sm:$0xff]
      %v676 = vld [vmem:[%s170 + $0x2a8] sm:$0xff]
      %v677 = vld [vmem:[%s170 + $0x2d0] sm:$0xff]
      %v678 = vld [vmem:[%s170 + $0x2d8] sm:$0xff]
      %v679 = vadd.f32 %v647, %v372
      %v680 = vadd.f32 %v648, %v377
      %v681 = vadd.f32 %v649, %v382
      %v682 = vadd.f32 %v650, %v387
      %v683 = vadd.f32 %v651, %v392
      %v684 = vadd.f32 %v652, %v397
      %v685 = vadd.f32 %v653, %v402
      %v686 = vadd.f32 %v654, %v407
      %v687 = vadd.f32 %v655, %v412
      %v688 = vadd.f32 %v656, %v417
      %v689 = vadd.f32 %v657, %v422
      %v690 = vadd.f32 %v658, %v427
      %v691 = vadd.f32 %v659, %v432
      %v692 = vadd.f32 %v660, %v437
      %v693 = vadd.f32 %v661, %v442
      %v694 = vadd.f32 %v662, %v447
      %v695 = vadd.f32 %v663, %v452
      %v696 = vadd.f32 %v664, %v457
      %v697 = vadd.f32 %v665, %v462
      %v698 = vadd.f32 %v666, %v467
      %v699 = vadd.f32 %v667, %v472
      %v700 = vadd.f32 %v668, %v477
      %v701 = vadd.f32 %v669, %v482
      %v702 = vadd.f32 %v670, %v487
      %v703 = vadd.f32 %v671, %v492
      %v704 = vadd.f32 %v672, %v497
      %v705 = vadd.f32 %v673, %v502
      %v706 = vadd.f32 %v674, %v507
      %v707 = vadd.f32 %v675, %v512
      %v708 = vadd.f32 %v676, %v517
      %v709 = vadd.f32 %v677, %v522
      %v710 = vadd.f32 %v678, %v527
      %711 = vst.msk [vmem:[%s170] sm:$0xff] %vm537, %v679
      %712 = vst.msk [vmem:[%s170 + $0x8] sm:$0xff] %vm537, %v680
      %713 = vst.msk [vmem:[%s170 + $0x30] sm:$0xff] %vm537, %v681
      %714 = vst.msk [vmem:[%s170 + $0x38] sm:$0xff] %vm537, %v682
      %715 = vst.msk [vmem:[%s170 + $0x60] sm:$0xff] %vm537, %v683
      %716 = vst.msk [vmem:[%s170 + $0x68] sm:$0xff] %vm537, %v684
      %717 = vst.msk [vmem:[%s170 + $0x90] sm:$0xff] %vm537, %v685
      %718 = vst.msk [vmem:[%s170 + $0x98] sm:$0xff] %vm537, %v686
      %719 = vst.msk [vmem:[%s170 + $0xc0] sm:$0xff] %vm537, %v687
      %720 = vst.msk [vmem:[%s170 + $0xc8] sm:$0xff] %vm537, %v688
      %721 = vst.msk [vmem:[%s170 + $0xf0] sm:$0xff] %vm537, %v689
      %722 = vst.msk [vmem:[%s170 + $0xf8] sm:$0xff] %vm537, %v690
      %723 = vst.msk [vmem:[%s170 + $0x120] sm:$0xff] %vm537, %v691
      %724 = vst.msk [vmem:[%s170 + $0x128] sm:$0xff] %vm537, %v692
      %725 = vst.msk [vmem:[%s170 + $0x150] sm:$0xff] %vm537, %v693
      %726 = vst.msk [vmem:[%s170 + $0x158] sm:$0xff] %vm537, %v694
      %727 = vst.msk [vmem:[%s170 + $0x180] sm:$0xff] %vm537, %v695
      %728 = vst.msk [vmem:[%s170 + $0x188] sm:$0xff] %vm537, %v696
      %729 = vst.msk [vmem:[%s170 + $0x1b0] sm:$0xff] %vm537, %v697
      %730 = vst.msk [vmem:[%s170 + $0x1b8] sm:$0xff] %vm537, %v698
      %731 = vst.msk [vmem:[%s170 + $0x1e0] sm:$0xff] %vm537, %v699
      %732 = vst.msk [vmem:[%s170 + $0x1e8] sm:$0xff] %vm537, %v700
      %733 = vst.msk [vmem:[%s170 + $0x210] sm:$0xff] %vm537, %v701
      %734 = vst.msk [vmem:[%s170 + $0x218] sm:$0xff] %vm537, %v702
      %735 = vst.msk [vmem:[%s170 + $0x240] sm:$0xff] %vm537, %v703
      %736 = vst.msk [vmem:[%s170 + $0x248] sm:$0xff] %vm537, %v704
      %737 = vst.msk [vmem:[%s170 + $0x270] sm:$0xff] %vm537, %v705
      %738 = vst.msk [vmem:[%s170 + $0x278] sm:$0xff] %vm537, %v706
      %739 = vst.msk [vmem:[%s170 + $0x2a0] sm:$0xff] %vm537, %v707
      %740 = vst.msk [vmem:[%s170 + $0x2a8] sm:$0xff] %vm537, %v708
      %741 = vst.msk [vmem:[%s170 + $0x2d0] sm:$0xff] %vm537, %v709
      %742 = vst.msk [vmem:[%s170 + $0x2d8] sm:$0xff] %vm537, %v710
      %v743 = vld [vmem:[%s170 + $0x1] sm:$0xff]
      %v744 = vld [vmem:[%s170 + $0x9] sm:$0xff]
      %v745 = vld [vmem:[%s170 + $0x31] sm:$0xff]
      %v746 = vld [vmem:[%s170 + $0x39] sm:$0xff]
      %v747 = vld [vmem:[%s170 + $0x61] sm:$0xff]
      %v748 = vld [vmem:[%s170 + $0x69] sm:$0xff]
      %v749 = vld [vmem:[%s170 + $0x91] sm:$0xff]
      %v750 = vld [vmem:[%s170 + $0x99] sm:$0xff]
      %v751 = vld [vmem:[%s170 + $0xc1] sm:$0xff]
      %v752 = vld [vmem:[%s170 + $0xc9] sm:$0xff]
      %v753 = vld [vmem:[%s170 + $0xf1] sm:$0xff]
      %v754 = vld [vmem:[%s170 + $0xf9] sm:$0xff]
      %v755 = vld [vmem:[%s170 + $0x121] sm:$0xff]
      %v756 = vld [vmem:[%s170 + $0x129] sm:$0xff]
      %v757 = vld [vmem:[%s170 + $0x151] sm:$0xff]
      %v758 = vld [vmem:[%s170 + $0x159] sm:$0xff]
      %v759 = vld [vmem:[%s170 + $0x181] sm:$0xff]
      %v760 = vld [vmem:[%s170 + $0x189] sm:$0xff]
      %v761 = vld [vmem:[%s170 + $0x1b1] sm:$0xff]
      %v762 = vld [vmem:[%s170 + $0x1b9] sm:$0xff]
      %v763 = vld [vmem:[%s170 + $0x1e1] sm:$0xff]
      %v764 = vld [vmem:[%s170 + $0x1e9] sm:$0xff]
      %v765 = vld [vmem:[%s170 + $0x211] sm:$0xff]
      %v766 = vld [vmem:[%s170 + $0x219] sm:$0xff]
      %v767 = vld [vmem:[%s170 + $0x241] sm:$0xff]
      %v768 = vld [vmem:[%s170 + $0x249] sm:$0xff]
      %v769 = vld [vmem:[%s170 + $0x271] sm:$0xff]
      %v770 = vld [vmem:[%s170 + $0x279] sm:$0xff]
      %v771 = vld [vmem:[%s170 + $0x2a1] sm:$0xff]
      %v772 = vld [vmem:[%s170 + $0x2a9] sm:$0xff]
      %v773 = vld [vmem:[%s170 + $0x2d1] sm:$0xff]
      %v774 = vld [vmem:[%s170 + $0x2d9] sm:$0xff]
      %807 = vrot.lane.b32.xlu0 %v372, 120
      %v808 = vpop.permute.xlu0 %807
      %809 = vrot.lane.b32.xlu0 %v377, 120
      %v810 = vpop.permute.xlu0 %809
      %811 = vrot.lane.b32.xlu0 %v382, 120
      %v812 = vpop.permute.xlu0 %811
      %813 = vrot.lane.b32.xlu0 %v387, 120
      %v814 = vpop.permute.xlu0 %813
      %815 = vrot.lane.b32.xlu0 %v392, 120
      %v816 = vpop.permute.xlu0 %815
      %817 = vrot.lane.b32.xlu0 %v397, 120
      %v818 = vpop.permute.xlu0 %817
      %819 = vrot.lane.b32.xlu0 %v402, 120
      %v820 = vpop.permute.xlu0 %819
      %821 = vrot.lane.b32.xlu0 %v407, 120
      %v822 = vpop.permute.xlu0 %821
      %823 = vrot.lane.b32.xlu0 %v412, 120
      %v824 = vpop.permute.xlu0 %823
      %825 = vrot.lane.b32.xlu0 %v417, 120
      %v826 = vpop.permute.xlu0 %825
      %827 = vrot.lane.b32.xlu0 %v422, 120
      %v828 = vpop.permute.xlu0 %827
      %829 = vrot.lane.b32.xlu0 %v427, 120
      %v830 = vpop.permute.xlu0 %829
      %831 = vrot.lane.b32.xlu0 %v432, 120
      %v832 = vpop.permute.xlu0 %831
      %833 = vrot.lane.b32.xlu0 %v437, 120
      %v834 = vpop.permute.xlu0 %833
      %835 = vrot.lane.b32.xlu0 %v442, 120
      %v836 = vpop.permute.xlu0 %835
      %837 = vrot.lane.b32.xlu0 %v447, 120
      %v838 = vpop.permute.xlu0 %837
      %839 = vrot.lane.b32.xlu0 %v452, 120
      %v840 = vpop.permute.xlu0 %839
      %841 = vrot.lane.b32.xlu0 %v457, 120
      %v842 = vpop.permute.xlu0 %841
      %843 = vrot.lane.b32.xlu0 %v462, 120
      %v844 = vpop.permute.xlu0 %843
      %845 = vrot.lane.b32.xlu0 %v467, 120
      %v846 = vpop.permute.xlu0 %845
      %847 = vrot.lane.b32.xlu0 %v472, 120
      %v848 = vpop.permute.xlu0 %847
      %849 = vrot.lane.b32.xlu0 %v477, 120
      %v850 = vpop.permute.xlu0 %849
      %851 = vrot.lane.b32.xlu0 %v482, 120
      %v852 = vpop.permute.xlu0 %851
      %853 = vrot.lane.b32.xlu0 %v487, 120
      %v854 = vpop.permute.xlu0 %853
      %855 = vrot.lane.b32.xlu0 %v492, 120
      %v856 = vpop.permute.xlu0 %855
      %857 = vrot.lane.b32.xlu0 %v497, 120
      %v858 = vpop.permute.xlu0 %857
      %859 = vrot.lane.b32.xlu0 %v502, 120
      %v860 = vpop.permute.xlu0 %859
      %861 = vrot.lane.b32.xlu0 %v507, 120
      %v862 = vpop.permute.xlu0 %861
      %863 = vrot.lane.b32.xlu0 %v512, 120
      %v864 = vpop.permute.xlu0 %863
      %865 = vrot.lane.b32.xlu0 %v517, 120
      %v866 = vpop.permute.xlu0 %865
      %867 = vrot.lane.b32.xlu0 %v522, 120
      %v868 = vpop.permute.xlu0 %867
      %869 = vrot.lane.b32.xlu0 %v527, 120
      %v870 = vpop.permute.xlu0 %869
      %v903 = vadd.f32 %v743, %v808
      %v904 = vadd.f32 %v744, %v810
      %v905 = vadd.f32 %v745, %v812
      %v906 = vadd.f32 %v746, %v814
      %v907 = vadd.f32 %v747, %v816
      %v908 = vadd.f32 %v748, %v818
      %v909 = vadd.f32 %v749, %v820
      %v910 = vadd.f32 %v750, %v822
      %v911 = vadd.f32 %v751, %v824
      %v912 = vadd.f32 %v752, %v826
      %v913 = vadd.f32 %v753, %v828
      %v914 = vadd.f32 %v754, %v830
      %v915 = vadd.f32 %v755, %v832
      %v916 = vadd.f32 %v756, %v834
      %v917 = vadd.f32 %v757, %v836
      %v918 = vadd.f32 %v758, %v838
      %v919 = vadd.f32 %v759, %v840
      %v920 = vadd.f32 %v760, %v842
      %v921 = vadd.f32 %v761, %v844
      %v922 = vadd.f32 %v762, %v846
      %v923 = vadd.f32 %v763, %v848
      %v924 = vadd.f32 %v764, %v850
      %v925 = vadd.f32 %v765, %v852
      %v926 = vadd.f32 %v766, %v854
      %v927 = vadd.f32 %v767, %v856
      %v928 = vadd.f32 %v768, %v858
      %v929 = vadd.f32 %v769, %v860
      %v930 = vadd.f32 %v770, %v862
      %v931 = vadd.f32 %v771, %v864
      %v932 = vadd.f32 %v772, %v866
      %v933 = vadd.f32 %v773, %v868
      %v934 = vadd.f32 %v774, %v870
      %935 = vst.msk [vmem:[%s170 + $0x1] sm:$0xff] %vm537, %v903
      %936 = vst.msk [vmem:[%s170 + $0x9] sm:$0xff] %vm537, %v904
      %937 = vst.msk [vmem:[%s170 + $0x31] sm:$0xff] %vm537, %v905
      %938 = vst.msk [vmem:[%s170 + $0x39] sm:$0xff] %vm537, %v906
      %939 = vst.msk [vmem:[%s170 + $0x61] sm:$0xff] %vm537, %v907
      %940 = vst.msk [vmem:[%s170 + $0x69] sm:$0xff] %vm537, %v908
      %941 = vst.msk [vmem:[%s170 + $0x91] sm:$0xff] %vm537, %v909
      %942 = vst.msk [vmem:[%s170 + $0x99] sm:$0xff] %vm537, %v910
      %943 = vst.msk [vmem:[%s170 + $0xc1] sm:$0xff] %vm537, %v911
      %944 = vst.msk [vmem:[%s170 + $0xc9] sm:$0xff] %vm537, %v912
      %945 = vst.msk [vmem:[%s170 + $0xf1] sm:$0xff] %vm537, %v913
      %946 = vst.msk [vmem:[%s170 + $0xf9] sm:$0xff] %vm537, %v914
      %947 = vst.msk [vmem:[%s170 + $0x121] sm:$0xff] %vm537, %v915
      %948 = vst.msk [vmem:[%s170 + $0x129] sm:$0xff] %vm537, %v916
      %949 = vst.msk [vmem:[%s170 + $0x151] sm:$0xff] %vm537, %v917
      %950 = vst.msk [vmem:[%s170 + $0x159] sm:$0xff] %vm537, %v918
      %951 = vst.msk [vmem:[%s170 + $0x181] sm:$0xff] %vm537, %v919
      %952 = vst.msk [vmem:[%s170 + $0x189] sm:$0xff] %vm537, %v920
      %953 = vst.msk [vmem:[%s170 + $0x1b1] sm:$0xff] %vm537, %v921
      %954 = vst.msk [vmem:[%s170 + $0x1b9] sm:$0xff] %vm537, %v922
      %955 = vst.msk [vmem:[%s170 + $0x1e1] sm:$0xff] %vm537, %v923
      %956 = vst.msk [vmem:[%s170 + $0x1e9] sm:$0xff] %vm537, %v924
      %957 = vst.msk [vmem:[%s170 + $0x211] sm:$0xff] %vm537, %v925
      %958 = vst.msk [vmem:[%s170 + $0x219] sm:$0xff] %vm537, %v926
      %959 = vst.msk [vmem:[%s170 + $0x241] sm:$0xff] %vm537, %v927
      %960 = vst.msk [vmem:[%s170 + $0x249] sm:$0xff] %vm537, %v928
      %961 = vst.msk [vmem:[%s170 + $0x271] sm:$0xff] %vm537, %v929
      %962 = vst.msk [vmem:[%s170 + $0x279] sm:$0xff] %vm537, %v930
      %963 = vst.msk [vmem:[%s170 + $0x2a1] sm:$0xff] %vm537, %v931
      %964 = vst.msk [vmem:[%s170 + $0x2a9] sm:$0xff] %vm537, %v932
      %965 = vst.msk [vmem:[%s170 + $0x2d1] sm:$0xff] %vm537, %v933
      %966 = vst.msk [vmem:[%s170 + $0x2d9] sm:$0xff] %vm537, %v934
      %v967 = vld [vmem:[%s170 + $0x2] sm:$0xff]
      %v968 = vld [vmem:[%s170 + $0xa] sm:$0xff]
      %v969 = vld [vmem:[%s170 + $0x32] sm:$0xff]
      %v970 = vld [vmem:[%s170 + $0x3a] sm:$0xff]
      %v971 = vld [vmem:[%s170 + $0x62] sm:$0xff]
      %v972 = vld [vmem:[%s170 + $0x6a] sm:$0xff]
      %v973 = vld [vmem:[%s170 + $0x92] sm:$0xff]
      %v974 = vld [vmem:[%s170 + $0x9a] sm:$0xff]
      %v975 = vld [vmem:[%s170 + $0xc2] sm:$0xff]
      %v976 = vld [vmem:[%s170 + $0xca] sm:$0xff]
      %v977 = vld [vmem:[%s170 + $0xf2] sm:$0xff]
      %v978 = vld [vmem:[%s170 + $0xfa] sm:$0xff]
      %v979 = vld [vmem:[%s170 + $0x122] sm:$0xff]
      %v980 = vld [vmem:[%s170 + $0x12a] sm:$0xff]
      %v981 = vld [vmem:[%s170 + $0x152] sm:$0xff]
      %v982 = vld [vmem:[%s170 + $0x15a] sm:$0xff]
      %v983 = vld [vmem:[%s170 + $0x182] sm:$0xff]
      %v984 = vld [vmem:[%s170 + $0x18a] sm:$0xff]
      %v985 = vld [vmem:[%s170 + $0x1b2] sm:$0xff]
      %v986 = vld [vmem:[%s170 + $0x1ba] sm:$0xff]
      %v987 = vld [vmem:[%s170 + $0x1e2] sm:$0xff]
      %v988 = vld [vmem:[%s170 + $0x1ea] sm:$0xff]
      %v989 = vld [vmem:[%s170 + $0x212] sm:$0xff]
      %v990 = vld [vmem:[%s170 + $0x21a] sm:$0xff]
      %v991 = vld [vmem:[%s170 + $0x242] sm:$0xff]
      %v992 = vld [vmem:[%s170 + $0x24a] sm:$0xff]
      %v993 = vld [vmem:[%s170 + $0x272] sm:$0xff]
      %v994 = vld [vmem:[%s170 + $0x27a] sm:$0xff]
      %v995 = vld [vmem:[%s170 + $0x2a2] sm:$0xff]
      %v996 = vld [vmem:[%s170 + $0x2aa] sm:$0xff]
      %v997 = vld [vmem:[%s170 + $0x2d2] sm:$0xff]
      %v998 = vld [vmem:[%s170 + $0x2da] sm:$0xff]
      %999 = vrot.lane.b32.xlu0 %v372, 112
      %v1000 = vpop.permute.xlu0 %999
      %1001 = vrot.lane.b32.xlu0 %v377, 112
      %v1002 = vpop.permute.xlu0 %1001
      %1003 = vrot.lane.b32.xlu0 %v382, 112
      %v1004 = vpop.permute.xlu0 %1003
      %1005 = vrot.lane.b32.xlu0 %v387, 112
      %v1006 = vpop.permute.xlu0 %1005
      %1007 = vrot.lane.b32.xlu0 %v392, 112
      %v1008 = vpop.permute.xlu0 %1007
      %1009 = vrot.lane.b32.xlu0 %v397, 112
      %v1010 = vpop.permute.xlu0 %1009
      %1011 = vrot.lane.b32.xlu0 %v402, 112
      %v1012 = vpop.permute.xlu0 %1011
      %1013 = vrot.lane.b32.xlu0 %v407, 112
      %v1014 = vpop.permute.xlu0 %1013
      %1015 = vrot.lane.b32.xlu0 %v412, 112
      %v1016 = vpop.permute.xlu0 %1015
      %1017 = vrot.lane.b32.xlu0 %v417, 112
      %v1018 = vpop.permute.xlu0 %1017
      %1019 = vrot.lane.b32.xlu0 %v422, 112
      %v1020 = vpop.permute.xlu0 %1019
      %1021 = vrot.lane.b32.xlu0 %v427, 112
      %v1022 = vpop.permute.xlu0 %1021
      %1023 = vrot.lane.b32.xlu0 %v432, 112
      %v1024 = vpop.permute.xlu0 %1023
      %1025 = vrot.lane.b32.xlu0 %v437, 112
      %v1026 = vpop.permute.xlu0 %1025
      %1027 = vrot.lane.b32.xlu0 %v442, 112
      %v1028 = vpop.permute.xlu0 %1027
      %1029 = vrot.lane.b32.xlu0 %v447, 112
      %v1030 = vpop.permute.xlu0 %1029
      %1031 = vrot.lane.b32.xlu0 %v452, 112
      %v1032 = vpop.permute.xlu0 %1031
      %1033 = vrot.lane.b32.xlu0 %v457, 112
      %v1034 = vpop.permute.xlu0 %1033
      %1035 = vrot.lane.b32.xlu0 %v462, 112
      %v1036 = vpop.permute.xlu0 %1035
      %1037 = vrot.lane.b32.xlu0 %v467, 112
      %v1038 = vpop.permute.xlu0 %1037
      %1039 = vrot.lane.b32.xlu0 %v472, 112
      %v1040 = vpop.permute.xlu0 %1039
      %1041 = vrot.lane.b32.xlu0 %v477, 112
      %v1042 = vpop.permute.xlu0 %1041
      %1043 = vrot.lane.b32.xlu0 %v482, 112
      %v1044 = vpop.permute.xlu0 %1043
      %1045 = vrot.lane.b32.xlu0 %v487, 112
      %v1046 = vpop.permute.xlu0 %1045
      %1047 = vrot.lane.b32.xlu0 %v492, 112
      %v1048 = vpop.permute.xlu0 %1047
      %1049 = vrot.lane.b32.xlu0 %v497, 112
      %v1050 = vpop.permute.xlu0 %1049
      %1051 = vrot.lane.b32.xlu0 %v502, 112
      %v1052 = vpop.permute.xlu0 %1051
      %1053 = vrot.lane.b32.xlu0 %v507, 112
      %v1054 = vpop.permute.xlu0 %1053
      %1055 = vrot.lane.b32.xlu0 %v512, 112
      %v1056 = vpop.permute.xlu0 %1055
      %1057 = vrot.lane.b32.xlu0 %v517, 112
      %v1058 = vpop.permute.xlu0 %1057
      %1059 = vrot.lane.b32.xlu0 %v522, 112
      %v1060 = vpop.permute.xlu0 %1059
      %1061 = vrot.lane.b32.xlu0 %v527, 112
      %v1062 = vpop.permute.xlu0 %1061
      %v1095 = vadd.f32 %v967, %v1000
      %v1096 = vadd.f32 %v968, %v1002
      %v1097 = vadd.f32 %v969, %v1004
      %v1098 = vadd.f32 %v970, %v1006
      %v1099 = vadd.f32 %v971, %v1008
      %v1100 = vadd.f32 %v972, %v1010
      %v1101 = vadd.f32 %v973, %v1012
      %v1102 = vadd.f32 %v974, %v1014
      %v1103 = vadd.f32 %v975, %v1016
      %v1104 = vadd.f32 %v976, %v1018
      %v1105 = vadd.f32 %v977, %v1020
      %v1106 = vadd.f32 %v978, %v1022
      %v1107 = vadd.f32 %v979, %v1024
      %v1108 = vadd.f32 %v980, %v1026
      %v1109 = vadd.f32 %v981, %v1028
      %v1110 = vadd.f32 %v982, %v1030
      %v1111 = vadd.f32 %v983, %v1032
      %v1112 = vadd.f32 %v984, %v1034
      %v1113 = vadd.f32 %v985, %v1036
      %v1114 = vadd.f32 %v986, %v1038
      %v1115 = vadd.f32 %v987, %v1040
      %v1116 = vadd.f32 %v988, %v1042
      %v1117 = vadd.f32 %v989, %v1044
      %v1118 = vadd.f32 %v990, %v1046
      %v1119 = vadd.f32 %v991, %v1048
      %v1120 = vadd.f32 %v992, %v1050
      %v1121 = vadd.f32 %v993, %v1052
      %v1122 = vadd.f32 %v994, %v1054
      %v1123 = vadd.f32 %v995, %v1056
      %v1124 = vadd.f32 %v996, %v1058
      %v1125 = vadd.f32 %v997, %v1060
      %v1126 = vadd.f32 %v998, %v1062
      %1127 = vst.msk [vmem:[%s170 + $0x2] sm:$0xff] %vm204, %v1095
      %1128 = vst.msk [vmem:[%s170 + $0xa] sm:$0xff] %vm204, %v1096
      %1129 = vst.msk [vmem:[%s170 + $0x32] sm:$0xff] %vm204, %v1097
      %1130 = vst.msk [vmem:[%s170 + $0x3a] sm:$0xff] %vm204, %v1098
      %1131 = vst.msk [vmem:[%s170 + $0x62] sm:$0xff] %vm204, %v1099
      %1132 = vst.msk [vmem:[%s170 + $0x6a] sm:$0xff] %vm204, %v1100
      %1133 = vst.msk [vmem:[%s170 + $0x92] sm:$0xff] %vm204, %v1101
      %1134 = vst.msk [vmem:[%s170 + $0x9a] sm:$0xff] %vm204, %v1102
      %1135 = vst.msk [vmem:[%s170 + $0xc2] sm:$0xff] %vm204, %v1103
      %1136 = vst.msk [vmem:[%s170 + $0xca] sm:$0xff] %vm204, %v1104
      %1137 = vst.msk [vmem:[%s170 + $0xf2] sm:$0xff] %vm204, %v1105
      %1138 = vst.msk [vmem:[%s170 + $0xfa] sm:$0xff] %vm204, %v1106
      %1139 = vst.msk [vmem:[%s170 + $0x122] sm:$0xff] %vm204, %v1107
      %1140 = vst.msk [vmem:[%s170 + $0x12a] sm:$0xff] %vm204, %v1108
      %1141 = vst.msk [vmem:[%s170 + $0x152] sm:$0xff] %vm204, %v1109
      %1142 = vst.msk [vmem:[%s170 + $0x15a] sm:$0xff] %vm204, %v1110
      %1143 = vst.msk [vmem:[%s170 + $0x182] sm:$0xff] %vm204, %v1111
      %1144 = vst.msk [vmem:[%s170 + $0x18a] sm:$0xff] %vm204, %v1112
      %1145 = vst.msk [vmem:[%s170 + $0x1b2] sm:$0xff] %vm204, %v1113
      %1146 = vst.msk [vmem:[%s170 + $0x1ba] sm:$0xff] %vm204, %v1114
      %1147 = vst.msk [vmem:[%s170 + $0x1e2] sm:$0xff] %vm204, %v1115
      %1148 = vst.msk [vmem:[%s170 + $0x1ea] sm:$0xff] %vm204, %v1116
      %1149 = vst.msk [vmem:[%s170 + $0x212] sm:$0xff] %vm204, %v1117
      %1150 = vst.msk [vmem:[%s170 + $0x21a] sm:$0xff] %vm204, %v1118
      %1151 = vst.msk [vmem:[%s170 + $0x242] sm:$0xff] %vm204, %v1119
      %1152 = vst.msk [vmem:[%s170 + $0x24a] sm:$0xff] %vm204, %v1120
      %1153 = vst.msk [vmem:[%s170 + $0x272] sm:$0xff] %vm204, %v1121
      %1154 = vst.msk [vmem:[%s170 + $0x27a] sm:$0xff] %vm204, %v1122
      %1155 = vst.msk [vmem:[%s170 + $0x2a2] sm:$0xff] %vm204, %v1123
      %1156 = vst.msk [vmem:[%s170 + $0x2aa] sm:$0xff] %vm204, %v1124
      %1157 = vst.msk [vmem:[%s170 + $0x2d2] sm:$0xff] %vm204, %v1125
      %1158 = vst.msk [vmem:[%s170 + $0x2da] sm:$0xff] %vm204, %v1126
      %s1159 = scalar_lea.vmem %s170, 24
      %v1160 = vld [vmem:[%s1159] sm:$0xff]
      %v1161 = vld [vmem:[%s1159 + $0x8] sm:$0xff]
      %v1162 = vld [vmem:[%s1159 + $0x30] sm:$0xff]
      %v1163 = vld [vmem:[%s1159 + $0x38] sm:$0xff]
      %v1164 = vld [vmem:[%s1159 + $0x60] sm:$0xff]
      %v1165 = vld [vmem:[%s1159 + $0x68] sm:$0xff]
      %v1166 = vld [vmem:[%s1159 + $0x90] sm:$0xff]
      %v1167 = vld [vmem:[%s1159 + $0x98] sm:$0xff]
      %v1168 = vld [vmem:[%s1159 + $0xc0] sm:$0xff]
      %v1169 = vld [vmem:[%s1159 + $0xc8] sm:$0xff]
      %v1170 = vld [vmem:[%s1159 + $0xf0] sm:$0xff]
      %v1171 = vld [vmem:[%s1159 + $0xf8] sm:$0xff]
      %v1172 = vld [vmem:[%s1159 + $0x120] sm:$0xff]
      %v1173 = vld [vmem:[%s1159 + $0x128] sm:$0xff]
      %v1174 = vld [vmem:[%s1159 + $0x150] sm:$0xff]
      %v1175 = vld [vmem:[%s1159 + $0x158] sm:$0xff]
      %v1176 = vld [vmem:[%s1159 + $0x180] sm:$0xff]
      %v1177 = vld [vmem:[%s1159 + $0x188] sm:$0xff]
      %v1178 = vld [vmem:[%s1159 + $0x1b0] sm:$0xff]
      %v1179 = vld [vmem:[%s1159 + $0x1b8] sm:$0xff]
      %v1180 = vld [vmem:[%s1159 + $0x1e0] sm:$0xff]
      %v1181 = vld [vmem:[%s1159 + $0x1e8] sm:$0xff]
      %v1182 = vld [vmem:[%s1159 + $0x210] sm:$0xff]
      %v1183 = vld [vmem:[%s1159 + $0x218] sm:$0xff]
      %v1184 = vld [vmem:[%s1159 + $0x240] sm:$0xff]
      %v1185 = vld [vmem:[%s1159 + $0x248] sm:$0xff]
      %v1186 = vld [vmem:[%s1159 + $0x270] sm:$0xff]
      %v1187 = vld [vmem:[%s1159 + $0x278] sm:$0xff]
      %v1188 = vld [vmem:[%s1159 + $0x2a0] sm:$0xff]
      %v1189 = vld [vmem:[%s1159 + $0x2a8] sm:$0xff]
      %v1190 = vld [vmem:[%s1159 + $0x2d0] sm:$0xff]
      %v1191 = vld [vmem:[%s1159 + $0x2d8] sm:$0xff]
      %1192 = vrot.lane.b32.xlu0 %v372, 108
      %v1193 = vpop.permute.xlu0 %1192
      %1194 = vrot.lane.b32.xlu0 %v377, 108
      %v1195 = vpop.permute.xlu0 %1194
      %1196 = vrot.lane.b32.xlu0 %v382, 108
      %v1197 = vpop.permute.xlu0 %1196
      %1198 = vrot.lane.b32.xlu0 %v387, 108
      %v1199 = vpop.permute.xlu0 %1198
      %1200 = vrot.lane.b32.xlu0 %v392, 108
      %v1201 = vpop.permute.xlu0 %1200
      %1202 = vrot.lane.b32.xlu0 %v397, 108
      %v1203 = vpop.permute.xlu0 %1202
      %1204 = vrot.lane.b32.xlu0 %v402, 108
      %v1205 = vpop.permute.xlu0 %1204
      %1206 = vrot.lane.b32.xlu0 %v407, 108
      %v1207 = vpop.permute.xlu0 %1206
      %1208 = vrot.lane.b32.xlu0 %v412, 108
      %v1209 = vpop.permute.xlu0 %1208
      %1210 = vrot.lane.b32.xlu0 %v417, 108
      %v1211 = vpop.permute.xlu0 %1210
      %1212 = vrot.lane.b32.xlu0 %v422, 108
      %v1213 = vpop.permute.xlu0 %1212
      %1214 = vrot.lane.b32.xlu0 %v427, 108
      %v1215 = vpop.permute.xlu0 %1214
      %1216 = vrot.lane.b32.xlu0 %v432, 108
      %v1217 = vpop.permute.xlu0 %1216
      %1218 = vrot.lane.b32.xlu0 %v437, 108
      %v1219 = vpop.permute.xlu0 %1218
      %1220 = vrot.lane.b32.xlu0 %v442, 108
      %v1221 = vpop.permute.xlu0 %1220
      %1222 = vrot.lane.b32.xlu0 %v447, 108
      %v1223 = vpop.permute.xlu0 %1222
      %1224 = vrot.lane.b32.xlu0 %v452, 108
      %v1225 = vpop.permute.xlu0 %1224
      %1226 = vrot.lane.b32.xlu0 %v457, 108
      %v1227 = vpop.permute.xlu0 %1226
      %1228 = vrot.lane.b32.xlu0 %v462, 108
      %v1229 = vpop.permute.xlu0 %1228
      %1230 = vrot.lane.b32.xlu0 %v467, 108
      %v1231 = vpop.permute.xlu0 %1230
      %1232 = vrot.lane.b32.xlu0 %v472, 108
      %v1233 = vpop.permute.xlu0 %1232
      %1234 = vrot.lane.b32.xlu0 %v477, 108
      %v1235 = vpop.permute.xlu0 %1234
      %1236 = vrot.lane.b32.xlu0 %v482, 108
      %v1237 = vpop.permute.xlu0 %1236
      %1238 = vrot.lane.b32.xlu0 %v487, 108
      %v1239 = vpop.permute.xlu0 %1238
      %1240 = vrot.lane.b32.xlu0 %v492, 108
      %v1241 = vpop.permute.xlu0 %1240
      %1242 = vrot.lane.b32.xlu0 %v497, 108
      %v1243 = vpop.permute.xlu0 %1242
      %1244 = vrot.lane.b32.xlu0 %v502, 108
      %v1245 = vpop.permute.xlu0 %1244
      %1246 = vrot.lane.b32.xlu0 %v507, 108
      %v1247 = vpop.permute.xlu0 %1246
      %1248 = vrot.lane.b32.xlu0 %v512, 108
      %v1249 = vpop.permute.xlu0 %1248
      %1250 = vrot.lane.b32.xlu0 %v517, 108
      %v1251 = vpop.permute.xlu0 %1250
      %1252 = vrot.lane.b32.xlu0 %v522, 108
      %v1253 = vpop.permute.xlu0 %1252
      %1254 = vrot.lane.b32.xlu0 %v527, 108
      %v1255 = vpop.permute.xlu0 %1254
      %v1288 = vadd.f32 %v1160, %v1193
      %v1289 = vadd.f32 %v1161, %v1195
      %v1290 = vadd.f32 %v1162, %v1197
      %v1291 = vadd.f32 %v1163, %v1199
      %v1292 = vadd.f32 %v1164, %v1201
      %v1293 = vadd.f32 %v1165, %v1203
      %v1294 = vadd.f32 %v1166, %v1205
      %v1295 = vadd.f32 %v1167, %v1207
      %v1296 = vadd.f32 %v1168, %v1209
      %v1297 = vadd.f32 %v1169, %v1211
      %v1298 = vadd.f32 %v1170, %v1213
      %v1299 = vadd.f32 %v1171, %v1215
      %v1300 = vadd.f32 %v1172, %v1217
      %v1301 = vadd.f32 %v1173, %v1219
      %v1302 = vadd.f32 %v1174, %v1221
      %v1303 = vadd.f32 %v1175, %v1223
      %v1304 = vadd.f32 %v1176, %v1225
      %v1305 = vadd.f32 %v1177, %v1227
      %v1306 = vadd.f32 %v1178, %v1229
      %v1307 = vadd.f32 %v1179, %v1231
      %v1308 = vadd.f32 %v1180, %v1233
      %v1309 = vadd.f32 %v1181, %v1235
      %v1310 = vadd.f32 %v1182, %v1237
      %v1311 = vadd.f32 %v1183, %v1239
      %v1312 = vadd.f32 %v1184, %v1241
      %v1313 = vadd.f32 %v1185, %v1243
      %v1314 = vadd.f32 %v1186, %v1245
      %v1315 = vadd.f32 %v1187, %v1247
      %v1316 = vadd.f32 %v1188, %v1249
      %v1317 = vadd.f32 %v1189, %v1251
      %v1318 = vadd.f32 %v1190, %v1253
      %v1319 = vadd.f32 %v1191, %v1255
      %1320 = vst.msk [vmem:[%s1159] sm:$0xff] %vm537, %v1288
      %1321 = vst.msk [vmem:[%s1159 + $0x8] sm:$0xff] %vm537, %v1289
      %1322 = vst.msk [vmem:[%s1159 + $0x30] sm:$0xff] %vm537, %v1290
      %1323 = vst.msk [vmem:[%s1159 + $0x38] sm:$0xff] %vm537, %v1291
      %1324 = vst.msk [vmem:[%s1159 + $0x60] sm:$0xff] %vm537, %v1292
      %1325 = vst.msk [vmem:[%s1159 + $0x68] sm:$0xff] %vm537, %v1293
      %1326 = vst.msk [vmem:[%s1159 + $0x90] sm:$0xff] %vm537, %v1294
      %1327 = vst.msk [vmem:[%s1159 + $0x98] sm:$0xff] %vm537, %v1295
      %1328 = vst.msk [vmem:[%s1159 + $0xc0] sm:$0xff] %vm537, %v1296
      %1329 = vst.msk [vmem:[%s1159 + $0xc8] sm:$0xff] %vm537, %v1297
      %1330 = vst.msk [vmem:[%s1159 + $0xf0] sm:$0xff] %vm537, %v1298
      %1331 = vst.msk [vmem:[%s1159 + $0xf8] sm:$0xff] %vm537, %v1299
      %1332 = vst.msk [vmem:[%s1159 + $0x120] sm:$0xff] %vm537, %v1300
      %1333 = vst.msk [vmem:[%s1159 + $0x128] sm:$0xff] %vm537, %v1301
      %1334 = vst.msk [vmem:[%s1159 + $0x150] sm:$0xff] %vm537, %v1302
      %1335 = vst.msk [vmem:[%s1159 + $0x158] sm:$0xff] %vm537, %v1303
      %1336 = vst.msk [vmem:[%s1159 + $0x180] sm:$0xff] %vm537, %v1304
      %1337 = vst.msk [vmem:[%s1159 + $0x188] sm:$0xff] %vm537, %v1305
      %1338 = vst.msk [vmem:[%s1159 + $0x1b0] sm:$0xff] %vm537, %v1306
      %1339 = vst.msk [vmem:[%s1159 + $0x1b8] sm:$0xff] %vm537, %v1307
      %1340 = vst.msk [vmem:[%s1159 + $0x1e0] sm:$0xff] %vm537, %v1308
      %1341 = vst.msk [vmem:[%s1159 + $0x1e8] sm:$0xff] %vm537, %v1309
      %1342 = vst.msk [vmem:[%s1159 + $0x210] sm:$0xff] %vm537, %v1310
      %1343 = vst.msk [vmem:[%s1159 + $0x218] sm:$0xff] %vm537, %v1311
      %1344 = vst.msk [vmem:[%s1159 + $0x240] sm:$0xff] %vm537, %v1312
      %1345 = vst.msk [vmem:[%s1159 + $0x248] sm:$0xff] %vm537, %v1313
      %1346 = vst.msk [vmem:[%s1159 + $0x270] sm:$0xff] %vm537, %v1314
      %1347 = vst.msk [vmem:[%s1159 + $0x278] sm:$0xff] %vm537, %v1315
      %1348 = vst.msk [vmem:[%s1159 + $0x2a0] sm:$0xff] %vm537, %v1316
      %1349 = vst.msk [vmem:[%s1159 + $0x2a8] sm:$0xff] %vm537, %v1317
      %1350 = vst.msk [vmem:[%s1159 + $0x2d0] sm:$0xff] %vm537, %v1318
      %1351 = vst.msk [vmem:[%s1159 + $0x2d8] sm:$0xff] %vm537, %v1319
      %v1352 = vld [vmem:[%s1159 + $0x1] sm:$0xff]
      %v1353 = vld [vmem:[%s1159 + $0x9] sm:$0xff]
      %v1354 = vld [vmem:[%s1159 + $0x31] sm:$0xff]
      %v1355 = vld [vmem:[%s1159 + $0x39] sm:$0xff]
      %v1356 = vld [vmem:[%s1159 + $0x61] sm:$0xff]
      %v1357 = vld [vmem:[%s1159 + $0x69] sm:$0xff]
      %v1358 = vld [vmem:[%s1159 + $0x91] sm:$0xff]
      %v1359 = vld [vmem:[%s1159 + $0x99] sm:$0xff]
      %v1360 = vld [vmem:[%s1159 + $0xc1] sm:$0xff]
      %v1361 = vld [vmem:[%s1159 + $0xc9] sm:$0xff]
      %v1362 = vld [vmem:[%s1159 + $0xf1] sm:$0xff]
      %v1363 = vld [vmem:[%s1159 + $0xf9] sm:$0xff]
      %v1364 = vld [vmem:[%s1159 + $0x121] sm:$0xff]
      %v1365 = vld [vmem:[%s1159 + $0x129] sm:$0xff]
      %v1366 = vld [vmem:[%s1159 + $0x151] sm:$0xff]
      %v1367 = vld [vmem:[%s1159 + $0x159] sm:$0xff]
      %v1368 = vld [vmem:[%s1159 + $0x181] sm:$0xff]
      %v1369 = vld [vmem:[%s1159 + $0x189] sm:$0xff]
      %v1370 = vld [vmem:[%s1159 + $0x1b1] sm:$0xff]
      %v1371 = vld [vmem:[%s1159 + $0x1b9] sm:$0xff]
      %v1372 = vld [vmem:[%s1159 + $0x1e1] sm:$0xff]
      %v1373 = vld [vmem:[%s1159 + $0x1e9] sm:$0xff]
      %v1374 = vld [vmem:[%s1159 + $0x211] sm:$0xff]
      %v1375 = vld [vmem:[%s1159 + $0x219] sm:$0xff]
      %v1376 = vld [vmem:[%s1159 + $0x241] sm:$0xff]
      %v1377 = vld [vmem:[%s1159 + $0x249] sm:$0xff]
      %v1378 = vld [vmem:[%s1159 + $0x271] sm:$0xff]
      %v1379 = vld [vmem:[%s1159 + $0x279] sm:$0xff]
      %v1380 = vld [vmem:[%s1159 + $0x2a1] sm:$0xff]
      %v1381 = vld [vmem:[%s1159 + $0x2a9] sm:$0xff]
      %v1382 = vld [vmem:[%s1159 + $0x2d1] sm:$0xff]
      %v1383 = vld [vmem:[%s1159 + $0x2d9] sm:$0xff]
      %1384 = vrot.lane.b32.xlu0 %v372, 100
      %v1385 = vpop.permute.xlu0 %1384
      %1386 = vrot.lane.b32.xlu0 %v377, 100
      %v1387 = vpop.permute.xlu0 %1386
      %1388 = vrot.lane.b32.xlu0 %v382, 100
      %v1389 = vpop.permute.xlu0 %1388
      %1390 = vrot.lane.b32.xlu0 %v387, 100
      %v1391 = vpop.permute.xlu0 %1390
      %1392 = vrot.lane.b32.xlu0 %v392, 100
      %v1393 = vpop.permute.xlu0 %1392
      %1394 = vrot.lane.b32.xlu0 %v397, 100
      %v1395 = vpop.permute.xlu0 %1394
      %1396 = vrot.lane.b32.xlu0 %v402, 100
      %v1397 = vpop.permute.xlu0 %1396
      %1398 = vrot.lane.b32.xlu0 %v407, 100
      %v1399 = vpop.permute.xlu0 %1398
      %1400 = vrot.lane.b32.xlu0 %v412, 100
      %v1401 = vpop.permute.xlu0 %1400
      %1402 = vrot.lane.b32.xlu0 %v417, 100
      %v1403 = vpop.permute.xlu0 %1402
      %1404 = vrot.lane.b32.xlu0 %v422, 100
      %v1405 = vpop.permute.xlu0 %1404
      %1406 = vrot.lane.b32.xlu0 %v427, 100
      %v1407 = vpop.permute.xlu0 %1406
      %1408 = vrot.lane.b32.xlu0 %v432, 100
      %v1409 = vpop.permute.xlu0 %1408
      %1410 = vrot.lane.b32.xlu0 %v437, 100
      %v1411 = vpop.permute.xlu0 %1410
      %1412 = vrot.lane.b32.xlu0 %v442, 100
      %v1413 = vpop.permute.xlu0 %1412
      %1414 = vrot.lane.b32.xlu0 %v447, 100
      %v1415 = vpop.permute.xlu0 %1414
      %1416 = vrot.lane.b32.xlu0 %v452, 100
      %v1417 = vpop.permute.xlu0 %1416
      %1418 = vrot.lane.b32.xlu0 %v457, 100
      %v1419 = vpop.permute.xlu0 %1418
      %1420 = vrot.lane.b32.xlu0 %v462, 100
      %v1421 = vpop.permute.xlu0 %1420
      %1422 = vrot.lane.b32.xlu0 %v467, 100
      %v1423 = vpop.permute.xlu0 %1422
      %1424 = vrot.lane.b32.xlu0 %v472, 100
      %v1425 = vpop.permute.xlu0 %1424
      %1426 = vrot.lane.b32.xlu0 %v477, 100
      %v1427 = vpop.permute.xlu0 %1426
      %1428 = vrot.lane.b32.xlu0 %v482, 100
      %v1429 = vpop.permute.xlu0 %1428
      %1430 = vrot.lane.b32.xlu0 %v487, 100
      %v1431 = vpop.permute.xlu0 %1430
      %1432 = vrot.lane.b32.xlu0 %v492, 100
      %v1433 = vpop.permute.xlu0 %1432
      %1434 = vrot.lane.b32.xlu0 %v497, 100
      %v1435 = vpop.permute.xlu0 %1434
      %1436 = vrot.lane.b32.xlu0 %v502, 100
      %v1437 = vpop.permute.xlu0 %1436
      %1438 = vrot.lane.b32.xlu0 %v507, 100
      %v1439 = vpop.permute.xlu0 %1438
      %1440 = vrot.lane.b32.xlu0 %v512, 100
      %v1441 = vpop.permute.xlu0 %1440
      %1442 = vrot.lane.b32.xlu0 %v517, 100
      %v1443 = vpop.permute.xlu0 %1442
      %1444 = vrot.lane.b32.xlu0 %v522, 100
      %v1445 = vpop.permute.xlu0 %1444
      %1446 = vrot.lane.b32.xlu0 %v527, 100
      %v1447 = vpop.permute.xlu0 %1446
      %v1480 = vadd.f32 %v1352, %v1385
      %v1481 = vadd.f32 %v1353, %v1387
      %v1482 = vadd.f32 %v1354, %v1389
      %v1483 = vadd.f32 %v1355, %v1391
      %v1484 = vadd.f32 %v1356, %v1393
      %v1485 = vadd.f32 %v1357, %v1395
      %v1486 = vadd.f32 %v1358, %v1397
      %v1487 = vadd.f32 %v1359, %v1399
      %v1488 = vadd.f32 %v1360, %v1401
      %v1489 = vadd.f32 %v1361, %v1403
      %v1490 = vadd.f32 %v1362, %v1405
      %v1491 = vadd.f32 %v1363, %v1407
      %v1492 = vadd.f32 %v1364, %v1409
      %v1493 = vadd.f32 %v1365, %v1411
      %v1494 = vadd.f32 %v1366, %v1413
      %v1495 = vadd.f32 %v1367, %v1415
      %v1496 = vadd.f32 %v1368, %v1417
      %v1497 = vadd.f32 %v1369, %v1419
      %v1498 = vadd.f32 %v1370, %v1421
      %v1499 = vadd.f32 %v1371, %v1423
      %v1500 = vadd.f32 %v1372, %v1425
      %v1501 = vadd.f32 %v1373, %v1427
      %v1502 = vadd.f32 %v1374, %v1429
      %v1503 = vadd.f32 %v1375, %v1431
      %v1504 = vadd.f32 %v1376, %v1433
      %v1505 = vadd.f32 %v1377, %v1435
      %v1506 = vadd.f32 %v1378, %v1437
      %v1507 = vadd.f32 %v1379, %v1439
      %v1508 = vadd.f32 %v1380, %v1441
      %v1509 = vadd.f32 %v1381, %v1443
      %v1510 = vadd.f32 %v1382, %v1445
      %v1511 = vadd.f32 %v1383, %v1447
      %1512 = vst.msk [vmem:[%s1159 + $0x1] sm:$0xff] %vm537, %v1480
      %1513 = vst.msk [vmem:[%s1159 + $0x9] sm:$0xff] %vm537, %v1481
      %1514 = vst.msk [vmem:[%s1159 + $0x31] sm:$0xff] %vm537, %v1482
      %1515 = vst.msk [vmem:[%s1159 + $0x39] sm:$0xff] %vm537, %v1483
      %1516 = vst.msk [vmem:[%s1159 + $0x61] sm:$0xff] %vm537, %v1484
      %1517 = vst.msk [vmem:[%s1159 + $0x69] sm:$0xff] %vm537, %v1485
      %1518 = vst.msk [vmem:[%s1159 + $0x91] sm:$0xff] %vm537, %v1486
      %1519 = vst.msk [vmem:[%s1159 + $0x99] sm:$0xff] %vm537, %v1487
      %1520 = vst.msk [vmem:[%s1159 + $0xc1] sm:$0xff] %vm537, %v1488
      %1521 = vst.msk [vmem:[%s1159 + $0xc9] sm:$0xff] %vm537, %v1489
      %1522 = vst.msk [vmem:[%s1159 + $0xf1] sm:$0xff] %vm537, %v1490
      %1523 = vst.msk [vmem:[%s1159 + $0xf9] sm:$0xff] %vm537, %v1491
      %1524 = vst.msk [vmem:[%s1159 + $0x121] sm:$0xff] %vm537, %v1492
      %1525 = vst.msk [vmem:[%s1159 + $0x129] sm:$0xff] %vm537, %v1493
      %1526 = vst.msk [vmem:[%s1159 + $0x151] sm:$0xff] %vm537, %v1494
      %1527 = vst.msk [vmem:[%s1159 + $0x159] sm:$0xff] %vm537, %v1495
      %1528 = vst.msk [vmem:[%s1159 + $0x181] sm:$0xff] %vm537, %v1496
      %1529 = vst.msk [vmem:[%s1159 + $0x189] sm:$0xff] %vm537, %v1497
      %1530 = vst.msk [vmem:[%s1159 + $0x1b1] sm:$0xff] %vm537, %v1498
      %1531 = vst.msk [vmem:[%s1159 + $0x1b9] sm:$0xff] %vm537, %v1499
      %1532 = vst.msk [vmem:[%s1159 + $0x1e1] sm:$0xff] %vm537, %v1500
      %1533 = vst.msk [vmem:[%s1159 + $0x1e9] sm:$0xff] %vm537, %v1501
      %1534 = vst.msk [vmem:[%s1159 + $0x211] sm:$0xff] %vm537, %v1502
      %1535 = vst.msk [vmem:[%s1159 + $0x219] sm:$0xff] %vm537, %v1503
      %1536 = vst.msk [vmem:[%s1159 + $0x241] sm:$0xff] %vm537, %v1504
      %1537 = vst.msk [vmem:[%s1159 + $0x249] sm:$0xff] %vm537, %v1505
      %1538 = vst.msk [vmem:[%s1159 + $0x271] sm:$0xff] %vm537, %v1506
      %1539 = vst.msk [vmem:[%s1159 + $0x279] sm:$0xff] %vm537, %v1507
      %1540 = vst.msk [vmem:[%s1159 + $0x2a1] sm:$0xff] %vm537, %v1508
      %1541 = vst.msk [vmem:[%s1159 + $0x2a9] sm:$0xff] %vm537, %v1509
      %1542 = vst.msk [vmem:[%s1159 + $0x2d1] sm:$0xff] %vm537, %v1510
      %1543 = vst.msk [vmem:[%s1159 + $0x2d9] sm:$0xff] %vm537, %v1511
      %v1544 = vld [vmem:[%s1159 + $0x2] sm:$0xff]
      %v1545 = vld [vmem:[%s1159 + $0xa] sm:$0xff]
      %v1546 = vld [vmem:[%s1159 + $0x32] sm:$0xff]
      %v1547 = vld [vmem:[%s1159 + $0x3a] sm:$0xff]
      %v1548 = vld [vmem:[%s1159 + $0x62] sm:$0xff]
      %v1549 = vld [vmem:[%s1159 + $0x6a] sm:$0xff]
      %v1550 = vld [vmem:[%s1159 + $0x92] sm:$0xff]
      %v1551 = vld [vmem:[%s1159 + $0x9a] sm:$0xff]
      %v1552 = vld [vmem:[%s1159 + $0xc2] sm:$0xff]
      %v1553 = vld [vmem:[%s1159 + $0xca] sm:$0xff]
      %v1554 = vld [vmem:[%s1159 + $0xf2] sm:$0xff]
      %v1555 = vld [vmem:[%s1159 + $0xfa] sm:$0xff]
      %v1556 = vld [vmem:[%s1159 + $0x122] sm:$0xff]
      %v1557 = vld [vmem:[%s1159 + $0x12a] sm:$0xff]
      %v1558 = vld [vmem:[%s1159 + $0x152] sm:$0xff]
      %v1559 = vld [vmem:[%s1159 + $0x15a] sm:$0xff]
      %v1560 = vld [vmem:[%s1159 + $0x182] sm:$0xff]
      %v1561 = vld [vmem:[%s1159 + $0x18a] sm:$0xff]
      %v1562 = vld [vmem:[%s1159 + $0x1b2] sm:$0xff]
      %v1563 = vld [vmem:[%s1159 + $0x1ba] sm:$0xff]
      %v1564 = vld [vmem:[%s1159 + $0x1e2] sm:$0xff]
      %v1565 = vld [vmem:[%s1159 + $0x1ea] sm:$0xff]
      %v1566 = vld [vmem:[%s1159 + $0x212] sm:$0xff]
      %v1567 = vld [vmem:[%s1159 + $0x21a] sm:$0xff]
      %v1568 = vld [vmem:[%s1159 + $0x242] sm:$0xff]
      %v1569 = vld [vmem:[%s1159 + $0x24a] sm:$0xff]
      %v1570 = vld [vmem:[%s1159 + $0x272] sm:$0xff]
      %v1571 = vld [vmem:[%s1159 + $0x27a] sm:$0xff]
      %v1572 = vld [vmem:[%s1159 + $0x2a2] sm:$0xff]
      %v1573 = vld [vmem:[%s1159 + $0x2aa] sm:$0xff]
      %v1574 = vld [vmem:[%s1159 + $0x2d2] sm:$0xff]
      %v1575 = vld [vmem:[%s1159 + $0x2da] sm:$0xff]
      %1576 = vrot.lane.b32.xlu0 %v372, 92
      %v1577 = vpop.permute.xlu0 %1576
      %1578 = vrot.lane.b32.xlu0 %v377, 92
      %v1579 = vpop.permute.xlu0 %1578
      %1580 = vrot.lane.b32.xlu0 %v382, 92
      %v1581 = vpop.permute.xlu0 %1580
      %1582 = vrot.lane.b32.xlu0 %v387, 92
      %v1583 = vpop.permute.xlu0 %1582
      %1584 = vrot.lane.b32.xlu0 %v392, 92
      %v1585 = vpop.permute.xlu0 %1584
      %1586 = vrot.lane.b32.xlu0 %v397, 92
      %v1587 = vpop.permute.xlu0 %1586
      %1588 = vrot.lane.b32.xlu0 %v402, 92
      %v1589 = vpop.permute.xlu0 %1588
      %1590 = vrot.lane.b32.xlu0 %v407, 92
      %v1591 = vpop.permute.xlu0 %1590
      %1592 = vrot.lane.b32.xlu0 %v412, 92
      %v1593 = vpop.permute.xlu0 %1592
      %1594 = vrot.lane.b32.xlu0 %v417, 92
      %v1595 = vpop.permute.xlu0 %1594
      %1596 = vrot.lane.b32.xlu0 %v422, 92
      %v1597 = vpop.permute.xlu0 %1596
      %1598 = vrot.lane.b32.xlu0 %v427, 92
      %v1599 = vpop.permute.xlu0 %1598
      %1600 = vrot.lane.b32.xlu0 %v432, 92
      %v1601 = vpop.permute.xlu0 %1600
      %1602 = vrot.lane.b32.xlu0 %v437, 92
      %v1603 = vpop.permute.xlu0 %1602
      %1604 = vrot.lane.b32.xlu0 %v442, 92
      %v1605 = vpop.permute.xlu0 %1604
      %1606 = vrot.lane.b32.xlu0 %v447, 92
      %v1607 = vpop.permute.xlu0 %1606
      %1608 = vrot.lane.b32.xlu0 %v452, 92
      %v1609 = vpop.permute.xlu0 %1608
      %1610 = vrot.lane.b32.xlu0 %v457, 92
      %v1611 = vpop.permute.xlu0 %1610
      %1612 = vrot.lane.b32.xlu0 %v462, 92
      %v1613 = vpop.permute.xlu0 %1612
      %1614 = vrot.lane.b32.xlu0 %v467, 92
      %v1615 = vpop.permute.xlu0 %1614
      %1616 = vrot.lane.b32.xlu0 %v472, 92
      %v1617 = vpop.permute.xlu0 %1616
      %1618 = vrot.lane.b32.xlu0 %v477, 92
      %v1619 = vpop.permute.xlu0 %1618
      %1620 = vrot.lane.b32.xlu0 %v482, 92
      %v1621 = vpop.permute.xlu0 %1620
      %1622 = vrot.lane.b32.xlu0 %v487, 92
      %v1623 = vpop.permute.xlu0 %1622
      %1624 = vrot.lane.b32.xlu0 %v492, 92
      %v1625 = vpop.permute.xlu0 %1624
      %1626 = vrot.lane.b32.xlu0 %v497, 92
      %v1627 = vpop.permute.xlu0 %1626
      %1628 = vrot.lane.b32.xlu0 %v502, 92
      %v1629 = vpop.permute.xlu0 %1628
      %1630 = vrot.lane.b32.xlu0 %v507, 92
      %v1631 = vpop.permute.xlu0 %1630
      %1632 = vrot.lane.b32.xlu0 %v512, 92
      %v1633 = vpop.permute.xlu0 %1632
      %1634 = vrot.lane.b32.xlu0 %v517, 92
      %v1635 = vpop.permute.xlu0 %1634
      %1636 = vrot.lane.b32.xlu0 %v522, 92
      %v1637 = vpop.permute.xlu0 %1636
      %1638 = vrot.lane.b32.xlu0 %v527, 92
      %v1639 = vpop.permute.xlu0 %1638
      %v1672 = vadd.f32 %v1544, %v1577
      %v1673 = vadd.f32 %v1545, %v1579
      %v1674 = vadd.f32 %v1546, %v1581
      %v1675 = vadd.f32 %v1547, %v1583
      %v1676 = vadd.f32 %v1548, %v1585
      %v1677 = vadd.f32 %v1549, %v1587
      %v1678 = vadd.f32 %v1550, %v1589
      %v1679 = vadd.f32 %v1551, %v1591
      %v1680 = vadd.f32 %v1552, %v1593
      %v1681 = vadd.f32 %v1553, %v1595
      %v1682 = vadd.f32 %v1554, %v1597
      %v1683 = vadd.f32 %v1555, %v1599
      %v1684 = vadd.f32 %v1556, %v1601
      %v1685 = vadd.f32 %v1557, %v1603
      %v1686 = vadd.f32 %v1558, %v1605
      %v1687 = vadd.f32 %v1559, %v1607
      %v1688 = vadd.f32 %v1560, %v1609
      %v1689 = vadd.f32 %v1561, %v1611
      %v1690 = vadd.f32 %v1562, %v1613
      %v1691 = vadd.f32 %v1563, %v1615
      %v1692 = vadd.f32 %v1564, %v1617
      %v1693 = vadd.f32 %v1565, %v1619
      %v1694 = vadd.f32 %v1566, %v1621
      %v1695 = vadd.f32 %v1567, %v1623
      %v1696 = vadd.f32 %v1568, %v1625
      %v1697 = vadd.f32 %v1569, %v1627
      %v1698 = vadd.f32 %v1570, %v1629
      %v1699 = vadd.f32 %v1571, %v1631
      %v1700 = vadd.f32 %v1572, %v1633
      %v1701 = vadd.f32 %v1573, %v1635
      %v1702 = vadd.f32 %v1574, %v1637
      %v1703 = vadd.f32 %v1575, %v1639
      %1704 = vst.msk [vmem:[%s1159 + $0x2] sm:$0xff] %vm204, %v1672
      %1705 = vst.msk [vmem:[%s1159 + $0xa] sm:$0xff] %vm204, %v1673
      %1706 = vst.msk [vmem:[%s1159 + $0x32] sm:$0xff] %vm204, %v1674
      %1707 = vst.msk [vmem:[%s1159 + $0x3a] sm:$0xff] %vm204, %v1675
      %1708 = vst.msk [vmem:[%s1159 + $0x62] sm:$0xff] %vm204, %v1676
      %1709 = vst.msk [vmem:[%s1159 + $0x6a] sm:$0xff] %vm204, %v1677
      %1710 = vst.msk [vmem:[%s1159 + $0x92] sm:$0xff] %vm204, %v1678
      %1711 = vst.msk [vmem:[%s1159 + $0x9a] sm:$0xff] %vm204, %v1679
      %1712 = vst.msk [vmem:[%s1159 + $0xc2] sm:$0xff] %vm204, %v1680
      %1713 = vst.msk [vmem:[%s1159 + $0xca] sm:$0xff] %vm204, %v1681
      %1714 = vst.msk [vmem:[%s1159 + $0xf2] sm:$0xff] %vm204, %v1682
      %1715 = vst.msk [vmem:[%s1159 + $0xfa] sm:$0xff] %vm204, %v1683
      %1716 = vst.msk [vmem:[%s1159 + $0x122] sm:$0xff] %vm204, %v1684
      %1717 = vst.msk [vmem:[%s1159 + $0x12a] sm:$0xff] %vm204, %v1685
      %1718 = vst.msk [vmem:[%s1159 + $0x152] sm:$0xff] %vm204, %v1686
      %1719 = vst.msk [vmem:[%s1159 + $0x15a] sm:$0xff] %vm204, %v1687
      %1720 = vst.msk [vmem:[%s1159 + $0x182] sm:$0xff] %vm204, %v1688
      %1721 = vst.msk [vmem:[%s1159 + $0x18a] sm:$0xff] %vm204, %v1689
      %1722 = vst.msk [vmem:[%s1159 + $0x1b2] sm:$0xff] %vm204, %v1690
      %1723 = vst.msk [vmem:[%s1159 + $0x1ba] sm:$0xff] %vm204, %v1691
      %1724 = vst.msk [vmem:[%s1159 + $0x1e2] sm:$0xff] %vm204, %v1692
      %1725 = vst.msk [vmem:[%s1159 + $0x1ea] sm:$0xff] %vm204, %v1693
      %1726 = vst.msk [vmem:[%s1159 + $0x212] sm:$0xff] %vm204, %v1694
      %1727 = vst.msk [vmem:[%s1159 + $0x21a] sm:$0xff] %vm204, %v1695
      %1728 = vst.msk [vmem:[%s1159 + $0x242] sm:$0xff] %vm204, %v1696
      %1729 = vst.msk [vmem:[%s1159 + $0x24a] sm:$0xff] %vm204, %v1697
      %1730 = vst.msk [vmem:[%s1159 + $0x272] sm:$0xff] %vm204, %v1698
      %1731 = vst.msk [vmem:[%s1159 + $0x27a] sm:$0xff] %vm204, %v1699
      %1732 = vst.msk [vmem:[%s1159 + $0x2a2] sm:$0xff] %vm204, %v1700
      %1733 = vst.msk [vmem:[%s1159 + $0x2aa] sm:$0xff] %vm204, %v1701
      %1734 = vst.msk [vmem:[%s1159 + $0x2d2] sm:$0xff] %vm204, %v1702
      %1735 = vst.msk [vmem:[%s1159 + $0x2da] sm:$0xff] %vm204, %v1703
      %s1736 = scalar_lea.vmem %s170, 48
      %v1737 = vld [vmem:[%s1736] sm:$0xff]
      %v1738 = vld [vmem:[%s1736 + $0x8] sm:$0xff]
      %v1739 = vld [vmem:[%s1736 + $0x30] sm:$0xff]
      %v1740 = vld [vmem:[%s1736 + $0x38] sm:$0xff]
      %v1741 = vld [vmem:[%s1736 + $0x60] sm:$0xff]
      %v1742 = vld [vmem:[%s1736 + $0x68] sm:$0xff]
      %v1743 = vld [vmem:[%s1736 + $0x90] sm:$0xff]
      %v1744 = vld [vmem:[%s1736 + $0x98] sm:$0xff]
      %v1745 = vld [vmem:[%s1736 + $0xc0] sm:$0xff]
      %v1746 = vld [vmem:[%s1736 + $0xc8] sm:$0xff]
      %v1747 = vld [vmem:[%s1736 + $0xf0] sm:$0xff]
      %v1748 = vld [vmem:[%s1736 + $0xf8] sm:$0xff]
      %v1749 = vld [vmem:[%s1736 + $0x120] sm:$0xff]
      %v1750 = vld [vmem:[%s1736 + $0x128] sm:$0xff]
      %v1751 = vld [vmem:[%s1736 + $0x150] sm:$0xff]
      %v1752 = vld [vmem:[%s1736 + $0x158] sm:$0xff]
      %v1753 = vld [vmem:[%s1736 + $0x180] sm:$0xff]
      %v1754 = vld [vmem:[%s1736 + $0x188] sm:$0xff]
      %v1755 = vld [vmem:[%s1736 + $0x1b0] sm:$0xff]
      %v1756 = vld [vmem:[%s1736 + $0x1b8] sm:$0xff]
      %v1757 = vld [vmem:[%s1736 + $0x1e0] sm:$0xff]
      %v1758 = vld [vmem:[%s1736 + $0x1e8] sm:$0xff]
      %v1759 = vld [vmem:[%s1736 + $0x210] sm:$0xff]
      %v1760 = vld [vmem:[%s1736 + $0x218] sm:$0xff]
      %v1761 = vld [vmem:[%s1736 + $0x240] sm:$0xff]
      %v1762 = vld [vmem:[%s1736 + $0x248] sm:$0xff]
      %v1763 = vld [vmem:[%s1736 + $0x270] sm:$0xff]
      %v1764 = vld [vmem:[%s1736 + $0x278] sm:$0xff]
      %v1765 = vld [vmem:[%s1736 + $0x2a0] sm:$0xff]
      %v1766 = vld [vmem:[%s1736 + $0x2a8] sm:$0xff]
      %v1767 = vld [vmem:[%s1736 + $0x2d0] sm:$0xff]
      %v1768 = vld [vmem:[%s1736 + $0x2d8] sm:$0xff]
      %1769 = vrot.lane.b32.xlu0 %v372, 88
      %v1770 = vpop.permute.xlu0 %1769
      %1771 = vrot.lane.b32.xlu0 %v377, 88
      %v1772 = vpop.permute.xlu0 %1771
      %1773 = vrot.lane.b32.xlu0 %v382, 88
      %v1774 = vpop.permute.xlu0 %1773
      %1775 = vrot.lane.b32.xlu0 %v387, 88
      %v1776 = vpop.permute.xlu0 %1775
      %1777 = vrot.lane.b32.xlu0 %v392, 88
      %v1778 = vpop.permute.xlu0 %1777
      %1779 = vrot.lane.b32.xlu0 %v397, 88
      %v1780 = vpop.permute.xlu0 %1779
      %1781 = vrot.lane.b32.xlu0 %v402, 88
      %v1782 = vpop.permute.xlu0 %1781
      %1783 = vrot.lane.b32.xlu0 %v407, 88
      %v1784 = vpop.permute.xlu0 %1783
      %1785 = vrot.lane.b32.xlu0 %v412, 88
      %v1786 = vpop.permute.xlu0 %1785
      %1787 = vrot.lane.b32.xlu0 %v417, 88
      %v1788 = vpop.permute.xlu0 %1787
      %1789 = vrot.lane.b32.xlu0 %v422, 88
      %v1790 = vpop.permute.xlu0 %1789
      %1791 = vrot.lane.b32.xlu0 %v427, 88
      %v1792 = vpop.permute.xlu0 %1791
      %1793 = vrot.lane.b32.xlu0 %v432, 88
      %v1794 = vpop.permute.xlu0 %1793
      %1795 = vrot.lane.b32.xlu0 %v437, 88
      %v1796 = vpop.permute.xlu0 %1795
      %1797 = vrot.lane.b32.xlu0 %v442, 88
      %v1798 = vpop.permute.xlu0 %1797
      %1799 = vrot.lane.b32.xlu0 %v447, 88
      %v1800 = vpop.permute.xlu0 %1799
      %1801 = vrot.lane.b32.xlu0 %v452, 88
      %v1802 = vpop.permute.xlu0 %1801
      %1803 = vrot.lane.b32.xlu0 %v457, 88
      %v1804 = vpop.permute.xlu0 %1803
      %1805 = vrot.lane.b32.xlu0 %v462, 88
      %v1806 = vpop.permute.xlu0 %1805
      %1807 = vrot.lane.b32.xlu0 %v467, 88
      %v1808 = vpop.permute.xlu0 %1807
      %1809 = vrot.lane.b32.xlu0 %v472, 88
      %v1810 = vpop.permute.xlu0 %1809
      %1811 = vrot.lane.b32.xlu0 %v477, 88
      %v1812 = vpop.permute.xlu0 %1811
      %1813 = vrot.lane.b32.xlu0 %v482, 88
      %v1814 = vpop.permute.xlu0 %1813
      %1815 = vrot.lane.b32.xlu0 %v487, 88
      %v1816 = vpop.permute.xlu0 %1815
      %1817 = vrot.lane.b32.xlu0 %v492, 88
      %v1818 = vpop.permute.xlu0 %1817
      %1819 = vrot.lane.b32.xlu0 %v497, 88
      %v1820 = vpop.permute.xlu0 %1819
      %1821 = vrot.lane.b32.xlu0 %v502, 88
      %v1822 = vpop.permute.xlu0 %1821
      %1823 = vrot.lane.b32.xlu0 %v507, 88
      %v1824 = vpop.permute.xlu0 %1823
      %1825 = vrot.lane.b32.xlu0 %v512, 88
      %v1826 = vpop.permute.xlu0 %1825
      %1827 = vrot.lane.b32.xlu0 %v517, 88
      %v1828 = vpop.permute.xlu0 %1827
      %1829 = vrot.lane.b32.xlu0 %v522, 88
      %v1830 = vpop.permute.xlu0 %1829
      %1831 = vrot.lane.b32.xlu0 %v527, 88
      %v1832 = vpop.permute.xlu0 %1831
      %v1865 = vadd.f32 %v1737, %v1770
      %v1866 = vadd.f32 %v1738, %v1772
      %v1867 = vadd.f32 %v1739, %v1774
      %v1868 = vadd.f32 %v1740, %v1776
      %v1869 = vadd.f32 %v1741, %v1778
      %v1870 = vadd.f32 %v1742, %v1780
      %v1871 = vadd.f32 %v1743, %v1782
      %v1872 = vadd.f32 %v1744, %v1784
      %v1873 = vadd.f32 %v1745, %v1786
      %v1874 = vadd.f32 %v1746, %v1788
      %v1875 = vadd.f32 %v1747, %v1790
      %v1876 = vadd.f32 %v1748, %v1792
      %v1877 = vadd.f32 %v1749, %v1794
      %v1878 = vadd.f32 %v1750, %v1796
      %v1879 = vadd.f32 %v1751, %v1798
      %v1880 = vadd.f32 %v1752, %v1800
      %v1881 = vadd.f32 %v1753, %v1802
      %v1882 = vadd.f32 %v1754, %v1804
      %v1883 = vadd.f32 %v1755, %v1806
      %v1884 = vadd.f32 %v1756, %v1808
      %v1885 = vadd.f32 %v1757, %v1810
      %v1886 = vadd.f32 %v1758, %v1812
      %v1887 = vadd.f32 %v1759, %v1814
      %v1888 = vadd.f32 %v1760, %v1816
      %v1889 = vadd.f32 %v1761, %v1818
      %v1890 = vadd.f32 %v1762, %v1820
      %v1891 = vadd.f32 %v1763, %v1822
      %v1892 = vadd.f32 %v1764, %v1824
      %v1893 = vadd.f32 %v1765, %v1826
      %v1894 = vadd.f32 %v1766, %v1828
      %v1895 = vadd.f32 %v1767, %v1830
      %v1896 = vadd.f32 %v1768, %v1832
      %1897 = vst.msk [vmem:[%s1736] sm:$0xff] %vm537, %v1865
      %1898 = vst.msk [vmem:[%s1736 + $0x8] sm:$0xff] %vm537, %v1866
      %1899 = vst.msk [vmem:[%s1736 + $0x30] sm:$0xff] %vm537, %v1867
      %1900 = vst.msk [vmem:[%s1736 + $0x38] sm:$0xff] %vm537, %v1868
      %1901 = vst.msk [vmem:[%s1736 + $0x60] sm:$0xff] %vm537, %v1869
      %1902 = vst.msk [vmem:[%s1736 + $0x68] sm:$0xff] %vm537, %v1870
      %1903 = vst.msk [vmem:[%s1736 + $0x90] sm:$0xff] %vm537, %v1871
      %1904 = vst.msk [vmem:[%s1736 + $0x98] sm:$0xff] %vm537, %v1872
      %1905 = vst.msk [vmem:[%s1736 + $0xc0] sm:$0xff] %vm537, %v1873
      %1906 = vst.msk [vmem:[%s1736 + $0xc8] sm:$0xff] %vm537, %v1874
      %1907 = vst.msk [vmem:[%s1736 + $0xf0] sm:$0xff] %vm537, %v1875
      %1908 = vst.msk [vmem:[%s1736 + $0xf8] sm:$0xff] %vm537, %v1876
      %1909 = vst.msk [vmem:[%s1736 + $0x120] sm:$0xff] %vm537, %v1877
      %1910 = vst.msk [vmem:[%s1736 + $0x128] sm:$0xff] %vm537, %v1878
      %1911 = vst.msk [vmem:[%s1736 + $0x150] sm:$0xff] %vm537, %v1879
      %1912 = vst.msk [vmem:[%s1736 + $0x158] sm:$0xff] %vm537, %v1880
      %1913 = vst.msk [vmem:[%s1736 + $0x180] sm:$0xff] %vm537, %v1881
      %1914 = vst.msk [vmem:[%s1736 + $0x188] sm:$0xff] %vm537, %v1882
      %1915 = vst.msk [vmem:[%s1736 + $0x1b0] sm:$0xff] %vm537, %v1883
      %1916 = vst.msk [vmem:[%s1736 + $0x1b8] sm:$0xff] %vm537, %v1884
      %1917 = vst.msk [vmem:[%s1736 + $0x1e0] sm:$0xff] %vm537, %v1885
      %1918 = vst.msk [vmem:[%s1736 + $0x1e8] sm:$0xff] %vm537, %v1886
      %1919 = vst.msk [vmem:[%s1736 + $0x210] sm:$0xff] %vm537, %v1887
      %1920 = vst.msk [vmem:[%s1736 + $0x218] sm:$0xff] %vm537, %v1888
      %1921 = vst.msk [vmem:[%s1736 + $0x240] sm:$0xff] %vm537, %v1889
      %1922 = vst.msk [vmem:[%s1736 + $0x248] sm:$0xff] %vm537, %v1890
      %1923 = vst.msk [vmem:[%s1736 + $0x270] sm:$0xff] %vm537, %v1891
      %1924 = vst.msk [vmem:[%s1736 + $0x278] sm:$0xff] %vm537, %v1892
      %1925 = vst.msk [vmem:[%s1736 + $0x2a0] sm:$0xff] %vm537, %v1893
      %1926 = vst.msk [vmem:[%s1736 + $0x2a8] sm:$0xff] %vm537, %v1894
      %1927 = vst.msk [vmem:[%s1736 + $0x2d0] sm:$0xff] %vm537, %v1895
      %1928 = vst.msk [vmem:[%s1736 + $0x2d8] sm:$0xff] %vm537, %v1896
      %v1929 = vld [vmem:[%s1736 + $0x1] sm:$0xff]
      %v1930 = vld [vmem:[%s1736 + $0x9] sm:$0xff]
      %v1931 = vld [vmem:[%s1736 + $0x31] sm:$0xff]
      %v1932 = vld [vmem:[%s1736 + $0x39] sm:$0xff]
      %v1933 = vld [vmem:[%s1736 + $0x61] sm:$0xff]
      %v1934 = vld [vmem:[%s1736 + $0x69] sm:$0xff]
      %v1935 = vld [vmem:[%s1736 + $0x91] sm:$0xff]
      %v1936 = vld [vmem:[%s1736 + $0x99] sm:$0xff]
      %v1937 = vld [vmem:[%s1736 + $0xc1] sm:$0xff]
      %v1938 = vld [vmem:[%s1736 + $0xc9] sm:$0xff]
      %v1939 = vld [vmem:[%s1736 + $0xf1] sm:$0xff]
      %v1940 = vld [vmem:[%s1736 + $0xf9] sm:$0xff]
      %v1941 = vld [vmem:[%s1736 + $0x121] sm:$0xff]
      %v1942 = vld [vmem:[%s1736 + $0x129] sm:$0xff]
      %v1943 = vld [vmem:[%s1736 + $0x151] sm:$0xff]
      %v1944 = vld [vmem:[%s1736 + $0x159] sm:$0xff]
      %v1945 = vld [vmem:[%s1736 + $0x181] sm:$0xff]
      %v1946 = vld [vmem:[%s1736 + $0x189] sm:$0xff]
      %v1947 = vld [vmem:[%s1736 + $0x1b1] sm:$0xff]
      %v1948 = vld [vmem:[%s1736 + $0x1b9] sm:$0xff]
      %v1949 = vld [vmem:[%s1736 + $0x1e1] sm:$0xff]
      %v1950 = vld [vmem:[%s1736 + $0x1e9] sm:$0xff]
      %v1951 = vld [vmem:[%s1736 + $0x211] sm:$0xff]
      %v1952 = vld [vmem:[%s1736 + $0x219] sm:$0xff]
      %v1953 = vld [vmem:[%s1736 + $0x241] sm:$0xff]
      %v1954 = vld [vmem:[%s1736 + $0x249] sm:$0xff]
      %v1955 = vld [vmem:[%s1736 + $0x271] sm:$0xff]
      %v1956 = vld [vmem:[%s1736 + $0x279] sm:$0xff]
      %v1957 = vld [vmem:[%s1736 + $0x2a1] sm:$0xff]
      %v1958 = vld [vmem:[%s1736 + $0x2a9] sm:$0xff]
      %v1959 = vld [vmem:[%s1736 + $0x2d1] sm:$0xff]
      %v1960 = vld [vmem:[%s1736 + $0x2d9] sm:$0xff]
      %1961 = vrot.lane.b32.xlu0 %v372, 80
      %v1962 = vpop.permute.xlu0 %1961
      %1963 = vrot.lane.b32.xlu0 %v377, 80
      %v1964 = vpop.permute.xlu0 %1963
      %1965 = vrot.lane.b32.xlu0 %v382, 80
      %v1966 = vpop.permute.xlu0 %1965
      %1967 = vrot.lane.b32.xlu0 %v387, 80
      %v1968 = vpop.permute.xlu0 %1967
      %1969 = vrot.lane.b32.xlu0 %v392, 80
      %v1970 = vpop.permute.xlu0 %1969
      %1971 = vrot.lane.b32.xlu0 %v397, 80
      %v1972 = vpop.permute.xlu0 %1971
      %1973 = vrot.lane.b32.xlu0 %v402, 80
      %v1974 = vpop.permute.xlu0 %1973
      %1975 = vrot.lane.b32.xlu0 %v407, 80
      %v1976 = vpop.permute.xlu0 %1975
      %1977 = vrot.lane.b32.xlu0 %v412, 80
      %v1978 = vpop.permute.xlu0 %1977
      %1979 = vrot.lane.b32.xlu0 %v417, 80
      %v1980 = vpop.permute.xlu0 %1979
      %1981 = vrot.lane.b32.xlu0 %v422, 80
      %v1982 = vpop.permute.xlu0 %1981
      %1983 = vrot.lane.b32.xlu0 %v427, 80
      %v1984 = vpop.permute.xlu0 %1983
      %1985 = vrot.lane.b32.xlu0 %v432, 80
      %v1986 = vpop.permute.xlu0 %1985
      %1987 = vrot.lane.b32.xlu0 %v437, 80
      %v1988 = vpop.permute.xlu0 %1987
      %1989 = vrot.lane.b32.xlu0 %v442, 80
      %v1990 = vpop.permute.xlu0 %1989
      %1991 = vrot.lane.b32.xlu0 %v447, 80
      %v1992 = vpop.permute.xlu0 %1991
      %1993 = vrot.lane.b32.xlu0 %v452, 80
      %v1994 = vpop.permute.xlu0 %1993
      %1995 = vrot.lane.b32.xlu0 %v457, 80
      %v1996 = vpop.permute.xlu0 %1995
      %1997 = vrot.lane.b32.xlu0 %v462, 80
      %v1998 = vpop.permute.xlu0 %1997
      %1999 = vrot.lane.b32.xlu0 %v467, 80
      %v2000 = vpop.permute.xlu0 %1999
      %2001 = vrot.lane.b32.xlu0 %v472, 80
      %v2002 = vpop.permute.xlu0 %2001
      %2003 = vrot.lane.b32.xlu0 %v477, 80
      %v2004 = vpop.permute.xlu0 %2003
      %2005 = vrot.lane.b32.xlu0 %v482, 80
      %v2006 = vpop.permute.xlu0 %2005
      %2007 = vrot.lane.b32.xlu0 %v487, 80
      %v2008 = vpop.permute.xlu0 %2007
      %2009 = vrot.lane.b32.xlu0 %v492, 80
      %v2010 = vpop.permute.xlu0 %2009
      %2011 = vrot.lane.b32.xlu0 %v497, 80
      %v2012 = vpop.permute.xlu0 %2011
      %2013 = vrot.lane.b32.xlu0 %v502, 80
      %v2014 = vpop.permute.xlu0 %2013
      %2015 = vrot.lane.b32.xlu0 %v507, 80
      %v2016 = vpop.permute.xlu0 %2015
      %2017 = vrot.lane.b32.xlu0 %v512, 80
      %v2018 = vpop.permute.xlu0 %2017
      %2019 = vrot.lane.b32.xlu0 %v517, 80
      %v2020 = vpop.permute.xlu0 %2019
      %2021 = vrot.lane.b32.xlu0 %v522, 80
      %v2022 = vpop.permute.xlu0 %2021
      %2023 = vrot.lane.b32.xlu0 %v527, 80
      %v2024 = vpop.permute.xlu0 %2023
      %v2057 = vadd.f32 %v1929, %v1962
      %v2058 = vadd.f32 %v1930, %v1964
      %v2059 = vadd.f32 %v1931, %v1966
      %v2060 = vadd.f32 %v1932, %v1968
      %v2061 = vadd.f32 %v1933, %v1970
      %v2062 = vadd.f32 %v1934, %v1972
      %v2063 = vadd.f32 %v1935, %v1974
      %v2064 = vadd.f32 %v1936, %v1976
      %v2065 = vadd.f32 %v1937, %v1978
      %v2066 = vadd.f32 %v1938, %v1980
      %v2067 = vadd.f32 %v1939, %v1982
      %v2068 = vadd.f32 %v1940, %v1984
      %v2069 = vadd.f32 %v1941, %v1986
      %v2070 = vadd.f32 %v1942, %v1988
      %v2071 = vadd.f32 %v1943, %v1990
      %v2072 = vadd.f32 %v1944, %v1992
      %v2073 = vadd.f32 %v1945, %v1994
      %v2074 = vadd.f32 %v1946, %v1996
      %v2075 = vadd.f32 %v1947, %v1998
      %v2076 = vadd.f32 %v1948, %v2000
      %v2077 = vadd.f32 %v1949, %v2002
      %v2078 = vadd.f32 %v1950, %v2004
      %v2079 = vadd.f32 %v1951, %v2006
      %v2080 = vadd.f32 %v1952, %v2008
      %v2081 = vadd.f32 %v1953, %v2010
      %v2082 = vadd.f32 %v1954, %v2012
      %v2083 = vadd.f32 %v1955, %v2014
      %v2084 = vadd.f32 %v1956, %v2016
      %v2085 = vadd.f32 %v1957, %v2018
      %v2086 = vadd.f32 %v1958, %v2020
      %v2087 = vadd.f32 %v1959, %v2022
      %v2088 = vadd.f32 %v1960, %v2024
      %2089 = vst.msk [vmem:[%s1736 + $0x1] sm:$0xff] %vm537, %v2057
      %2090 = vst.msk [vmem:[%s1736 + $0x9] sm:$0xff] %vm537, %v2058
      %2091 = vst.msk [vmem:[%s1736 + $0x31] sm:$0xff] %vm537, %v2059
      %2092 = vst.msk [vmem:[%s1736 + $0x39] sm:$0xff] %vm537, %v2060
      %2093 = vst.msk [vmem:[%s1736 + $0x61] sm:$0xff] %vm537, %v2061
      %2094 = vst.msk [vmem:[%s1736 + $0x69] sm:$0xff] %vm537, %v2062
      %2095 = vst.msk [vmem:[%s1736 + $0x91] sm:$0xff] %vm537, %v2063
      %2096 = vst.msk [vmem:[%s1736 + $0x99] sm:$0xff] %vm537, %v2064
      %2097 = vst.msk [vmem:[%s1736 + $0xc1] sm:$0xff] %vm537, %v2065
      %2098 = vst.msk [vmem:[%s1736 + $0xc9] sm:$0xff] %vm537, %v2066
      %2099 = vst.msk [vmem:[%s1736 + $0xf1] sm:$0xff] %vm537, %v2067
      %2100 = vst.msk [vmem:[%s1736 + $0xf9] sm:$0xff] %vm537, %v2068
      %2101 = vst.msk [vmem:[%s1736 + $0x121] sm:$0xff] %vm537, %v2069
      %2102 = vst.msk [vmem:[%s1736 + $0x129] sm:$0xff] %vm537, %v2070
      %2103 = vst.msk [vmem:[%s1736 + $0x151] sm:$0xff] %vm537, %v2071
      %2104 = vst.msk [vmem:[%s1736 + $0x159] sm:$0xff] %vm537, %v2072
      %2105 = vst.msk [vmem:[%s1736 + $0x181] sm:$0xff] %vm537, %v2073
      %2106 = vst.msk [vmem:[%s1736 + $0x189] sm:$0xff] %vm537, %v2074
      %2107 = vst.msk [vmem:[%s1736 + $0x1b1] sm:$0xff] %vm537, %v2075
      %2108 = vst.msk [vmem:[%s1736 + $0x1b9] sm:$0xff] %vm537, %v2076
      %2109 = vst.msk [vmem:[%s1736 + $0x1e1] sm:$0xff] %vm537, %v2077
      %2110 = vst.msk [vmem:[%s1736 + $0x1e9] sm:$0xff] %vm537, %v2078
      %2111 = vst.msk [vmem:[%s1736 + $0x211] sm:$0xff] %vm537, %v2079
      %2112 = vst.msk [vmem:[%s1736 + $0x219] sm:$0xff] %vm537, %v2080
      %2113 = vst.msk [vmem:[%s1736 + $0x241] sm:$0xff] %vm537, %v2081
      %2114 = vst.msk [vmem:[%s1736 + $0x249] sm:$0xff] %vm537, %v2082
      %2115 = vst.msk [vmem:[%s1736 + $0x271] sm:$0xff] %vm537, %v2083
      %2116 = vst.msk [vmem:[%s1736 + $0x279] sm:$0xff] %vm537, %v2084
      %2117 = vst.msk [vmem:[%s1736 + $0x2a1] sm:$0xff] %vm537, %v2085
      %2118 = vst.msk [vmem:[%s1736 + $0x2a9] sm:$0xff] %vm537, %v2086
      %2119 = vst.msk [vmem:[%s1736 + $0x2d1] sm:$0xff] %vm537, %v2087
      %2120 = vst.msk [vmem:[%s1736 + $0x2d9] sm:$0xff] %vm537, %v2088
      %v2121 = vld [vmem:[%s1736 + $0x2] sm:$0xff]
      %v2122 = vld [vmem:[%s1736 + $0xa] sm:$0xff]
      %v2123 = vld [vmem:[%s1736 + $0x32] sm:$0xff]
      %v2124 = vld [vmem:[%s1736 + $0x3a] sm:$0xff]
      %v2125 = vld [vmem:[%s1736 + $0x62] sm:$0xff]
      %v2126 = vld [vmem:[%s1736 + $0x6a] sm:$0xff]
      %v2127 = vld [vmem:[%s1736 + $0x92] sm:$0xff]
      %v2128 = vld [vmem:[%s1736 + $0x9a] sm:$0xff]
      %v2129 = vld [vmem:[%s1736 + $0xc2] sm:$0xff]
      %v2130 = vld [vmem:[%s1736 + $0xca] sm:$0xff]
      %v2131 = vld [vmem:[%s1736 + $0xf2] sm:$0xff]
      %v2132 = vld [vmem:[%s1736 + $0xfa] sm:$0xff]
      %v2133 = vld [vmem:[%s1736 + $0x122] sm:$0xff]
      %v2134 = vld [vmem:[%s1736 + $0x12a] sm:$0xff]
      %v2135 = vld [vmem:[%s1736 + $0x152] sm:$0xff]
      %v2136 = vld [vmem:[%s1736 + $0x15a] sm:$0xff]
      %v2137 = vld [vmem:[%s1736 + $0x182] sm:$0xff]
      %v2138 = vld [vmem:[%s1736 + $0x18a] sm:$0xff]
      %v2139 = vld [vmem:[%s1736 + $0x1b2] sm:$0xff]
      %v2140 = vld [vmem:[%s1736 + $0x1ba] sm:$0xff]
      %v2141 = vld [vmem:[%s1736 + $0x1e2] sm:$0xff]
      %v2142 = vld [vmem:[%s1736 + $0x1ea] sm:$0xff]
      %v2143 = vld [vmem:[%s1736 + $0x212] sm:$0xff]
      %v2144 = vld [vmem:[%s1736 + $0x21a] sm:$0xff]
      %v2145 = vld [vmem:[%s1736 + $0x242] sm:$0xff]
      %v2146 = vld [vmem:[%s1736 + $0x24a] sm:$0xff]
      %v2147 = vld [vmem:[%s1736 + $0x272] sm:$0xff]
      %v2148 = vld [vmem:[%s1736 + $0x27a] sm:$0xff]
      %v2149 = vld [vmem:[%s1736 + $0x2a2] sm:$0xff]
      %v2150 = vld [vmem:[%s1736 + $0x2aa] sm:$0xff]
      %v2151 = vld [vmem:[%s1736 + $0x2d2] sm:$0xff]
      %v2152 = vld [vmem:[%s1736 + $0x2da] sm:$0xff]
      %2153 = vrot.lane.b32.xlu0 %v372, 72
      %v2154 = vpop.permute.xlu0 %2153
      %2155 = vrot.lane.b32.xlu0 %v377, 72
      %v2156 = vpop.permute.xlu0 %2155
      %2157 = vrot.lane.b32.xlu0 %v382, 72
      %v2158 = vpop.permute.xlu0 %2157
      %2159 = vrot.lane.b32.xlu0 %v387, 72
      %v2160 = vpop.permute.xlu0 %2159
      %2161 = vrot.lane.b32.xlu0 %v392, 72
      %v2162 = vpop.permute.xlu0 %2161
      %2163 = vrot.lane.b32.xlu0 %v397, 72
      %v2164 = vpop.permute.xlu0 %2163
      %2165 = vrot.lane.b32.xlu0 %v402, 72
      %v2166 = vpop.permute.xlu0 %2165
      %2167 = vrot.lane.b32.xlu0 %v407, 72
      %v2168 = vpop.permute.xlu0 %2167
      %2169 = vrot.lane.b32.xlu0 %v412, 72
      %v2170 = vpop.permute.xlu0 %2169
      %2171 = vrot.lane.b32.xlu0 %v417, 72
      %v2172 = vpop.permute.xlu0 %2171
      %2173 = vrot.lane.b32.xlu0 %v422, 72
      %v2174 = vpop.permute.xlu0 %2173
      %2175 = vrot.lane.b32.xlu0 %v427, 72
      %v2176 = vpop.permute.xlu0 %2175
      %2177 = vrot.lane.b32.xlu0 %v432, 72
      %v2178 = vpop.permute.xlu0 %2177
      %2179 = vrot.lane.b32.xlu0 %v437, 72
      %v2180 = vpop.permute.xlu0 %2179
      %2181 = vrot.lane.b32.xlu0 %v442, 72
      %v2182 = vpop.permute.xlu0 %2181
      %2183 = vrot.lane.b32.xlu0 %v447, 72
      %v2184 = vpop.permute.xlu0 %2183
      %2185 = vrot.lane.b32.xlu0 %v452, 72
      %v2186 = vpop.permute.xlu0 %2185
      %2187 = vrot.lane.b32.xlu0 %v457, 72
      %v2188 = vpop.permute.xlu0 %2187
      %2189 = vrot.lane.b32.xlu0 %v462, 72
      %v2190 = vpop.permute.xlu0 %2189
      %2191 = vrot.lane.b32.xlu0 %v467, 72
      %v2192 = vpop.permute.xlu0 %2191
      %2193 = vrot.lane.b32.xlu0 %v472, 72
      %v2194 = vpop.permute.xlu0 %2193
      %2195 = vrot.lane.b32.xlu0 %v477, 72
      %v2196 = vpop.permute.xlu0 %2195
      %2197 = vrot.lane.b32.xlu0 %v482, 72
      %v2198 = vpop.permute.xlu0 %2197
      %2199 = vrot.lane.b32.xlu0 %v487, 72
      %v2200 = vpop.permute.xlu0 %2199
      %2201 = vrot.lane.b32.xlu0 %v492, 72
      %v2202 = vpop.permute.xlu0 %2201
      %2203 = vrot.lane.b32.xlu0 %v497, 72
      %v2204 = vpop.permute.xlu0 %2203
      %2205 = vrot.lane.b32.xlu0 %v502, 72
      %v2206 = vpop.permute.xlu0 %2205
      %2207 = vrot.lane.b32.xlu0 %v507, 72
      %v2208 = vpop.permute.xlu0 %2207
      %2209 = vrot.lane.b32.xlu0 %v512, 72
      %v2210 = vpop.permute.xlu0 %2209
      %2211 = vrot.lane.b32.xlu0 %v517, 72
      %v2212 = vpop.permute.xlu0 %2211
      %2213 = vrot.lane.b32.xlu0 %v522, 72
      %v2214 = vpop.permute.xlu0 %2213
      %2215 = vrot.lane.b32.xlu0 %v527, 72
      %v2216 = vpop.permute.xlu0 %2215
      %v2249 = vadd.f32 %v2121, %v2154
      %v2250 = vadd.f32 %v2122, %v2156
      %v2251 = vadd.f32 %v2123, %v2158
      %v2252 = vadd.f32 %v2124, %v2160
      %v2253 = vadd.f32 %v2125, %v2162
      %v2254 = vadd.f32 %v2126, %v2164
      %v2255 = vadd.f32 %v2127, %v2166
      %v2256 = vadd.f32 %v2128, %v2168
      %v2257 = vadd.f32 %v2129, %v2170
      %v2258 = vadd.f32 %v2130, %v2172
      %v2259 = vadd.f32 %v2131, %v2174
      %v2260 = vadd.f32 %v2132, %v2176
      %v2261 = vadd.f32 %v2133, %v2178
      %v2262 = vadd.f32 %v2134, %v2180
      %v2263 = vadd.f32 %v2135, %v2182
      %v2264 = vadd.f32 %v2136, %v2184
      %v2265 = vadd.f32 %v2137, %v2186
      %v2266 = vadd.f32 %v2138, %v2188
      %v2267 = vadd.f32 %v2139, %v2190
      %v2268 = vadd.f32 %v2140, %v2192
      %v2269 = vadd.f32 %v2141, %v2194
      %v2270 = vadd.f32 %v2142, %v2196
      %v2271 = vadd.f32 %v2143, %v2198
      %v2272 = vadd.f32 %v2144, %v2200
      %v2273 = vadd.f32 %v2145, %v2202
      %v2274 = vadd.f32 %v2146, %v2204
      %v2275 = vadd.f32 %v2147, %v2206
      %v2276 = vadd.f32 %v2148, %v2208
      %v2277 = vadd.f32 %v2149, %v2210
      %v2278 = vadd.f32 %v2150, %v2212
      %v2279 = vadd.f32 %v2151, %v2214
      %v2280 = vadd.f32 %v2152, %v2216
      %2281 = vst.msk [vmem:[%s1736 + $0x2] sm:$0xff] %vm204, %v2249
      %2282 = vst.msk [vmem:[%s1736 + $0xa] sm:$0xff] %vm204, %v2250
      %2283 = vst.msk [vmem:[%s1736 + $0x32] sm:$0xff] %vm204, %v2251
      %2284 = vst.msk [vmem:[%s1736 + $0x3a] sm:$0xff] %vm204, %v2252
      %2285 = vst.msk [vmem:[%s1736 + $0x62] sm:$0xff] %vm204, %v2253
      %2286 = vst.msk [vmem:[%s1736 + $0x6a] sm:$0xff] %vm204, %v2254
      %2287 = vst.msk [vmem:[%s1736 + $0x92] sm:$0xff] %vm204, %v2255
      %2288 = vst.msk [vmem:[%s1736 + $0x9a] sm:$0xff] %vm204, %v2256
      %2289 = vst.msk [vmem:[%s1736 + $0xc2] sm:$0xff] %vm204, %v2257
      %2290 = vst.msk [vmem:[%s1736 + $0xca] sm:$0xff] %vm204, %v2258
      %2291 = vst.msk [vmem:[%s1736 + $0xf2] sm:$0xff] %vm204, %v2259
      %2292 = vst.msk [vmem:[%s1736 + $0xfa] sm:$0xff] %vm204, %v2260
      %2293 = vst.msk [vmem:[%s1736 + $0x122] sm:$0xff] %vm204, %v2261
      %2294 = vst.msk [vmem:[%s1736 + $0x12a] sm:$0xff] %vm204, %v2262
      %2295 = vst.msk [vmem:[%s1736 + $0x152] sm:$0xff] %vm204, %v2263
      %2296 = vst.msk [vmem:[%s1736 + $0x15a] sm:$0xff] %vm204, %v2264
      %2297 = vst.msk [vmem:[%s1736 + $0x182] sm:$0xff] %vm204, %v2265
      %2298 = vst.msk [vmem:[%s1736 + $0x18a] sm:$0xff] %vm204, %v2266
      %2299 = vst.msk [vmem:[%s1736 + $0x1b2] sm:$0xff] %vm204, %v2267
      %2300 = vst.msk [vmem:[%s1736 + $0x1ba] sm:$0xff] %vm204, %v2268
      %2301 = vst.msk [vmem:[%s1736 + $0x1e2] sm:$0xff] %vm204, %v2269
      %2302 = vst.msk [vmem:[%s1736 + $0x1ea] sm:$0xff] %vm204, %v2270
      %2303 = vst.msk [vmem:[%s1736 + $0x212] sm:$0xff] %vm204, %v2271
      %2304 = vst.msk [vmem:[%s1736 + $0x21a] sm:$0xff] %vm204, %v2272
      %2305 = vst.msk [vmem:[%s1736 + $0x242] sm:$0xff] %vm204, %v2273
      %2306 = vst.msk [vmem:[%s1736 + $0x24a] sm:$0xff] %vm204, %v2274
      %2307 = vst.msk [vmem:[%s1736 + $0x272] sm:$0xff] %vm204, %v2275
      %2308 = vst.msk [vmem:[%s1736 + $0x27a] sm:$0xff] %vm204, %v2276
      %2309 = vst.msk [vmem:[%s1736 + $0x2a2] sm:$0xff] %vm204, %v2277
      %2310 = vst.msk [vmem:[%s1736 + $0x2aa] sm:$0xff] %vm204, %v2278
      %2311 = vst.msk [vmem:[%s1736 + $0x2d2] sm:$0xff] %vm204, %v2279
      %2312 = vst.msk [vmem:[%s1736 + $0x2da] sm:$0xff] %vm204, %v2280
      %s2313 = scalar_lea.vmem %s170, 72
      %v2314 = vld [vmem:[%s2313] sm:$0xff]
      %v2315 = vld [vmem:[%s2313 + $0x8] sm:$0xff]
      %v2316 = vld [vmem:[%s2313 + $0x30] sm:$0xff]
      %v2317 = vld [vmem:[%s2313 + $0x38] sm:$0xff]
      %v2318 = vld [vmem:[%s2313 + $0x60] sm:$0xff]
      %v2319 = vld [vmem:[%s2313 + $0x68] sm:$0xff]
      %v2320 = vld [vmem:[%s2313 + $0x90] sm:$0xff]
      %v2321 = vld [vmem:[%s2313 + $0x98] sm:$0xff]
      %v2322 = vld [vmem:[%s2313 + $0xc0] sm:$0xff]
      %v2323 = vld [vmem:[%s2313 + $0xc8] sm:$0xff]
      %v2324 = vld [vmem:[%s2313 + $0xf0] sm:$0xff]
      %v2325 = vld [vmem:[%s2313 + $0xf8] sm:$0xff]
      %v2326 = vld [vmem:[%s2313 + $0x120] sm:$0xff]
      %v2327 = vld [vmem:[%s2313 + $0x128] sm:$0xff]
      %v2328 = vld [vmem:[%s2313 + $0x150] sm:$0xff]
      %v2329 = vld [vmem:[%s2313 + $0x158] sm:$0xff]
      %v2330 = vld [vmem:[%s2313 + $0x180] sm:$0xff]
      %v2331 = vld [vmem:[%s2313 + $0x188] sm:$0xff]
      %v2332 = vld [vmem:[%s2313 + $0x1b0] sm:$0xff]
      %v2333 = vld [vmem:[%s2313 + $0x1b8] sm:$0xff]
      %v2334 = vld [vmem:[%s2313 + $0x1e0] sm:$0xff]
      %v2335 = vld [vmem:[%s2313 + $0x1e8] sm:$0xff]
      %v2336 = vld [vmem:[%s2313 + $0x210] sm:$0xff]
      %v2337 = vld [vmem:[%s2313 + $0x218] sm:$0xff]
      %v2338 = vld [vmem:[%s2313 + $0x240] sm:$0xff]
      %v2339 = vld [vmem:[%s2313 + $0x248] sm:$0xff]
      %v2340 = vld [vmem:[%s2313 + $0x270] sm:$0xff]
      %v2341 = vld [vmem:[%s2313 + $0x278] sm:$0xff]
      %v2342 = vld [vmem:[%s2313 + $0x2a0] sm:$0xff]
      %v2343 = vld [vmem:[%s2313 + $0x2a8] sm:$0xff]
      %v2344 = vld [vmem:[%s2313 + $0x2d0] sm:$0xff]
      %v2345 = vld [vmem:[%s2313 + $0x2d8] sm:$0xff]
      %2346 = vrot.lane.b32.xlu0 %v372, 68
      %v2347 = vpop.permute.xlu0 %2346
      %2348 = vrot.lane.b32.xlu0 %v377, 68
      %v2349 = vpop.permute.xlu0 %2348
      %2350 = vrot.lane.b32.xlu0 %v382, 68
      %v2351 = vpop.permute.xlu0 %2350
      %2352 = vrot.lane.b32.xlu0 %v387, 68
      %v2353 = vpop.permute.xlu0 %2352
      %2354 = vrot.lane.b32.xlu0 %v392, 68
      %v2355 = vpop.permute.xlu0 %2354
      %2356 = vrot.lane.b32.xlu0 %v397, 68
      %v2357 = vpop.permute.xlu0 %2356
      %2358 = vrot.lane.b32.xlu0 %v402, 68
      %v2359 = vpop.permute.xlu0 %2358
      %2360 = vrot.lane.b32.xlu0 %v407, 68
      %v2361 = vpop.permute.xlu0 %2360
      %2362 = vrot.lane.b32.xlu0 %v412, 68
      %v2363 = vpop.permute.xlu0 %2362
      %2364 = vrot.lane.b32.xlu0 %v417, 68
      %v2365 = vpop.permute.xlu0 %2364
      %2366 = vrot.lane.b32.xlu0 %v422, 68
      %v2367 = vpop.permute.xlu0 %2366
      %2368 = vrot.lane.b32.xlu0 %v427, 68
      %v2369 = vpop.permute.xlu0 %2368
      %2370 = vrot.lane.b32.xlu0 %v432, 68
      %v2371 = vpop.permute.xlu0 %2370
      %2372 = vrot.lane.b32.xlu0 %v437, 68
      %v2373 = vpop.permute.xlu0 %2372
      %2374 = vrot.lane.b32.xlu0 %v442, 68
      %v2375 = vpop.permute.xlu0 %2374
      %2376 = vrot.lane.b32.xlu0 %v447, 68
      %v2377 = vpop.permute.xlu0 %2376
      %2378 = vrot.lane.b32.xlu0 %v452, 68
      %v2379 = vpop.permute.xlu0 %2378
      %2380 = vrot.lane.b32.xlu0 %v457, 68
      %v2381 = vpop.permute.xlu0 %2380
      %2382 = vrot.lane.b32.xlu0 %v462, 68
      %v2383 = vpop.permute.xlu0 %2382
      %2384 = vrot.lane.b32.xlu0 %v467, 68
      %v2385 = vpop.permute.xlu0 %2384
      %2386 = vrot.lane.b32.xlu0 %v472, 68
      %v2387 = vpop.permute.xlu0 %2386
      %2388 = vrot.lane.b32.xlu0 %v477, 68
      %v2389 = vpop.permute.xlu0 %2388
      %2390 = vrot.lane.b32.xlu0 %v482, 68
      %v2391 = vpop.permute.xlu0 %2390
      %2392 = vrot.lane.b32.xlu0 %v487, 68
      %v2393 = vpop.permute.xlu0 %2392
      %2394 = vrot.lane.b32.xlu0 %v492, 68
      %v2395 = vpop.permute.xlu0 %2394
      %2396 = vrot.lane.b32.xlu0 %v497, 68
      %v2397 = vpop.permute.xlu0 %2396
      %2398 = vrot.lane.b32.xlu0 %v502, 68
      %v2399 = vpop.permute.xlu0 %2398
      %2400 = vrot.lane.b32.xlu0 %v507, 68
      %v2401 = vpop.permute.xlu0 %2400
      %2402 = vrot.lane.b32.xlu0 %v512, 68
      %v2403 = vpop.permute.xlu0 %2402
      %2404 = vrot.lane.b32.xlu0 %v517, 68
      %v2405 = vpop.permute.xlu0 %2404
      %2406 = vrot.lane.b32.xlu0 %v522, 68
      %v2407 = vpop.permute.xlu0 %2406
      %2408 = vrot.lane.b32.xlu0 %v527, 68
      %v2409 = vpop.permute.xlu0 %2408
      %v2442 = vadd.f32 %v2314, %v2347
      %v2443 = vadd.f32 %v2315, %v2349
      %v2444 = vadd.f32 %v2316, %v2351
      %v2445 = vadd.f32 %v2317, %v2353
      %v2446 = vadd.f32 %v2318, %v2355
      %v2447 = vadd.f32 %v2319, %v2357
      %v2448 = vadd.f32 %v2320, %v2359
      %v2449 = vadd.f32 %v2321, %v2361
      %v2450 = vadd.f32 %v2322, %v2363
      %v2451 = vadd.f32 %v2323, %v2365
      %v2452 = vadd.f32 %v2324, %v2367
      %v2453 = vadd.f32 %v2325, %v2369
      %v2454 = vadd.f32 %v2326, %v2371
      %v2455 = vadd.f32 %v2327, %v2373
      %v2456 = vadd.f32 %v2328, %v2375
      %v2457 = vadd.f32 %v2329, %v2377
      %v2458 = vadd.f32 %v2330, %v2379
      %v2459 = vadd.f32 %v2331, %v2381
      %v2460 = vadd.f32 %v2332, %v2383
      %v2461 = vadd.f32 %v2333, %v2385
      %v2462 = vadd.f32 %v2334, %v2387
      %v2463 = vadd.f32 %v2335, %v2389
      %v2464 = vadd.f32 %v2336, %v2391
      %v2465 = vadd.f32 %v2337, %v2393
      %v2466 = vadd.f32 %v2338, %v2395
      %v2467 = vadd.f32 %v2339, %v2397
      %v2468 = vadd.f32 %v2340, %v2399
      %v2469 = vadd.f32 %v2341, %v2401
      %v2470 = vadd.f32 %v2342, %v2403
      %v2471 = vadd.f32 %v2343, %v2405
      %v2472 = vadd.f32 %v2344, %v2407
      %v2473 = vadd.f32 %v2345, %v2409
      %2474 = vst.msk [vmem:[%s2313] sm:$0xff] %vm537, %v2442
      %2475 = vst.msk [vmem:[%s2313 + $0x8] sm:$0xff] %vm537, %v2443
      %2476 = vst.msk [vmem:[%s2313 + $0x30] sm:$0xff] %vm537, %v2444
      %2477 = vst.msk [vmem:[%s2313 + $0x38] sm:$0xff] %vm537, %v2445
      %2478 = vst.msk [vmem:[%s2313 + $0x60] sm:$0xff] %vm537, %v2446
      %2479 = vst.msk [vmem:[%s2313 + $0x68] sm:$0xff] %vm537, %v2447
      %2480 = vst.msk [vmem:[%s2313 + $0x90] sm:$0xff] %vm537, %v2448
      %2481 = vst.msk [vmem:[%s2313 + $0x98] sm:$0xff] %vm537, %v2449
      %2482 = vst.msk [vmem:[%s2313 + $0xc0] sm:$0xff] %vm537, %v2450
      %2483 = vst.msk [vmem:[%s2313 + $0xc8] sm:$0xff] %vm537, %v2451
      %2484 = vst.msk [vmem:[%s2313 + $0xf0] sm:$0xff] %vm537, %v2452
      %2485 = vst.msk [vmem:[%s2313 + $0xf8] sm:$0xff] %vm537, %v2453
      %2486 = vst.msk [vmem:[%s2313 + $0x120] sm:$0xff] %vm537, %v2454
      %2487 = vst.msk [vmem:[%s2313 + $0x128] sm:$0xff] %vm537, %v2455
      %2488 = vst.msk [vmem:[%s2313 + $0x150] sm:$0xff] %vm537, %v2456
      %2489 = vst.msk [vmem:[%s2313 + $0x158] sm:$0xff] %vm537, %v2457
      %2490 = vst.msk [vmem:[%s2313 + $0x180] sm:$0xff] %vm537, %v2458
      %2491 = vst.msk [vmem:[%s2313 + $0x188] sm:$0xff] %vm537, %v2459
      %2492 = vst.msk [vmem:[%s2313 + $0x1b0] sm:$0xff] %vm537, %v2460
      %2493 = vst.msk [vmem:[%s2313 + $0x1b8] sm:$0xff] %vm537, %v2461
      %2494 = vst.msk [vmem:[%s2313 + $0x1e0] sm:$0xff] %vm537, %v2462
      %2495 = vst.msk [vmem:[%s2313 + $0x1e8] sm:$0xff] %vm537, %v2463
      %2496 = vst.msk [vmem:[%s2313 + $0x210] sm:$0xff] %vm537, %v2464
      %2497 = vst.msk [vmem:[%s2313 + $0x218] sm:$0xff] %vm537, %v2465
      %2498 = vst.msk [vmem:[%s2313 + $0x240] sm:$0xff] %vm537, %v2466
      %2499 = vst.msk [vmem:[%s2313 + $0x248] sm:$0xff] %vm537, %v2467
      %2500 = vst.msk [vmem:[%s2313 + $0x270] sm:$0xff] %vm537, %v2468
      %2501 = vst.msk [vmem:[%s2313 + $0x278] sm:$0xff] %vm537, %v2469
      %2502 = vst.msk [vmem:[%s2313 + $0x2a0] sm:$0xff] %vm537, %v2470
      %2503 = vst.msk [vmem:[%s2313 + $0x2a8] sm:$0xff] %vm537, %v2471
      %2504 = vst.msk [vmem:[%s2313 + $0x2d0] sm:$0xff] %vm537, %v2472
      %2505 = vst.msk [vmem:[%s2313 + $0x2d8] sm:$0xff] %vm537, %v2473
      %v2506 = vld [vmem:[%s2313 + $0x1] sm:$0xff]
      %v2507 = vld [vmem:[%s2313 + $0x9] sm:$0xff]
      %v2508 = vld [vmem:[%s2313 + $0x31] sm:$0xff]
      %v2509 = vld [vmem:[%s2313 + $0x39] sm:$0xff]
      %v2510 = vld [vmem:[%s2313 + $0x61] sm:$0xff]
      %v2511 = vld [vmem:[%s2313 + $0x69] sm:$0xff]
      %v2512 = vld [vmem:[%s2313 + $0x91] sm:$0xff]
      %v2513 = vld [vmem:[%s2313 + $0x99] sm:$0xff]
      %v2514 = vld [vmem:[%s2313 + $0xc1] sm:$0xff]
      %v2515 = vld [vmem:[%s2313 + $0xc9] sm:$0xff]
      %v2516 = vld [vmem:[%s2313 + $0xf1] sm:$0xff]
      %v2517 = vld [vmem:[%s2313 + $0xf9] sm:$0xff]
      %v2518 = vld [vmem:[%s2313 + $0x121] sm:$0xff]
      %v2519 = vld [vmem:[%s2313 + $0x129] sm:$0xff]
      %v2520 = vld [vmem:[%s2313 + $0x151] sm:$0xff]
      %v2521 = vld [vmem:[%s2313 + $0x159] sm:$0xff]
      %v2522 = vld [vmem:[%s2313 + $0x181] sm:$0xff]
      %v2523 = vld [vmem:[%s2313 + $0x189] sm:$0xff]
      %v2524 = vld [vmem:[%s2313 + $0x1b1] sm:$0xff]
      %v2525 = vld [vmem:[%s2313 + $0x1b9] sm:$0xff]
      %v2526 = vld [vmem:[%s2313 + $0x1e1] sm:$0xff]
      %v2527 = vld [vmem:[%s2313 + $0x1e9] sm:$0xff]
      %v2528 = vld [vmem:[%s2313 + $0x211] sm:$0xff]
      %v2529 = vld [vmem:[%s2313 + $0x219] sm:$0xff]
      %v2530 = vld [vmem:[%s2313 + $0x241] sm:$0xff]
      %v2531 = vld [vmem:[%s2313 + $0x249] sm:$0xff]
      %v2532 = vld [vmem:[%s2313 + $0x271] sm:$0xff]
      %v2533 = vld [vmem:[%s2313 + $0x279] sm:$0xff]
      %v2534 = vld [vmem:[%s2313 + $0x2a1] sm:$0xff]
      %v2535 = vld [vmem:[%s2313 + $0x2a9] sm:$0xff]
      %v2536 = vld [vmem:[%s2313 + $0x2d1] sm:$0xff]
      %v2537 = vld [vmem:[%s2313 + $0x2d9] sm:$0xff]
      %2538 = vrot.lane.b32.xlu0 %v372, 60
      %v2539 = vpop.permute.xlu0 %2538
      %2540 = vrot.lane.b32.xlu0 %v377, 60
      %v2541 = vpop.permute.xlu0 %2540
      %2542 = vrot.lane.b32.xlu0 %v382, 60
      %v2543 = vpop.permute.xlu0 %2542
      %2544 = vrot.lane.b32.xlu0 %v387, 60
      %v2545 = vpop.permute.xlu0 %2544
      %2546 = vrot.lane.b32.xlu0 %v392, 60
      %v2547 = vpop.permute.xlu0 %2546
      %2548 = vrot.lane.b32.xlu0 %v397, 60
      %v2549 = vpop.permute.xlu0 %2548
      %2550 = vrot.lane.b32.xlu0 %v402, 60
      %v2551 = vpop.permute.xlu0 %2550
      %2552 = vrot.lane.b32.xlu0 %v407, 60
      %v2553 = vpop.permute.xlu0 %2552
      %2554 = vrot.lane.b32.xlu0 %v412, 60
      %v2555 = vpop.permute.xlu0 %2554
      %2556 = vrot.lane.b32.xlu0 %v417, 60
      %v2557 = vpop.permute.xlu0 %2556
      %2558 = vrot.lane.b32.xlu0 %v422, 60
      %v2559 = vpop.permute.xlu0 %2558
      %2560 = vrot.lane.b32.xlu0 %v427, 60
      %v2561 = vpop.permute.xlu0 %2560
      %2562 = vrot.lane.b32.xlu0 %v432, 60
      %v2563 = vpop.permute.xlu0 %2562
      %2564 = vrot.lane.b32.xlu0 %v437, 60
      %v2565 = vpop.permute.xlu0 %2564
      %2566 = vrot.lane.b32.xlu0 %v442, 60
      %v2567 = vpop.permute.xlu0 %2566
      %2568 = vrot.lane.b32.xlu0 %v447, 60
      %v2569 = vpop.permute.xlu0 %2568
      %2570 = vrot.lane.b32.xlu0 %v452, 60
      %v2571 = vpop.permute.xlu0 %2570
      %2572 = vrot.lane.b32.xlu0 %v457, 60
      %v2573 = vpop.permute.xlu0 %2572
      %2574 = vrot.lane.b32.xlu0 %v462, 60
      %v2575 = vpop.permute.xlu0 %2574
      %2576 = vrot.lane.b32.xlu0 %v467, 60
      %v2577 = vpop.permute.xlu0 %2576
      %2578 = vrot.lane.b32.xlu0 %v472, 60
      %v2579 = vpop.permute.xlu0 %2578
      %2580 = vrot.lane.b32.xlu0 %v477, 60
      %v2581 = vpop.permute.xlu0 %2580
      %2582 = vrot.lane.b32.xlu0 %v482, 60
      %v2583 = vpop.permute.xlu0 %2582
      %2584 = vrot.lane.b32.xlu0 %v487, 60
      %v2585 = vpop.permute.xlu0 %2584
      %2586 = vrot.lane.b32.xlu0 %v492, 60
      %v2587 = vpop.permute.xlu0 %2586
      %2588 = vrot.lane.b32.xlu0 %v497, 60
      %v2589 = vpop.permute.xlu0 %2588
      %2590 = vrot.lane.b32.xlu0 %v502, 60
      %v2591 = vpop.permute.xlu0 %2590
      %2592 = vrot.lane.b32.xlu0 %v507, 60
      %v2593 = vpop.permute.xlu0 %2592
      %2594 = vrot.lane.b32.xlu0 %v512, 60
      %v2595 = vpop.permute.xlu0 %2594
      %2596 = vrot.lane.b32.xlu0 %v517, 60
      %v2597 = vpop.permute.xlu0 %2596
      %2598 = vrot.lane.b32.xlu0 %v522, 60
      %v2599 = vpop.permute.xlu0 %2598
      %2600 = vrot.lane.b32.xlu0 %v527, 60
      %v2601 = vpop.permute.xlu0 %2600
      %v2634 = vadd.f32 %v2506, %v2539
      %v2635 = vadd.f32 %v2507, %v2541
      %v2636 = vadd.f32 %v2508, %v2543
      %v2637 = vadd.f32 %v2509, %v2545
      %v2638 = vadd.f32 %v2510, %v2547
      %v2639 = vadd.f32 %v2511, %v2549
      %v2640 = vadd.f32 %v2512, %v2551
      %v2641 = vadd.f32 %v2513, %v2553
      %v2642 = vadd.f32 %v2514, %v2555
      %v2643 = vadd.f32 %v2515, %v2557
      %v2644 = vadd.f32 %v2516, %v2559
      %v2645 = vadd.f32 %v2517, %v2561
      %v2646 = vadd.f32 %v2518, %v2563
      %v2647 = vadd.f32 %v2519, %v2565
      %v2648 = vadd.f32 %v2520, %v2567
      %v2649 = vadd.f32 %v2521, %v2569
      %v2650 = vadd.f32 %v2522, %v2571
      %v2651 = vadd.f32 %v2523, %v2573
      %v2652 = vadd.f32 %v2524, %v2575
      %v2653 = vadd.f32 %v2525, %v2577
      %v2654 = vadd.f32 %v2526, %v2579
      %v2655 = vadd.f32 %v2527, %v2581
      %v2656 = vadd.f32 %v2528, %v2583
      %v2657 = vadd.f32 %v2529, %v2585
      %v2658 = vadd.f32 %v2530, %v2587
      %v2659 = vadd.f32 %v2531, %v2589
      %v2660 = vadd.f32 %v2532, %v2591
      %v2661 = vadd.f32 %v2533, %v2593
      %v2662 = vadd.f32 %v2534, %v2595
      %v2663 = vadd.f32 %v2535, %v2597
      %v2664 = vadd.f32 %v2536, %v2599
      %v2665 = vadd.f32 %v2537, %v2601
      %2666 = vst.msk [vmem:[%s2313 + $0x1] sm:$0xff] %vm537, %v2634
      %2667 = vst.msk [vmem:[%s2313 + $0x9] sm:$0xff] %vm537, %v2635
      %2668 = vst.msk [vmem:[%s2313 + $0x31] sm:$0xff] %vm537, %v2636
      %2669 = vst.msk [vmem:[%s2313 + $0x39] sm:$0xff] %vm537, %v2637
      %2670 = vst.msk [vmem:[%s2313 + $0x61] sm:$0xff] %vm537, %v2638
      %2671 = vst.msk [vmem:[%s2313 + $0x69] sm:$0xff] %vm537, %v2639
      %2672 = vst.msk [vmem:[%s2313 + $0x91] sm:$0xff] %vm537, %v2640
      %2673 = vst.msk [vmem:[%s2313 + $0x99] sm:$0xff] %vm537, %v2641
      %2674 = vst.msk [vmem:[%s2313 + $0xc1] sm:$0xff] %vm537, %v2642
      %2675 = vst.msk [vmem:[%s2313 + $0xc9] sm:$0xff] %vm537, %v2643
      %2676 = vst.msk [vmem:[%s2313 + $0xf1] sm:$0xff] %vm537, %v2644
      %2677 = vst.msk [vmem:[%s2313 + $0xf9] sm:$0xff] %vm537, %v2645
      %2678 = vst.msk [vmem:[%s2313 + $0x121] sm:$0xff] %vm537, %v2646
      %2679 = vst.msk [vmem:[%s2313 + $0x129] sm:$0xff] %vm537, %v2647
      %2680 = vst.msk [vmem:[%s2313 + $0x151] sm:$0xff] %vm537, %v2648
      %2681 = vst.msk [vmem:[%s2313 + $0x159] sm:$0xff] %vm537, %v2649
      %2682 = vst.msk [vmem:[%s2313 + $0x181] sm:$0xff] %vm537, %v2650
      %2683 = vst.msk [vmem:[%s2313 + $0x189] sm:$0xff] %vm537, %v2651
      %2684 = vst.msk [vmem:[%s2313 + $0x1b1] sm:$0xff] %vm537, %v2652
      %2685 = vst.msk [vmem:[%s2313 + $0x1b9] sm:$0xff] %vm537, %v2653
      %2686 = vst.msk [vmem:[%s2313 + $0x1e1] sm:$0xff] %vm537, %v2654
      %2687 = vst.msk [vmem:[%s2313 + $0x1e9] sm:$0xff] %vm537, %v2655
      %2688 = vst.msk [vmem:[%s2313 + $0x211] sm:$0xff] %vm537, %v2656
      %2689 = vst.msk [vmem:[%s2313 + $0x219] sm:$0xff] %vm537, %v2657
      %2690 = vst.msk [vmem:[%s2313 + $0x241] sm:$0xff] %vm537, %v2658
      %2691 = vst.msk [vmem:[%s2313 + $0x249] sm:$0xff] %vm537, %v2659
      %2692 = vst.msk [vmem:[%s2313 + $0x271] sm:$0xff] %vm537, %v2660
      %2693 = vst.msk [vmem:[%s2313 + $0x279] sm:$0xff] %vm537, %v2661
      %2694 = vst.msk [vmem:[%s2313 + $0x2a1] sm:$0xff] %vm537, %v2662
      %2695 = vst.msk [vmem:[%s2313 + $0x2a9] sm:$0xff] %vm537, %v2663
      %2696 = vst.msk [vmem:[%s2313 + $0x2d1] sm:$0xff] %vm537, %v2664
      %2697 = vst.msk [vmem:[%s2313 + $0x2d9] sm:$0xff] %vm537, %v2665
      %v2698 = vld [vmem:[%s2313 + $0x2] sm:$0xff]
      %v2699 = vld [vmem:[%s2313 + $0xa] sm:$0xff]
      %v2700 = vld [vmem:[%s2313 + $0x32] sm:$0xff]
      %v2701 = vld [vmem:[%s2313 + $0x3a] sm:$0xff]
      %v2702 = vld [vmem:[%s2313 + $0x62] sm:$0xff]
      %v2703 = vld [vmem:[%s2313 + $0x6a] sm:$0xff]
      %v2704 = vld [vmem:[%s2313 + $0x92] sm:$0xff]
      %v2705 = vld [vmem:[%s2313 + $0x9a] sm:$0xff]
      %v2706 = vld [vmem:[%s2313 + $0xc2] sm:$0xff]
      %v2707 = vld [vmem:[%s2313 + $0xca] sm:$0xff]
      %v2708 = vld [vmem:[%s2313 + $0xf2] sm:$0xff]
      %v2709 = vld [vmem:[%s2313 + $0xfa] sm:$0xff]
      %v2710 = vld [vmem:[%s2313 + $0x122] sm:$0xff]
      %v2711 = vld [vmem:[%s2313 + $0x12a] sm:$0xff]
      %v2712 = vld [vmem:[%s2313 + $0x152] sm:$0xff]
      %v2713 = vld [vmem:[%s2313 + $0x15a] sm:$0xff]
      %v2714 = vld [vmem:[%s2313 + $0x182] sm:$0xff]
      %v2715 = vld [vmem:[%s2313 + $0x18a] sm:$0xff]
      %v2716 = vld [vmem:[%s2313 + $0x1b2] sm:$0xff]
      %v2717 = vld [vmem:[%s2313 + $0x1ba] sm:$0xff]
      %v2718 = vld [vmem:[%s2313 + $0x1e2] sm:$0xff]
      %v2719 = vld [vmem:[%s2313 + $0x1ea] sm:$0xff]
      %v2720 = vld [vmem:[%s2313 + $0x212] sm:$0xff]
      %v2721 = vld [vmem:[%s2313 + $0x21a] sm:$0xff]
      %v2722 = vld [vmem:[%s2313 + $0x242] sm:$0xff]
      %v2723 = vld [vmem:[%s2313 + $0x24a] sm:$0xff]
      %v2724 = vld [vmem:[%s2313 + $0x272] sm:$0xff]
      %v2725 = vld [vmem:[%s2313 + $0x27a] sm:$0xff]
      %v2726 = vld [vmem:[%s2313 + $0x2a2] sm:$0xff]
      %v2727 = vld [vmem:[%s2313 + $0x2aa] sm:$0xff]
      %v2728 = vld [vmem:[%s2313 + $0x2d2] sm:$0xff]
      %v2729 = vld [vmem:[%s2313 + $0x2da] sm:$0xff]
      %2730 = vrot.lane.b32.xlu0 %v372, 52
      %v2731 = vpop.permute.xlu0 %2730
      %2732 = vrot.lane.b32.xlu0 %v377, 52
      %v2733 = vpop.permute.xlu0 %2732
      %2734 = vrot.lane.b32.xlu0 %v382, 52
      %v2735 = vpop.permute.xlu0 %2734
      %2736 = vrot.lane.b32.xlu0 %v387, 52
      %v2737 = vpop.permute.xlu0 %2736
      %2738 = vrot.lane.b32.xlu0 %v392, 52
      %v2739 = vpop.permute.xlu0 %2738
      %2740 = vrot.lane.b32.xlu0 %v397, 52
      %v2741 = vpop.permute.xlu0 %2740
      %2742 = vrot.lane.b32.xlu0 %v402, 52
      %v2743 = vpop.permute.xlu0 %2742
      %2744 = vrot.lane.b32.xlu0 %v407, 52
      %v2745 = vpop.permute.xlu0 %2744
      %2746 = vrot.lane.b32.xlu0 %v412, 52
      %v2747 = vpop.permute.xlu0 %2746
      %2748 = vrot.lane.b32.xlu0 %v417, 52
      %v2749 = vpop.permute.xlu0 %2748
      %2750 = vrot.lane.b32.xlu0 %v422, 52
      %v2751 = vpop.permute.xlu0 %2750
      %2752 = vrot.lane.b32.xlu0 %v427, 52
      %v2753 = vpop.permute.xlu0 %2752
      %2754 = vrot.lane.b32.xlu0 %v432, 52
      %v2755 = vpop.permute.xlu0 %2754
      %2756 = vrot.lane.b32.xlu0 %v437, 52
      %v2757 = vpop.permute.xlu0 %2756
      %2758 = vrot.lane.b32.xlu0 %v442, 52
      %v2759 = vpop.permute.xlu0 %2758
      %2760 = vrot.lane.b32.xlu0 %v447, 52
      %v2761 = vpop.permute.xlu0 %2760
      %2762 = vrot.lane.b32.xlu0 %v452, 52
      %v2763 = vpop.permute.xlu0 %2762
      %2764 = vrot.lane.b32.xlu0 %v457, 52
      %v2765 = vpop.permute.xlu0 %2764
      %2766 = vrot.lane.b32.xlu0 %v462, 52
      %v2767 = vpop.permute.xlu0 %2766
      %2768 = vrot.lane.b32.xlu0 %v467, 52
      %v2769 = vpop.permute.xlu0 %2768
      %2770 = vrot.lane.b32.xlu0 %v472, 52
      %v2771 = vpop.permute.xlu0 %2770
      %2772 = vrot.lane.b32.xlu0 %v477, 52
      %v2773 = vpop.permute.xlu0 %2772
      %2774 = vrot.lane.b32.xlu0 %v482, 52
      %v2775 = vpop.permute.xlu0 %2774
      %2776 = vrot.lane.b32.xlu0 %v487, 52
      %v2777 = vpop.permute.xlu0 %2776
      %2778 = vrot.lane.b32.xlu0 %v492, 52
      %v2779 = vpop.permute.xlu0 %2778
      %2780 = vrot.lane.b32.xlu0 %v497, 52
      %v2781 = vpop.permute.xlu0 %2780
      %2782 = vrot.lane.b32.xlu0 %v502, 52
      %v2783 = vpop.permute.xlu0 %2782
      %2784 = vrot.lane.b32.xlu0 %v507, 52
      %v2785 = vpop.permute.xlu0 %2784
      %2786 = vrot.lane.b32.xlu0 %v512, 52
      %v2787 = vpop.permute.xlu0 %2786
      %2788 = vrot.lane.b32.xlu0 %v517, 52
      %v2789 = vpop.permute.xlu0 %2788
      %2790 = vrot.lane.b32.xlu0 %v522, 52
      %v2791 = vpop.permute.xlu0 %2790
      %2792 = vrot.lane.b32.xlu0 %v527, 52
      %v2793 = vpop.permute.xlu0 %2792
      %v2826 = vadd.f32 %v2698, %v2731
      %v2827 = vadd.f32 %v2699, %v2733
      %v2828 = vadd.f32 %v2700, %v2735
      %v2829 = vadd.f32 %v2701, %v2737
      %v2830 = vadd.f32 %v2702, %v2739
      %v2831 = vadd.f32 %v2703, %v2741
      %v2832 = vadd.f32 %v2704, %v2743
      %v2833 = vadd.f32 %v2705, %v2745
      %v2834 = vadd.f32 %v2706, %v2747
      %v2835 = vadd.f32 %v2707, %v2749
      %v2836 = vadd.f32 %v2708, %v2751
      %v2837 = vadd.f32 %v2709, %v2753
      %v2838 = vadd.f32 %v2710, %v2755
      %v2839 = vadd.f32 %v2711, %v2757
      %v2840 = vadd.f32 %v2712, %v2759
      %v2841 = vadd.f32 %v2713, %v2761
      %v2842 = vadd.f32 %v2714, %v2763
      %v2843 = vadd.f32 %v2715, %v2765
      %v2844 = vadd.f32 %v2716, %v2767
      %v2845 = vadd.f32 %v2717, %v2769
      %v2846 = vadd.f32 %v2718, %v2771
      %v2847 = vadd.f32 %v2719, %v2773
      %v2848 = vadd.f32 %v2720, %v2775
      %v2849 = vadd.f32 %v2721, %v2777
      %v2850 = vadd.f32 %v2722, %v2779
      %v2851 = vadd.f32 %v2723, %v2781
      %v2852 = vadd.f32 %v2724, %v2783
      %v2853 = vadd.f32 %v2725, %v2785
      %v2854 = vadd.f32 %v2726, %v2787
      %v2855 = vadd.f32 %v2727, %v2789
      %v2856 = vadd.f32 %v2728, %v2791
      %v2857 = vadd.f32 %v2729, %v2793
      %2858 = vst.msk [vmem:[%s2313 + $0x2] sm:$0xff] %vm204, %v2826
      %2859 = vst.msk [vmem:[%s2313 + $0xa] sm:$0xff] %vm204, %v2827
      %2860 = vst.msk [vmem:[%s2313 + $0x32] sm:$0xff] %vm204, %v2828
      %2861 = vst.msk [vmem:[%s2313 + $0x3a] sm:$0xff] %vm204, %v2829
      %2862 = vst.msk [vmem:[%s2313 + $0x62] sm:$0xff] %vm204, %v2830
      %2863 = vst.msk [vmem:[%s2313 + $0x6a] sm:$0xff] %vm204, %v2831
      %2864 = vst.msk [vmem:[%s2313 + $0x92] sm:$0xff] %vm204, %v2832
      %2865 = vst.msk [vmem:[%s2313 + $0x9a] sm:$0xff] %vm204, %v2833
      %2866 = vst.msk [vmem:[%s2313 + $0xc2] sm:$0xff] %vm204, %v2834
      %2867 = vst.msk [vmem:[%s2313 + $0xca] sm:$0xff] %vm204, %v2835
      %2868 = vst.msk [vmem:[%s2313 + $0xf2] sm:$0xff] %vm204, %v2836
      %2869 = vst.msk [vmem:[%s2313 + $0xfa] sm:$0xff] %vm204, %v2837
      %2870 = vst.msk [vmem:[%s2313 + $0x122] sm:$0xff] %vm204, %v2838
      %2871 = vst.msk [vmem:[%s2313 + $0x12a] sm:$0xff] %vm204, %v2839
      %2872 = vst.msk [vmem:[%s2313 + $0x152] sm:$0xff] %vm204, %v2840
      %2873 = vst.msk [vmem:[%s2313 + $0x15a] sm:$0xff] %vm204, %v2841
      %2874 = vst.msk [vmem:[%s2313 + $0x182] sm:$0xff] %vm204, %v2842
      %2875 = vst.msk [vmem:[%s2313 + $0x18a] sm:$0xff] %vm204, %v2843
      %2876 = vst.msk [vmem:[%s2313 + $0x1b2] sm:$0xff] %vm204, %v2844
      %2877 = vst.msk [vmem:[%s2313 + $0x1ba] sm:$0xff] %vm204, %v2845
      %2878 = vst.msk [vmem:[%s2313 + $0x1e2] sm:$0xff] %vm204, %v2846
      %2879 = vst.msk [vmem:[%s2313 + $0x1ea] sm:$0xff] %vm204, %v2847
      %2880 = vst.msk [vmem:[%s2313 + $0x212] sm:$0xff] %vm204, %v2848
      %2881 = vst.msk [vmem:[%s2313 + $0x21a] sm:$0xff] %vm204, %v2849
      %2882 = vst.msk [vmem:[%s2313 + $0x242] sm:$0xff] %vm204, %v2850
      %2883 = vst.msk [vmem:[%s2313 + $0x24a] sm:$0xff] %vm204, %v2851
      %2884 = vst.msk [vmem:[%s2313 + $0x272] sm:$0xff] %vm204, %v2852
      %2885 = vst.msk [vmem:[%s2313 + $0x27a] sm:$0xff] %vm204, %v2853
      %2886 = vst.msk [vmem:[%s2313 + $0x2a2] sm:$0xff] %vm204, %v2854
      %2887 = vst.msk [vmem:[%s2313 + $0x2aa] sm:$0xff] %vm204, %v2855
      %2888 = vst.msk [vmem:[%s2313 + $0x2d2] sm:$0xff] %vm204, %v2856
      %2889 = vst.msk [vmem:[%s2313 + $0x2da] sm:$0xff] %vm204, %v2857
      %s2890 = scalar_lea.vmem %s170, 96
      %v2891 = vld [vmem:[%s2890] sm:$0xff]
      %v2892 = vld [vmem:[%s2890 + $0x8] sm:$0xff]
      %v2893 = vld [vmem:[%s2890 + $0x30] sm:$0xff]
      %v2894 = vld [vmem:[%s2890 + $0x38] sm:$0xff]
      %v2895 = vld [vmem:[%s2890 + $0x60] sm:$0xff]
      %v2896 = vld [vmem:[%s2890 + $0x68] sm:$0xff]
      %v2897 = vld [vmem:[%s2890 + $0x90] sm:$0xff]
      %v2898 = vld [vmem:[%s2890 + $0x98] sm:$0xff]
      %v2899 = vld [vmem:[%s2890 + $0xc0] sm:$0xff]
      %v2900 = vld [vmem:[%s2890 + $0xc8] sm:$0xff]
      %v2901 = vld [vmem:[%s2890 + $0xf0] sm:$0xff]
      %v2902 = vld [vmem:[%s2890 + $0xf8] sm:$0xff]
      %v2903 = vld [vmem:[%s2890 + $0x120] sm:$0xff]
      %v2904 = vld [vmem:[%s2890 + $0x128] sm:$0xff]
      %v2905 = vld [vmem:[%s2890 + $0x150] sm:$0xff]
      %v2906 = vld [vmem:[%s2890 + $0x158] sm:$0xff]
      %v2907 = vld [vmem:[%s2890 + $0x180] sm:$0xff]
      %v2908 = vld [vmem:[%s2890 + $0x188] sm:$0xff]
      %v2909 = vld [vmem:[%s2890 + $0x1b0] sm:$0xff]
      %v2910 = vld [vmem:[%s2890 + $0x1b8] sm:$0xff]
      %v2911 = vld [vmem:[%s2890 + $0x1e0] sm:$0xff]
      %v2912 = vld [vmem:[%s2890 + $0x1e8] sm:$0xff]
      %v2913 = vld [vmem:[%s2890 + $0x210] sm:$0xff]
      %v2914 = vld [vmem:[%s2890 + $0x218] sm:$0xff]
      %v2915 = vld [vmem:[%s2890 + $0x240] sm:$0xff]
      %v2916 = vld [vmem:[%s2890 + $0x248] sm:$0xff]
      %v2917 = vld [vmem:[%s2890 + $0x270] sm:$0xff]
      %v2918 = vld [vmem:[%s2890 + $0x278] sm:$0xff]
      %v2919 = vld [vmem:[%s2890 + $0x2a0] sm:$0xff]
      %v2920 = vld [vmem:[%s2890 + $0x2a8] sm:$0xff]
      %v2921 = vld [vmem:[%s2890 + $0x2d0] sm:$0xff]
      %v2922 = vld [vmem:[%s2890 + $0x2d8] sm:$0xff]
      %2923 = vrot.lane.b32.xlu0 %v372, 48
      %v2924 = vpop.permute.xlu0 %2923
      %2925 = vrot.lane.b32.xlu0 %v377, 48
      %v2926 = vpop.permute.xlu0 %2925
      %2927 = vrot.lane.b32.xlu0 %v382, 48
      %v2928 = vpop.permute.xlu0 %2927
      %2929 = vrot.lane.b32.xlu0 %v387, 48
      %v2930 = vpop.permute.xlu0 %2929
      %2931 = vrot.lane.b32.xlu0 %v392, 48
      %v2932 = vpop.permute.xlu0 %2931
      %2933 = vrot.lane.b32.xlu0 %v397, 48
      %v2934 = vpop.permute.xlu0 %2933
      %2935 = vrot.lane.b32.xlu0 %v402, 48
      %v2936 = vpop.permute.xlu0 %2935
      %2937 = vrot.lane.b32.xlu0 %v407, 48
      %v2938 = vpop.permute.xlu0 %2937
      %2939 = vrot.lane.b32.xlu0 %v412, 48
      %v2940 = vpop.permute.xlu0 %2939
      %2941 = vrot.lane.b32.xlu0 %v417, 48
      %v2942 = vpop.permute.xlu0 %2941
      %2943 = vrot.lane.b32.xlu0 %v422, 48
      %v2944 = vpop.permute.xlu0 %2943
      %2945 = vrot.lane.b32.xlu0 %v427, 48
      %v2946 = vpop.permute.xlu0 %2945
      %2947 = vrot.lane.b32.xlu0 %v432, 48
      %v2948 = vpop.permute.xlu0 %2947
      %2949 = vrot.lane.b32.xlu0 %v437, 48
      %v2950 = vpop.permute.xlu0 %2949
      %2951 = vrot.lane.b32.xlu0 %v442, 48
      %v2952 = vpop.permute.xlu0 %2951
      %2953 = vrot.lane.b32.xlu0 %v447, 48
      %v2954 = vpop.permute.xlu0 %2953
      %2955 = vrot.lane.b32.xlu0 %v452, 48
      %v2956 = vpop.permute.xlu0 %2955
      %2957 = vrot.lane.b32.xlu0 %v457, 48
      %v2958 = vpop.permute.xlu0 %2957
      %2959 = vrot.lane.b32.xlu0 %v462, 48
      %v2960 = vpop.permute.xlu0 %2959
      %2961 = vrot.lane.b32.xlu0 %v467, 48
      %v2962 = vpop.permute.xlu0 %2961
      %2963 = vrot.lane.b32.xlu0 %v472, 48
      %v2964 = vpop.permute.xlu0 %2963
      %2965 = vrot.lane.b32.xlu0 %v477, 48
      %v2966 = vpop.permute.xlu0 %2965
      %2967 = vrot.lane.b32.xlu0 %v482, 48
      %v2968 = vpop.permute.xlu0 %2967
      %2969 = vrot.lane.b32.xlu0 %v487, 48
      %v2970 = vpop.permute.xlu0 %2969
      %2971 = vrot.lane.b32.xlu0 %v492, 48
      %v2972 = vpop.permute.xlu0 %2971
      %2973 = vrot.lane.b32.xlu0 %v497, 48
      %v2974 = vpop.permute.xlu0 %2973
      %2975 = vrot.lane.b32.xlu0 %v502, 48
      %v2976 = vpop.permute.xlu0 %2975
      %2977 = vrot.lane.b32.xlu0 %v507, 48
      %v2978 = vpop.permute.xlu0 %2977
      %2979 = vrot.lane.b32.xlu0 %v512, 48
      %v2980 = vpop.permute.xlu0 %2979
      %2981 = vrot.lane.b32.xlu0 %v517, 48
      %v2982 = vpop.permute.xlu0 %2981
      %2983 = vrot.lane.b32.xlu0 %v522, 48
      %v2984 = vpop.permute.xlu0 %2983
      %2985 = vrot.lane.b32.xlu0 %v527, 48
      %v2986 = vpop.permute.xlu0 %2985
      %v3019 = vadd.f32 %v2891, %v2924
      %v3020 = vadd.f32 %v2892, %v2926
      %v3021 = vadd.f32 %v2893, %v2928
      %v3022 = vadd.f32 %v2894, %v2930
      %v3023 = vadd.f32 %v2895, %v2932
      %v3024 = vadd.f32 %v2896, %v2934
      %v3025 = vadd.f32 %v2897, %v2936
      %v3026 = vadd.f32 %v2898, %v2938
      %v3027 = vadd.f32 %v2899, %v2940
      %v3028 = vadd.f32 %v2900, %v2942
      %v3029 = vadd.f32 %v2901, %v2944
      %v3030 = vadd.f32 %v2902, %v2946
      %v3031 = vadd.f32 %v2903, %v2948
      %v3032 = vadd.f32 %v2904, %v2950
      %v3033 = vadd.f32 %v2905, %v2952
      %v3034 = vadd.f32 %v2906, %v2954
      %v3035 = vadd.f32 %v2907, %v2956
      %v3036 = vadd.f32 %v2908, %v2958
      %v3037 = vadd.f32 %v2909, %v2960
      %v3038 = vadd.f32 %v2910, %v2962
      %v3039 = vadd.f32 %v2911, %v2964
      %v3040 = vadd.f32 %v2912, %v2966
      %v3041 = vadd.f32 %v2913, %v2968
      %v3042 = vadd.f32 %v2914, %v2970
      %v3043 = vadd.f32 %v2915, %v2972
      %v3044 = vadd.f32 %v2916, %v2974
      %v3045 = vadd.f32 %v2917, %v2976
      %v3046 = vadd.f32 %v2918, %v2978
      %v3047 = vadd.f32 %v2919, %v2980
      %v3048 = vadd.f32 %v2920, %v2982
      %v3049 = vadd.f32 %v2921, %v2984
      %v3050 = vadd.f32 %v2922, %v2986
      %3051 = vst.msk [vmem:[%s2890] sm:$0xff] %vm537, %v3019
      %3052 = vst.msk [vmem:[%s2890 + $0x8] sm:$0xff] %vm537, %v3020
      %3053 = vst.msk [vmem:[%s2890 + $0x30] sm:$0xff] %vm537, %v3021
      %3054 = vst.msk [vmem:[%s2890 + $0x38] sm:$0xff] %vm537, %v3022
      %3055 = vst.msk [vmem:[%s2890 + $0x60] sm:$0xff] %vm537, %v3023
      %3056 = vst.msk [vmem:[%s2890 + $0x68] sm:$0xff] %vm537, %v3024
      %3057 = vst.msk [vmem:[%s2890 + $0x90] sm:$0xff] %vm537, %v3025
      %3058 = vst.msk [vmem:[%s2890 + $0x98] sm:$0xff] %vm537, %v3026
      %3059 = vst.msk [vmem:[%s2890 + $0xc0] sm:$0xff] %vm537, %v3027
      %3060 = vst.msk [vmem:[%s2890 + $0xc8] sm:$0xff] %vm537, %v3028
      %3061 = vst.msk [vmem:[%s2890 + $0xf0] sm:$0xff] %vm537, %v3029
      %3062 = vst.msk [vmem:[%s2890 + $0xf8] sm:$0xff] %vm537, %v3030
      %3063 = vst.msk [vmem:[%s2890 + $0x120] sm:$0xff] %vm537, %v3031
      %3064 = vst.msk [vmem:[%s2890 + $0x128] sm:$0xff] %vm537, %v3032
      %3065 = vst.msk [vmem:[%s2890 + $0x150] sm:$0xff] %vm537, %v3033
      %3066 = vst.msk [vmem:[%s2890 + $0x158] sm:$0xff] %vm537, %v3034
      %3067 = vst.msk [vmem:[%s2890 + $0x180] sm:$0xff] %vm537, %v3035
      %3068 = vst.msk [vmem:[%s2890 + $0x188] sm:$0xff] %vm537, %v3036
      %3069 = vst.msk [vmem:[%s2890 + $0x1b0] sm:$0xff] %vm537, %v3037
      %3070 = vst.msk [vmem:[%s2890 + $0x1b8] sm:$0xff] %vm537, %v3038
      %3071 = vst.msk [vmem:[%s2890 + $0x1e0] sm:$0xff] %vm537, %v3039
      %3072 = vst.msk [vmem:[%s2890 + $0x1e8] sm:$0xff] %vm537, %v3040
      %3073 = vst.msk [vmem:[%s2890 + $0x210] sm:$0xff] %vm537, %v3041
      %3074 = vst.msk [vmem:[%s2890 + $0x218] sm:$0xff] %vm537, %v3042
      %3075 = vst.msk [vmem:[%s2890 + $0x240] sm:$0xff] %vm537, %v3043
      %3076 = vst.msk [vmem:[%s2890 + $0x248] sm:$0xff] %vm537, %v3044
      %3077 = vst.msk [vmem:[%s2890 + $0x270] sm:$0xff] %vm537, %v3045
      %3078 = vst.msk [vmem:[%s2890 + $0x278] sm:$0xff] %vm537, %v3046
      %3079 = vst.msk [vmem:[%s2890 + $0x2a0] sm:$0xff] %vm537, %v3047
      %3080 = vst.msk [vmem:[%s2890 + $0x2a8] sm:$0xff] %vm537, %v3048
      %3081 = vst.msk [vmem:[%s2890 + $0x2d0] sm:$0xff] %vm537, %v3049
      %3082 = vst.msk [vmem:[%s2890 + $0x2d8] sm:$0xff] %vm537, %v3050
      %v3083 = vld [vmem:[%s2890 + $0x1] sm:$0xff]
      %v3084 = vld [vmem:[%s2890 + $0x9] sm:$0xff]
      %v3085 = vld [vmem:[%s2890 + $0x31] sm:$0xff]
      %v3086 = vld [vmem:[%s2890 + $0x39] sm:$0xff]
      %v3087 = vld [vmem:[%s2890 + $0x61] sm:$0xff]
      %v3088 = vld [vmem:[%s2890 + $0x69] sm:$0xff]
      %v3089 = vld [vmem:[%s2890 + $0x91] sm:$0xff]
      %v3090 = vld [vmem:[%s2890 + $0x99] sm:$0xff]
      %v3091 = vld [vmem:[%s2890 + $0xc1] sm:$0xff]
      %v3092 = vld [vmem:[%s2890 + $0xc9] sm:$0xff]
      %v3093 = vld [vmem:[%s2890 + $0xf1] sm:$0xff]
      %v3094 = vld [vmem:[%s2890 + $0xf9] sm:$0xff]
      %v3095 = vld [vmem:[%s2890 + $0x121] sm:$0xff]
      %v3096 = vld [vmem:[%s2890 + $0x129] sm:$0xff]
      %v3097 = vld [vmem:[%s2890 + $0x151] sm:$0xff]
      %v3098 = vld [vmem:[%s2890 + $0x159] sm:$0xff]
      %v3099 = vld [vmem:[%s2890 + $0x181] sm:$0xff]
      %v3100 = vld [vmem:[%s2890 + $0x189] sm:$0xff]
      %v3101 = vld [vmem:[%s2890 + $0x1b1] sm:$0xff]
      %v3102 = vld [vmem:[%s2890 + $0x1b9] sm:$0xff]
      %v3103 = vld [vmem:[%s2890 + $0x1e1] sm:$0xff]
      %v3104 = vld [vmem:[%s2890 + $0x1e9] sm:$0xff]
      %v3105 = vld [vmem:[%s2890 + $0x211] sm:$0xff]
      %v3106 = vld [vmem:[%s2890 + $0x219] sm:$0xff]
      %v3107 = vld [vmem:[%s2890 + $0x241] sm:$0xff]
      %v3108 = vld [vmem:[%s2890 + $0x249] sm:$0xff]
      %v3109 = vld [vmem:[%s2890 + $0x271] sm:$0xff]
      %v3110 = vld [vmem:[%s2890 + $0x279] sm:$0xff]
      %v3111 = vld [vmem:[%s2890 + $0x2a1] sm:$0xff]
      %v3112 = vld [vmem:[%s2890 + $0x2a9] sm:$0xff]
      %v3113 = vld [vmem:[%s2890 + $0x2d1] sm:$0xff]
      %v3114 = vld [vmem:[%s2890 + $0x2d9] sm:$0xff]
      %3115 = vrot.lane.b32.xlu0 %v372, 40
      %v3116 = vpop.permute.xlu0 %3115
      %3117 = vrot.lane.b32.xlu0 %v377, 40
      %v3118 = vpop.permute.xlu0 %3117
      %3119 = vrot.lane.b32.xlu0 %v382, 40
      %v3120 = vpop.permute.xlu0 %3119
      %3121 = vrot.lane.b32.xlu0 %v387, 40
      %v3122 = vpop.permute.xlu0 %3121
      %3123 = vrot.lane.b32.xlu0 %v392, 40
      %v3124 = vpop.permute.xlu0 %3123
      %3125 = vrot.lane.b32.xlu0 %v397, 40
      %v3126 = vpop.permute.xlu0 %3125
      %3127 = vrot.lane.b32.xlu0 %v402, 40
      %v3128 = vpop.permute.xlu0 %3127
      %3129 = vrot.lane.b32.xlu0 %v407, 40
      %v3130 = vpop.permute.xlu0 %3129
      %3131 = vrot.lane.b32.xlu0 %v412, 40
      %v3132 = vpop.permute.xlu0 %3131
      %3133 = vrot.lane.b32.xlu0 %v417, 40
      %v3134 = vpop.permute.xlu0 %3133
      %3135 = vrot.lane.b32.xlu0 %v422, 40
      %v3136 = vpop.permute.xlu0 %3135
      %3137 = vrot.lane.b32.xlu0 %v427, 40
      %v3138 = vpop.permute.xlu0 %3137
      %3139 = vrot.lane.b32.xlu0 %v432, 40
      %v3140 = vpop.permute.xlu0 %3139
      %3141 = vrot.lane.b32.xlu0 %v437, 40
      %v3142 = vpop.permute.xlu0 %3141
      %3143 = vrot.lane.b32.xlu0 %v442, 40
      %v3144 = vpop.permute.xlu0 %3143
      %3145 = vrot.lane.b32.xlu0 %v447, 40
      %v3146 = vpop.permute.xlu0 %3145
      %3147 = vrot.lane.b32.xlu0 %v452, 40
      %v3148 = vpop.permute.xlu0 %3147
      %3149 = vrot.lane.b32.xlu0 %v457, 40
      %v3150 = vpop.permute.xlu0 %3149
      %3151 = vrot.lane.b32.xlu0 %v462, 40
      %v3152 = vpop.permute.xlu0 %3151
      %3153 = vrot.lane.b32.xlu0 %v467, 40
      %v3154 = vpop.permute.xlu0 %3153
      %3155 = vrot.lane.b32.xlu0 %v472, 40
      %v3156 = vpop.permute.xlu0 %3155
      %3157 = vrot.lane.b32.xlu0 %v477, 40
      %v3158 = vpop.permute.xlu0 %3157
      %3159 = vrot.lane.b32.xlu0 %v482, 40
      %v3160 = vpop.permute.xlu0 %3159
      %3161 = vrot.lane.b32.xlu0 %v487, 40
      %v3162 = vpop.permute.xlu0 %3161
      %3163 = vrot.lane.b32.xlu0 %v492, 40
      %v3164 = vpop.permute.xlu0 %3163
      %3165 = vrot.lane.b32.xlu0 %v497, 40
      %v3166 = vpop.permute.xlu0 %3165
      %3167 = vrot.lane.b32.xlu0 %v502, 40
      %v3168 = vpop.permute.xlu0 %3167
      %3169 = vrot.lane.b32.xlu0 %v507, 40
      %v3170 = vpop.permute.xlu0 %3169
      %3171 = vrot.lane.b32.xlu0 %v512, 40
      %v3172 = vpop.permute.xlu0 %3171
      %3173 = vrot.lane.b32.xlu0 %v517, 40
      %v3174 = vpop.permute.xlu0 %3173
      %3175 = vrot.lane.b32.xlu0 %v522, 40
      %v3176 = vpop.permute.xlu0 %3175
      %3177 = vrot.lane.b32.xlu0 %v527, 40
      %v3178 = vpop.permute.xlu0 %3177
      %v3211 = vadd.f32 %v3083, %v3116
      %v3212 = vadd.f32 %v3084, %v3118
      %v3213 = vadd.f32 %v3085, %v3120
      %v3214 = vadd.f32 %v3086, %v3122
      %v3215 = vadd.f32 %v3087, %v3124
      %v3216 = vadd.f32 %v3088, %v3126
      %v3217 = vadd.f32 %v3089, %v3128
      %v3218 = vadd.f32 %v3090, %v3130
      %v3219 = vadd.f32 %v3091, %v3132
      %v3220 = vadd.f32 %v3092, %v3134
      %v3221 = vadd.f32 %v3093, %v3136
      %v3222 = vadd.f32 %v3094, %v3138
      %v3223 = vadd.f32 %v3095, %v3140
      %v3224 = vadd.f32 %v3096, %v3142
      %v3225 = vadd.f32 %v3097, %v3144
      %v3226 = vadd.f32 %v3098, %v3146
      %v3227 = vadd.f32 %v3099, %v3148
      %v3228 = vadd.f32 %v3100, %v3150
      %v3229 = vadd.f32 %v3101, %v3152
      %v3230 = vadd.f32 %v3102, %v3154
      %v3231 = vadd.f32 %v3103, %v3156
      %v3232 = vadd.f32 %v3104, %v3158
      %v3233 = vadd.f32 %v3105, %v3160
      %v3234 = vadd.f32 %v3106, %v3162
      %v3235 = vadd.f32 %v3107, %v3164
      %v3236 = vadd.f32 %v3108, %v3166
      %v3237 = vadd.f32 %v3109, %v3168
      %v3238 = vadd.f32 %v3110, %v3170
      %v3239 = vadd.f32 %v3111, %v3172
      %v3240 = vadd.f32 %v3112, %v3174
      %v3241 = vadd.f32 %v3113, %v3176
      %v3242 = vadd.f32 %v3114, %v3178
      %3243 = vst.msk [vmem:[%s2890 + $0x1] sm:$0xff] %vm537, %v3211
      %3244 = vst.msk [vmem:[%s2890 + $0x9] sm:$0xff] %vm537, %v3212
      %3245 = vst.msk [vmem:[%s2890 + $0x31] sm:$0xff] %vm537, %v3213
      %3246 = vst.msk [vmem:[%s2890 + $0x39] sm:$0xff] %vm537, %v3214
      %3247 = vst.msk [vmem:[%s2890 + $0x61] sm:$0xff] %vm537, %v3215
      %3248 = vst.msk [vmem:[%s2890 + $0x69] sm:$0xff] %vm537, %v3216
      %3249 = vst.msk [vmem:[%s2890 + $0x91] sm:$0xff] %vm537, %v3217
      %3250 = vst.msk [vmem:[%s2890 + $0x99] sm:$0xff] %vm537, %v3218
      %3251 = vst.msk [vmem:[%s2890 + $0xc1] sm:$0xff] %vm537, %v3219
      %3252 = vst.msk [vmem:[%s2890 + $0xc9] sm:$0xff] %vm537, %v3220
      %3253 = vst.msk [vmem:[%s2890 + $0xf1] sm:$0xff] %vm537, %v3221
      %3254 = vst.msk [vmem:[%s2890 + $0xf9] sm:$0xff] %vm537, %v3222
      %3255 = vst.msk [vmem:[%s2890 + $0x121] sm:$0xff] %vm537, %v3223
      %3256 = vst.msk [vmem:[%s2890 + $0x129] sm:$0xff] %vm537, %v3224
      %3257 = vst.msk [vmem:[%s2890 + $0x151] sm:$0xff] %vm537, %v3225
      %3258 = vst.msk [vmem:[%s2890 + $0x159] sm:$0xff] %vm537, %v3226
      %3259 = vst.msk [vmem:[%s2890 + $0x181] sm:$0xff] %vm537, %v3227
      %3260 = vst.msk [vmem:[%s2890 + $0x189] sm:$0xff] %vm537, %v3228
      %3261 = vst.msk [vmem:[%s2890 + $0x1b1] sm:$0xff] %vm537, %v3229
      %3262 = vst.msk [vmem:[%s2890 + $0x1b9] sm:$0xff] %vm537, %v3230
      %3263 = vst.msk [vmem:[%s2890 + $0x1e1] sm:$0xff] %vm537, %v3231
      %3264 = vst.msk [vmem:[%s2890 + $0x1e9] sm:$0xff] %vm537, %v3232
      %3265 = vst.msk [vmem:[%s2890 + $0x211] sm:$0xff] %vm537, %v3233
      %3266 = vst.msk [vmem:[%s2890 + $0x219] sm:$0xff] %vm537, %v3234
      %3267 = vst.msk [vmem:[%s2890 + $0x241] sm:$0xff] %vm537, %v3235
      %3268 = vst.msk [vmem:[%s2890 + $0x249] sm:$0xff] %vm537, %v3236
      %3269 = vst.msk [vmem:[%s2890 + $0x271] sm:$0xff] %vm537, %v3237
      %3270 = vst.msk [vmem:[%s2890 + $0x279] sm:$0xff] %vm537, %v3238
      %3271 = vst.msk [vmem:[%s2890 + $0x2a1] sm:$0xff] %vm537, %v3239
      %3272 = vst.msk [vmem:[%s2890 + $0x2a9] sm:$0xff] %vm537, %v3240
      %3273 = vst.msk [vmem:[%s2890 + $0x2d1] sm:$0xff] %vm537, %v3241
      %3274 = vst.msk [vmem:[%s2890 + $0x2d9] sm:$0xff] %vm537, %v3242
      %v3275 = vld [vmem:[%s2890 + $0x2] sm:$0xff]
      %v3276 = vld [vmem:[%s2890 + $0xa] sm:$0xff]
      %v3277 = vld [vmem:[%s2890 + $0x32] sm:$0xff]
      %v3278 = vld [vmem:[%s2890 + $0x3a] sm:$0xff]
      %v3279 = vld [vmem:[%s2890 + $0x62] sm:$0xff]
      %v3280 = vld [vmem:[%s2890 + $0x6a] sm:$0xff]
      %v3281 = vld [vmem:[%s2890 + $0x92] sm:$0xff]
      %v3282 = vld [vmem:[%s2890 + $0x9a] sm:$0xff]
      %v3283 = vld [vmem:[%s2890 + $0xc2] sm:$0xff]
      %v3284 = vld [vmem:[%s2890 + $0xca] sm:$0xff]
      %v3285 = vld [vmem:[%s2890 + $0xf2] sm:$0xff]
      %v3286 = vld [vmem:[%s2890 + $0xfa] sm:$0xff]
      %v3287 = vld [vmem:[%s2890 + $0x122] sm:$0xff]
      %v3288 = vld [vmem:[%s2890 + $0x12a] sm:$0xff]
      %v3289 = vld [vmem:[%s2890 + $0x152] sm:$0xff]
      %v3290 = vld [vmem:[%s2890 + $0x15a] sm:$0xff]
      %v3291 = vld [vmem:[%s2890 + $0x182] sm:$0xff]
      %v3292 = vld [vmem:[%s2890 + $0x18a] sm:$0xff]
      %v3293 = vld [vmem:[%s2890 + $0x1b2] sm:$0xff]
      %v3294 = vld [vmem:[%s2890 + $0x1ba] sm:$0xff]
      %v3295 = vld [vmem:[%s2890 + $0x1e2] sm:$0xff]
      %v3296 = vld [vmem:[%s2890 + $0x1ea] sm:$0xff]
      %v3297 = vld [vmem:[%s2890 + $0x212] sm:$0xff]
      %v3298 = vld [vmem:[%s2890 + $0x21a] sm:$0xff]
      %v3299 = vld [vmem:[%s2890 + $0x242] sm:$0xff]
      %v3300 = vld [vmem:[%s2890 + $0x24a] sm:$0xff]
      %v3301 = vld [vmem:[%s2890 + $0x272] sm:$0xff]
      %v3302 = vld [vmem:[%s2890 + $0x27a] sm:$0xff]
      %v3303 = vld [vmem:[%s2890 + $0x2a2] sm:$0xff]
      %v3304 = vld [vmem:[%s2890 + $0x2aa] sm:$0xff]
      %v3305 = vld [vmem:[%s2890 + $0x2d2] sm:$0xff]
      %v3306 = vld [vmem:[%s2890 + $0x2da] sm:$0xff]
      %3307 = vrot.lane.b32.xlu0 %v372, 32
      %v3308 = vpop.permute.xlu0 %3307
      %3309 = vrot.lane.b32.xlu0 %v377, 32
      %v3310 = vpop.permute.xlu0 %3309
      %3311 = vrot.lane.b32.xlu0 %v382, 32
      %v3312 = vpop.permute.xlu0 %3311
      %3313 = vrot.lane.b32.xlu0 %v387, 32
      %v3314 = vpop.permute.xlu0 %3313
      %3315 = vrot.lane.b32.xlu0 %v392, 32
      %v3316 = vpop.permute.xlu0 %3315
      %3317 = vrot.lane.b32.xlu0 %v397, 32
      %v3318 = vpop.permute.xlu0 %3317
      %3319 = vrot.lane.b32.xlu0 %v402, 32
      %v3320 = vpop.permute.xlu0 %3319
      %3321 = vrot.lane.b32.xlu0 %v407, 32
      %v3322 = vpop.permute.xlu0 %3321
      %3323 = vrot.lane.b32.xlu0 %v412, 32
      %v3324 = vpop.permute.xlu0 %3323
      %3325 = vrot.lane.b32.xlu0 %v417, 32
      %v3326 = vpop.permute.xlu0 %3325
      %3327 = vrot.lane.b32.xlu0 %v422, 32
      %v3328 = vpop.permute.xlu0 %3327
      %3329 = vrot.lane.b32.xlu0 %v427, 32
      %v3330 = vpop.permute.xlu0 %3329
      %3331 = vrot.lane.b32.xlu0 %v432, 32
      %v3332 = vpop.permute.xlu0 %3331
      %3333 = vrot.lane.b32.xlu0 %v437, 32
      %v3334 = vpop.permute.xlu0 %3333
      %3335 = vrot.lane.b32.xlu0 %v442, 32
      %v3336 = vpop.permute.xlu0 %3335
      %3337 = vrot.lane.b32.xlu0 %v447, 32
      %v3338 = vpop.permute.xlu0 %3337
      %3339 = vrot.lane.b32.xlu0 %v452, 32
      %v3340 = vpop.permute.xlu0 %3339
      %3341 = vrot.lane.b32.xlu0 %v457, 32
      %v3342 = vpop.permute.xlu0 %3341
      %3343 = vrot.lane.b32.xlu0 %v462, 32
      %v3344 = vpop.permute.xlu0 %3343
      %3345 = vrot.lane.b32.xlu0 %v467, 32
      %v3346 = vpop.permute.xlu0 %3345
      %3347 = vrot.lane.b32.xlu0 %v472, 32
      %v3348 = vpop.permute.xlu0 %3347
      %3349 = vrot.lane.b32.xlu0 %v477, 32
      %v3350 = vpop.permute.xlu0 %3349
      %3351 = vrot.lane.b32.xlu0 %v482, 32
      %v3352 = vpop.permute.xlu0 %3351
      %3353 = vrot.lane.b32.xlu0 %v487, 32
      %v3354 = vpop.permute.xlu0 %3353
      %3355 = vrot.lane.b32.xlu0 %v492, 32
      %v3356 = vpop.permute.xlu0 %3355
      %3357 = vrot.lane.b32.xlu0 %v497, 32
      %v3358 = vpop.permute.xlu0 %3357
      %3359 = vrot.lane.b32.xlu0 %v502, 32
      %v3360 = vpop.permute.xlu0 %3359
      %3361 = vrot.lane.b32.xlu0 %v507, 32
      %v3362 = vpop.permute.xlu0 %3361
      %3363 = vrot.lane.b32.xlu0 %v512, 32
      %v3364 = vpop.permute.xlu0 %3363
      %3365 = vrot.lane.b32.xlu0 %v517, 32
      %v3366 = vpop.permute.xlu0 %3365
      %3367 = vrot.lane.b32.xlu0 %v522, 32
      %v3368 = vpop.permute.xlu0 %3367
      %3369 = vrot.lane.b32.xlu0 %v527, 32
      %v3370 = vpop.permute.xlu0 %3369
      %v3403 = vadd.f32 %v3275, %v3308
      %v3404 = vadd.f32 %v3276, %v3310
      %v3405 = vadd.f32 %v3277, %v3312
      %v3406 = vadd.f32 %v3278, %v3314
      %v3407 = vadd.f32 %v3279, %v3316
      %v3408 = vadd.f32 %v3280, %v3318
      %v3409 = vadd.f32 %v3281, %v3320
      %v3410 = vadd.f32 %v3282, %v3322
      %v3411 = vadd.f32 %v3283, %v3324
      %v3412 = vadd.f32 %v3284, %v3326
      %v3413 = vadd.f32 %v3285, %v3328
      %v3414 = vadd.f32 %v3286, %v3330
      %v3415 = vadd.f32 %v3287, %v3332
      %v3416 = vadd.f32 %v3288, %v3334
      %v3417 = vadd.f32 %v3289, %v3336
      %v3418 = vadd.f32 %v3290, %v3338
      %v3419 = vadd.f32 %v3291, %v3340
      %v3420 = vadd.f32 %v3292, %v3342
      %v3421 = vadd.f32 %v3293, %v3344
      %v3422 = vadd.f32 %v3294, %v3346
      %v3423 = vadd.f32 %v3295, %v3348
      %v3424 = vadd.f32 %v3296, %v3350
      %v3425 = vadd.f32 %v3297, %v3352
      %v3426 = vadd.f32 %v3298, %v3354
      %v3427 = vadd.f32 %v3299, %v3356
      %v3428 = vadd.f32 %v3300, %v3358
      %v3429 = vadd.f32 %v3301, %v3360
      %v3430 = vadd.f32 %v3302, %v3362
      %v3431 = vadd.f32 %v3303, %v3364
      %v3432 = vadd.f32 %v3304, %v3366
      %v3433 = vadd.f32 %v3305, %v3368
      %v3434 = vadd.f32 %v3306, %v3370
      %3435 = vst.msk [vmem:[%s2890 + $0x2] sm:$0xff] %vm204, %v3403
      %3436 = vst.msk [vmem:[%s2890 + $0xa] sm:$0xff] %vm204, %v3404
      %3437 = vst.msk [vmem:[%s2890 + $0x32] sm:$0xff] %vm204, %v3405
      %3438 = vst.msk [vmem:[%s2890 + $0x3a] sm:$0xff] %vm204, %v3406
      %3439 = vst.msk [vmem:[%s2890 + $0x62] sm:$0xff] %vm204, %v3407
      %3440 = vst.msk [vmem:[%s2890 + $0x6a] sm:$0xff] %vm204, %v3408
      %3441 = vst.msk [vmem:[%s2890 + $0x92] sm:$0xff] %vm204, %v3409
      %3442 = vst.msk [vmem:[%s2890 + $0x9a] sm:$0xff] %vm204, %v3410
      %3443 = vst.msk [vmem:[%s2890 + $0xc2] sm:$0xff] %vm204, %v3411
      %3444 = vst.msk [vmem:[%s2890 + $0xca] sm:$0xff] %vm204, %v3412
      %3445 = vst.msk [vmem:[%s2890 + $0xf2] sm:$0xff] %vm204, %v3413
      %3446 = vst.msk [vmem:[%s2890 + $0xfa] sm:$0xff] %vm204, %v3414
      %3447 = vst.msk [vmem:[%s2890 + $0x122] sm:$0xff] %vm204, %v3415
      %3448 = vst.msk [vmem:[%s2890 + $0x12a] sm:$0xff] %vm204, %v3416
      %3449 = vst.msk [vmem:[%s2890 + $0x152] sm:$0xff] %vm204, %v3417
      %3450 = vst.msk [vmem:[%s2890 + $0x15a] sm:$0xff] %vm204, %v3418
      %3451 = vst.msk [vmem:[%s2890 + $0x182] sm:$0xff] %vm204, %v3419
      %3452 = vst.msk [vmem:[%s2890 + $0x18a] sm:$0xff] %vm204, %v3420
      %3453 = vst.msk [vmem:[%s2890 + $0x1b2] sm:$0xff] %vm204, %v3421
      %3454 = vst.msk [vmem:[%s2890 + $0x1ba] sm:$0xff] %vm204, %v3422
      %3455 = vst.msk [vmem:[%s2890 + $0x1e2] sm:$0xff] %vm204, %v3423
      %3456 = vst.msk [vmem:[%s2890 + $0x1ea] sm:$0xff] %vm204, %v3424
      %3457 = vst.msk [vmem:[%s2890 + $0x212] sm:$0xff] %vm204, %v3425
      %3458 = vst.msk [vmem:[%s2890 + $0x21a] sm:$0xff] %vm204, %v3426
      %3459 = vst.msk [vmem:[%s2890 + $0x242] sm:$0xff] %vm204, %v3427
      %3460 = vst.msk [vmem:[%s2890 + $0x24a] sm:$0xff] %vm204, %v3428
      %3461 = vst.msk [vmem:[%s2890 + $0x272] sm:$0xff] %vm204, %v3429
      %3462 = vst.msk [vmem:[%s2890 + $0x27a] sm:$0xff] %vm204, %v3430
      %3463 = vst.msk [vmem:[%s2890 + $0x2a2] sm:$0xff] %vm204, %v3431
      %3464 = vst.msk [vmem:[%s2890 + $0x2aa] sm:$0xff] %vm204, %v3432
      %3465 = vst.msk [vmem:[%s2890 + $0x2d2] sm:$0xff] %vm204, %v3433
      %3466 = vst.msk [vmem:[%s2890 + $0x2da] sm:$0xff] %vm204, %v3434
      %p3467 = scmp.lt.s32.totalorder %s14, 1
      %s3468 = scalar_select %p3467, %s14, 1
      %s3469 = smul.addr %s3468, 108
      %s3470 = smul.addr %s3469, 8
      %s3471 = scalar_lea.vmem %s3, %s3470
      // Predicated region
      $region33: #{tpu_custom_call.1} parent=31 // pred_check
        %p3472 = pneg %p100
      $region34: #{tpu_custom_call.1} parent=31 // pred_check_branch
        %3474 = sbr.rel (%p3472) target = $region36
      $region35: #{tpu_custom_call.1} parent=31 // pred_region
        _
      $region36: #{tpu_custom_call.1} parent=31 // pred_fallthru
        _
    $region32: #{tpu_custom_call.1} parent=5 // pred_fallthru
      _
    %p3475 = scmp.le.s32.totalorder 2, %s9
    // Predicated region
    $region37: #{tpu_custom_call.1} parent=5 // pred_check
      %p3476 = pneg %p3475
    $region38: #{tpu_custom_call.1} parent=5 // pred_check_branch
      %3478 = sbr.rel (%p3476) target = $region40
    $region39: #{tpu_custom_call.1} parent=5 // pred_region
      %s3479 = ssub.s32 %s9, 2
      // Predicated region
      $region41: #{tpu_custom_call.1} parent=39 // pred_check
        %p3480 = pneg %p106
      $region42: #{tpu_custom_call.1} parent=39 // pred_check_branch
        %3482 = sbr.rel (%p3480) target = $region44
      $region43: #{tpu_custom_call.1} parent=39 // pred_region
        %p3483 = scmp.lt.s32.totalorder %s15, 1
        %s3484 = scalar_select %p3483, %s15, 1
        %s3485 = smul.addr %s3484, 108
        %s3486 = smul.addr %s3485, 8
        %s3487 = scalar_lea.vmem %s3, %s3486
      $region44: #{tpu_custom_call.1} parent=39 // pred_fallthru
        _
    $region40: #{tpu_custom_call.1} parent=5 // pred_fallthru
      _
  $region6: #{tpu_custom_call.1} parent=0 // loop_footer
    %s13 = sadd.s32 1, %s9
  $region7: #{tpu_custom_call.1} parent=0 // loop_footer_branch
    %8 = sbr.rel target = $region3
  $region8: #{tpu_custom_call.1} parent=0 // loop_exit
    _

</llo_original>
